<compile_context>
chip_gen: v7x
topology: tpu7x:2x2x1
jax: 0.10.0
libtpu: 0.0.40
codegen_flags: <defaults>
</compile_context>

<pallas_src>
import math
from functools import partial

import jax
import jax.numpy as jnp
from jax.experimental import pallas as pl
from jax.experimental.pallas import tpu as pltpu


# ---------------------------------------------------------------------------
# Per-generation VMEM budgeting.
# ---------------------------------------------------------------------------
def _tpu_vmem_capacity_bytes():
    try:
        info = pltpu.get_tpu_info()
        for name in ("vmem_capacity_bytes", "vmem_size_bytes", "vmem_bytes"):
            v = getattr(info, name, None)
            if v:
                return int(v)
    except Exception:
        pass
    return 64 * 1024 * 1024  # v7x-safe lower bound if the query is unavailable


_VMEM_CAPACITY = _tpu_vmem_capacity_bytes()
# Tile sizing targets ~55% of physical VMEM (headroom for Mosaic internals / estimate
# slop); the scoped limit handed to the compiler gets extra slack above our estimate.
_VMEM_BUDGET = int(_VMEM_CAPACITY * 0.55)
_VMEM_LIMIT = int(_VMEM_CAPACITY * 0.85)


def _round_up(x, m):
    return ((x + m - 1) // m) * m


def _pick_tile(n, cap, align):
    """Largest divisor of n that is <= cap and a multiple of `align`.

    Falls back to the full extent (always layout-legal) if no aligned divisor fits.
    """
    cap = min(n, max(cap, 1))
    t = (cap // align) * align
    while t >= align:
        if n % t == 0:
            return t
        t -= align
    # TODO(synk): masked/ragged tiling for shapes with no aligned divisor (e.g. N=197);
    # the full-extent fallback is correct but may exceed the VMEM budget for huge dims.
    return n


def _flash_tiles(B, N, H, hd, itemsize, budget):
    """VMEM-aware (tq, tk) for the flash kernel."""
    def fits(tq, tk):
        qo = 2 * H * tq * hd * (itemsize + itemsize)       # q + out blocks, double-buffered
        kv = 2 * 2 * H * tk * hd * itemsize                 # k + v blocks, double-buffered
        acc = H * tq * hd * 4                               # f32 accumulator scratch
        stats = 2 * H * _round_up(tq, 8) * 128 * 4          # m/l scratch pads to 128 lanes
        return qo + kv + acc + stats <= budget

    caps = (1024, 512, 256, 128, 64, 32, 16, 8)
    # Megacore (v7x): keep B * (N // tq) >= 2 when B == 1 so both TensorCores get work.
    mega_cap = N if B >= 2 else max(8, (N // 2) // 8 * 8)

    fallback = None
    for cq in caps:                       # prefer the largest q tile (K/V traffic ~ N/tq)
        tq = _pick_tile(N, min(cq, mega_cap), 8)
        for ck in caps:
            tk = _pick_tile(N, ck, 8)
            if not fits(tq, tk):
                continue
            if tk >= min(N, 128):         # don't shrink kv tiles below a sane minimum
                return tq, tk
            if fallback is None:
                fallback = (tq, tk)
    if fallback is not None:
        return fallback
    return (_pick_tile(N, min(8, mega_cap), 8), _pick_tile(N, 8, 8))


def _linear_tiles(M, K, Nout, itemsize, budget):
    """VMEM-aware (tm, tk, tn). tm is maximized first to cut weight re-streaming."""
    def fits(tm, tk, tn):
        blocks = 2 * (tm * tk + tk * tn + tm * tn) * itemsize   # double-buffered x/w/out
        acc = tm * tn * 4                                       # f32 accumulator scratch
        bias = 2 * 8 * _round_up(tn, 128) * 4                   # (1, tn) bias block, padded
        return blocks + acc + bias <= budget

    for cm in (2048, 1024, 512, 256, 128, 64, 32, 16, 8):
        tm = _pick_tile(M, cm, 8)
        for cn in (1024, 512, 256, 128):
            tn = _pick_tile(Nout, cn, 128)
            for ck in (1024, 512, 256, 128):
                tk = _pick_tile(K, ck, 128)
                if fits(tm, tk, tn):
                    return tm, tk, tn
    return (_pick_tile(M, 8, 8), _pick_tile(K, 128, 128), _pick_tile(Nout, 128, 128))


# ---------------------------------------------------------------------------
# Tiled linear: grid (row tiles, out-column tiles, K tiles) with f32 accumulator.
# ---------------------------------------------------------------------------
def _linear_kernel(x_ref, w_ref, o_ref, acc_ref):
    @pl.when(pl.program_id(2) == 0)
    def _():
        acc_ref[...] = jnp.zeros_like(acc_ref)

    acc_ref[...] += jnp.dot(x_ref[...], w_ref[...], preferred_element_type=jnp.float32)

    @pl.when(pl.program_id(2) == pl.num_programs(2) - 1)
    def _():
        o_ref[...] = acc_ref[...].astype(o_ref.dtype)


def _linear_bias_kernel(x_ref, w_ref, b_ref, o_ref, acc_ref):
    @pl.when(pl.program_id(2) == 0)
    def _():
        acc_ref[...] = jnp.zeros_like(acc_ref)

    acc_ref[...] += jnp.dot(x_ref[...], w_ref[...], preferred_element_type=jnp.float32)

    @pl.when(pl.program_id(2) == pl.num_programs(2) - 1)
    def _():
        o_ref[...] = (acc_ref[...] + b_ref[...].astype(jnp.float32)).astype(o_ref.dtype)


def _linear(x2, w, b=None):
    """x2: (M, K); w: (K, Nout) in (in, out) layout; b: (1, Nout) or None."""
    M, K = x2.shape
    _, Nout = w.shape
    itemsize = x2.dtype.itemsize
    tm, tk, tn = _linear_tiles(M, K, Nout, itemsize, _VMEM_BUDGET)
    grid = (M // tm, Nout // tn, K // tk)

    # Honest traffic: x is re-read once per column tile, W once per row tile.
    cost = pl.CostEstimate(
        flops=2 * M * K * Nout,
        transcendentals=0,
        bytes_accessed=(M * K * (Nout // tn) + K * Nout * (M // tm) + M * Nout) * itemsize)
    params = pltpu.CompilerParams(
        dimension_semantics=("parallel", "parallel", "arbitrary"),
        vmem_limit_bytes=_VMEM_LIMIT)

    x_spec = pl.BlockSpec((tm, tk), lambda i, j, k: (i, k))
    w_spec = pl.BlockSpec((tk, tn), lambda i, j, k: (k, j))
    o_spec = pl.BlockSpec((tm, tn), lambda i, j, k: (i, j))
    out_shape = jax.ShapeDtypeStruct((M, Nout), x2.dtype)
    scratch = [pltpu.VMEM((tm, tn), jnp.float32)]

    if b is None:
        return pl.pallas_call(
            _linear_kernel,
            out_shape=out_shape,
            grid_spec=pltpu.PrefetchScalarGridSpec(
                num_scalar_prefetch=0, grid=grid,
                in_specs=[x_spec, w_spec], out_specs=o_spec,
                scratch_shapes=scratch),
            compiler_params=params,
            cost_estimate=cost,
        )(x2, w)

    b_spec = pl.BlockSpec((1, tn), lambda i, j, k: (0, j))
    return pl.pallas_call(
        _linear_bias_kernel,
        out_shape=out_shape,
        grid_spec=pltpu.PrefetchScalarGridSpec(
            num_scalar_prefetch=0, grid=grid,
            in_specs=[x_spec, w_spec, b_spec], out_specs=o_spec,
            scratch_shapes=scratch),
        compiler_params=params,
        cost_estimate=cost,
    )(x2, w, b)


# ---------------------------------------------------------------------------
# Flash-style attention: grid (B, q_tiles, kv_tiles); heads batched per block.
# ---------------------------------------------------------------------------
def _flash_attn_kernel(q_ref, k_ref, v_ref, o_ref, m_sc, l_sc, acc_sc, *,
                       scale, merge_heads):
    # q_ref/k_ref/v_ref: (1, H, t, hd)
    # o_ref: (1, tq, H*hd) if merge_heads else (1, H, tq, hd)
    kv = pl.program_id(2)

    @pl.when(kv == 0)
    def _():
        m_sc[...] = jnp.full_like(m_sc, -jnp.inf)
        l_sc[...] = jnp.zeros_like(l_sc)
        acc_sc[...] = jnp.zeros_like(acc_sc)

    # Softmax scale applied to the (smaller) q tile: one VPU mul, hidden under the MXU.
    q = q_ref[0] * scale                                            # (H, tq, hd)
    # Batched-over-heads scores on the MXU with f32 accumulation.
    s = jnp.einsum('hqd,hkd->hqk', q, k_ref[0],
                   preferred_element_type=jnp.float32)              # (H, tq, tk)

    m_prev = m_sc[...]                                              # (H, tq, 1)
    m_new = jnp.maximum(m_prev, s.max(axis=-1, keepdims=True))
    alpha = jnp.exp(m_prev - m_new)
    # TODO(synk): on v6e/v7x (bf16 EUP) computing p in bf16 roughly doubles exp
    # throughput for hd<=128; kept in f32 here for reference-grade accuracy.
    p = jnp.exp(s - m_new)                                          # unnormalized probs
    l_sc[...] = alpha * l_sc[...] + p.sum(axis=-1, keepdims=True)
    acc_sc[...] = alpha * acc_sc[...] + jnp.einsum(
        'hqk,hkd->hqd', p.astype(v_ref.dtype), v_ref[0],
        preferred_element_type=jnp.float32)
    m_sc[...] = m_new

    @pl.when(kv == pl.num_programs(2) - 1)
    def _():
        # Deferred normalization; reciprocal goes to the EUP slot.
        inv_l = pl.reciprocal(l_sc[...], approx=True)
        out = acc_sc[...] * inv_l                                   # (H, tq, hd) f32
        if merge_heads:
            # Lane-dense store: every head chunk is 128-lane aligned (hd % 128 == 0),
            # so the merged (tq, H*hd) block is written with unmasked full-lane stores.
            num_heads = acc_sc.shape[0]
            merged = jnp.concatenate([out[h] for h in range(num_heads)], axis=-1)
            o_ref[0] = merged.astype(o_ref.dtype)
        else:
            o_ref[0] = out.astype(o_ref.dtype)


def _flash_attention(q, k, v, *, scale, merge_heads):
    """q, k, v: (B, H, N, hd).  Returns (B, N, H*hd) if merge_heads else (B, H, N, hd)."""
    B, H, N, hd = q.shape
    C = H * hd
    itemsize = q.dtype.itemsize
    tq, tk = _flash_tiles(B, N, H, hd, itemsize, _VMEM_BUDGET)
    grid = (B, N // tq, N // tk)

    in_specs = [
        pl.BlockSpec((1, H, tq, hd), lambda b, qi, ki: (b, 0, qi, 0)),
        pl.BlockSpec((1, H, tk, hd), lambda b, qi, ki: (b, 0, ki, 0)),
        pl.BlockSpec((1, H, tk, hd), lambda b, qi, ki: (b, 0, ki, 0)),
    ]
    if merge_heads:
        out_shape = jax.ShapeDtypeStruct((B, N, C), q.dtype)
        out_specs = pl.BlockSpec((1, tq, C), lambda b, qi, ki: (b, qi, 0))
    else:
        out_shape = jax.ShapeDtypeStruct((B, H, N, hd), q.dtype)
        out_specs = pl.BlockSpec((1, H, tq, hd), lambda b, qi, ki: (b, 0, qi, 0))

    kv_restream = N // tq  # K/V are streamed once per q tile
    cost = pl.CostEstimate(
        flops=4 * B * H * N * N * hd,
        transcendentals=B * H * N * N,
        bytes_accessed=(2 * B * H * N * hd * kv_restream           # k + v (re-streamed)
                        + 2 * B * H * N * hd) * itemsize)           # q + out

    kernel = partial(_flash_attn_kernel, scale=scale, merge_heads=merge_heads)
    return pl.pallas_call(
        kernel,
        out_shape=out_shape,
        grid_spec=pltpu.PrefetchScalarGridSpec(
            num_scalar_prefetch=0,
            grid=grid,
            in_specs=in_specs,
            out_specs=out_specs,
            scratch_shapes=[
                pltpu.VMEM((H, tq, 1), jnp.float32),    # running row max
                pltpu.VMEM((H, tq, 1), jnp.float32),    # running denominator
                pltpu.VMEM((H, tq, hd), jnp.float32),   # unnormalized output accumulator
            ]),
        compiler_params=pltpu.CompilerParams(
            dimension_semantics=("parallel", "parallel", "arbitrary"),
            vmem_limit_bytes=_VMEM_LIMIT),
        cost_estimate=cost,
    )(q, k, v)


# ---------------------------------------------------------------------------
# Full forward pass.
# ---------------------------------------------------------------------------
def attention_forward(x, w_qkv=None, w_proj=None, b_proj=None, *, num_heads, with_qkv=True):
    """x: (B, N, C); w_qkv: (C, 3C) and w_proj: (C, C) in (in, out) layout; b_proj: (1, C)."""
    B, N, C = x.shape
    head_dim = C // num_heads
    scale = head_dim ** (-0.5)
    # Lane-dense in-kernel head merge only when every head chunk is 128-lane aligned.
    merge_heads = (head_dim % 128 == 0)

    if with_qkv:
        # 1) QKV projection (qkv_bias=False -> no bias).
        qkv = _linear(x.reshape(B * N, C), w_qkv)                         # (B*N, 3C)
        # TODO(synk): the head-split transpose below costs one HBM round trip of the
        # (B, N, 3C) activations; folding it into the projection's out_specs would cost
        # MXU width when head_dim < 128, so it stays wrapper-side layout plumbing.
        qkv = qkv.reshape(B, N, 3, num_heads, head_dim).transpose(2, 0, 3, 1, 4)
        q, k, v = qkv[0], qkv[1], qkv[2]                                  # (B, H, N, hd)
    else:
        q = x.reshape(B, N, num_heads, head_dim).transpose(0, 2, 1, 3)    # (B, H, N, hd)
        k = v = q

    # 2) Flash-style attention (online softmax over kv tiles; scale applied in-kernel).
    o = _flash_attention(q, k, v, scale=scale, merge_heads=merge_heads)

    if merge_heads:
        o2 = o.reshape(B * N, C)                          # heads already merged in-kernel
    else:
        o2 = o.transpose(0, 2, 1, 3).reshape(B * N, C)    # merge heads in the wrapper

    if not with_qkv:
        return o2.reshape(B, N, C)

    # 3) Output projection (+ bias).  attn_drop / proj_drop have p = 0.0 -> identity.
    y = _linear(o2, w_proj, b_proj)
    return y.reshape(B, N, C)


def attention_reference(x, w_qkv=None, w_proj=None, b_proj=None, *, num_heads, with_qkv=True):
    """Pure-JAX reference matching the PyTorch forward."""
    B, N, C = x.shape
    head_dim = C // num_heads
    scale = head_dim ** (-0.5)
    if with_qkv:
        qkv = jnp.einsum('bnc,cd->bnd', x, w_qkv)
        qkv = qkv.reshape(B, N, 3, num_heads, head_dim).transpose(2, 0, 3, 1, 4)
        q, k, v = qkv[0], qkv[1], qkv[2]
    else:
        q = x.reshape(B, N, num_heads, head_dim).transpose(0, 2, 1, 3)
        k = v = q
    attn = jnp.einsum('bhqd,bhkd->bhqk', q, k) * scale
    attn = jax.nn.softmax(attn, axis=-1)
    out = jnp.einsum('bhqk,bhkd->bhqd', attn, v)
    out = out.transpose(0, 2, 1, 3).reshape(B, N, C)
    if not with_qkv:
        return out
    return jnp.einsum('bnc,cd->bnd', out, w_proj) + b_proj[0]


def _run_case(key, *, B, N, C, num_heads, with_qkv):
    kx, kqkv, kproj, kb = jax.random.split(key, 4)
    x = jax.random.normal(kx, (B, N, C), dtype=jnp.float32)
    bound = 1.0 / math.sqrt(C)
    w_qkv = jax.random.uniform(kqkv, (C, 3 * C), minval=-bound, maxval=bound, dtype=jnp.float32)
    w_proj = jax.random.uniform(kproj, (C, C), minval=-bound, maxval=bound, dtype=jnp.float32)
    b_proj = jax.random.uniform(kb, (1, C), minval=-bound, maxval=bound, dtype=jnp.float32)

    if with_qkv:
        fwd = jax.jit(partial(attention_forward, num_heads=num_heads, with_qkv=True))
        out = jax.block_until_ready(fwd(x, w_qkv, w_proj, b_proj))
        ref = attention_reference(x, w_qkv, w_proj, b_proj, num_heads=num_heads, with_qkv=True)
    else:
        fwd = jax.jit(partial(attention_forward, num_heads=num_heads, with_qkv=False))
        out = jax.block_until_ready(fwd(x))
        ref = attention_reference(x, num_heads=num_heads, with_qkv=False)

    assert out.shape == (B, N, C)
    # Tolerance covers pl.reciprocal(approx=True), online-softmax reordering, and the
    # default (non-HIGHEST) matmul precision of the pure-JAX reference on TPU.
    err = float(jnp.max(jnp.abs(out - ref)))
    assert jnp.allclose(out, ref, atol=2e-2, rtol=2e-2), f"mismatch vs reference: {err}"


if __name__ == "__main__":
    key = jax.random.PRNGKey(0)
    k1, k2, k3 = jax.random.split(key, 3)
    # head_dim < 128 -> per-head-layout output path (wrapper-side head merge).
    _run_case(k1, B=2, N=16, C=64, num_heads=8, with_qkv=True)
    # head_dim == 128 -> lane-dense in-kernel head-merge output path.
    _run_case(k2, B=2, N=128, C=256, num_heads=2, with_qkv=True)
    # with_qkv=False branch (q = k = v = head_split(x), no projections).
    _run_case(k3, B=2, N=16, C=64, num_heads=8, with_qkv=False)
    print("KERNEL_OK")
</pallas_src>

<mosaic_0001>
module attributes {stable_mosaic.version = 11 : i64} {
  func.func @_linear_kernel(%arg0: i32, %arg1: i32, %arg2: i32, %arg3: memref<32x64xf32, #tpu.memory_space<vmem>>, %arg4: memref<64x192xf32, #tpu.memory_space<vmem>>, %arg5: memref<32x192xf32, #tpu.memory_space<vmem>>, %arg6: memref<32x192xf32, #tpu.memory_space<vmem>>) attributes {dimension_semantics = [#tpu.dimension_semantics<parallel>, #tpu.dimension_semantics<parallel>, #tpu.dimension_semantics<arbitrary>], iteration_bounds = array<i64: 1, 1, 1>, scalar_prefetch = 0 : i64, scratch_operands = 1 : i64, tpu.core_type = #tpu.core_type<tc>, window_params = [{transform_indices = @transform_0, window_bounds = array<i64: 32, 64>}, {transform_indices = @transform_1, window_bounds = array<i64: 64, 192>}, {transform_indices = @transform_2, window_bounds = array<i64: 32, 192>}]} {
    %c0_i32 = arith.constant 0 : i32
    %0 = arith.cmpi eq, %arg2, %c0_i32 : i32
    %1 = arith.extui %0 : i1 to i32
    %c0_i32_0 = arith.constant 0 : i32
    %2 = arith.cmpi ne, %1, %c0_i32_0 : i32
    scf.if %2 {
      %cst_10 = arith.constant 0.000000e+00 : f32
      %12 = vector.broadcast %cst_10 : f32 to vector<32x192xf32>
      %c0_11 = arith.constant 0 : index
      %c0_12 = arith.constant 0 : index
      %13 = vector.load %arg6[%c0_11, %c0_12] : memref<32x192xf32, #tpu.memory_space<vmem>>, vector<32x192xf32>
      tpu.vector_store %arg6[%c0_11, %c0_12], %12 {strides = array<i32>} : memref<32x192xf32, #tpu.memory_space<vmem>>, vector<32x192xf32>,
    } else {
    }
    %c0 = arith.constant 0 : index
    %c0_1 = arith.constant 0 : index
    %3 = vector.load %arg6[%c0, %c0_1] : memref<32x192xf32, #tpu.memory_space<vmem>>, vector<32x192xf32>
    %c0_2 = arith.constant 0 : index
    %c0_3 = arith.constant 0 : index
    %4 = vector.load %arg3[%c0_2, %c0_3] : memref<32x64xf32, #tpu.memory_space<vmem>>, vector<32x64xf32>
    %c0_4 = arith.constant 0 : index
    %c0_5 = arith.constant 0 : index
    %5 = vector.load %arg4[%c0_4, %c0_5] : memref<64x192xf32, #tpu.memory_space<vmem>>, vector<64x192xf32>
    %cst = arith.constant dense<0.000000e+00> : vector<32x192xf32>
    %6 = tpu.matmul %4, %5, %cst {dimension_numbers = #tpu.dot_dimension_numbers<[1], [0], [0], [1], [0, 0, 1, 1], [], []>} : vector<32x64xf32>, vector<64x192xf32>, vector<32x192xf32> -> vector<32x192xf32>
    %7 = arith.addf %3, %6 : vector<32x192xf32>
    %c0_6 = arith.constant 0 : index
    %c0_7 = arith.constant 0 : index
    %8 = vector.load %arg6[%c0_6, %c0_7] : memref<32x192xf32, #tpu.memory_space<vmem>>, vector<32x192xf32>
    tpu.vector_store %arg6[%c0_6, %c0_7], %7 {strides = array<i32>} : memref<32x192xf32, #tpu.memory_space<vmem>>, vector<32x192xf32>,
    %c0_i32_8 = arith.constant 0 : i32
    %9 = arith.cmpi eq, %arg2, %c0_i32_8 : i32
    %10 = arith.extui %9 : i1 to i32
    %c0_i32_9 = arith.constant 0 : i32
    %11 = arith.cmpi ne, %10, %c0_i32_9 : i32
    scf.if %11 {
      %c0_10 = arith.constant 0 : index
      %c0_11 = arith.constant 0 : index
      %12 = vector.load %arg6[%c0_10, %c0_11] : memref<32x192xf32, #tpu.memory_space<vmem>>, vector<32x192xf32>
      %c0_12 = arith.constant 0 : index
      %c0_13 = arith.constant 0 : index
      %13 = vector.load %arg5[%c0_12, %c0_13] : memref<32x192xf32, #tpu.memory_space<vmem>>, vector<32x192xf32>
      tpu.vector_store %arg5[%c0_12, %c0_13], %12 {strides = array<i32>} : memref<32x192xf32, #tpu.memory_space<vmem>>, vector<32x192xf32>,
    } else {
    }
    return
  }
  func.func @transform_0(%arg0: i32, %arg1: i32, %arg2: i32) -> (i32, i32) {
    %c0_i32 = arith.constant 0 : i32
    return %arg0, %arg2 : i32, i32
  }
  func.func @transform_1(%arg0: i32, %arg1: i32, %arg2: i32) -> (i32, i32) {
    %c0_i32 = arith.constant 0 : i32
    return %arg2, %arg1 : i32, i32
  }
  func.func @transform_2(%arg0: i32, %arg1: i32, %arg2: i32) -> (i32, i32) {
    %c0_i32 = arith.constant 0 : i32
    return %arg0, %arg1 : i32, i32
  }
}

module attributes {stable_mosaic.version = 11 : i64} {
  func.func @_flash_attn_kernel(%arg0: i32, %arg1: i32, %arg2: i32, %arg3: memref<1x8x16x8xf32, #tpu.memory_space<vmem>>, %arg4: memref<1x8x16x8xf32, #tpu.memory_space<vmem>>, %arg5: memref<1x8x16x8xf32, #tpu.memory_space<vmem>>, %arg6: memref<1x8x16x8xf32, #tpu.memory_space<vmem>>, %arg7: memref<8x16x1xf32, #tpu.memory_space<vmem>>, %arg8: memref<8x16x1xf32, #tpu.memory_space<vmem>>, %arg9: memref<8x16x8xf32, #tpu.memory_space<vmem>>) attributes {dimension_semantics = [#tpu.dimension_semantics<parallel>, #tpu.dimension_semantics<parallel>, #tpu.dimension_semantics<arbitrary>], iteration_bounds = array<i64: 2, 1, 1>, scalar_prefetch = 0 : i64, scratch_operands = 3 : i64, tpu.core_type = #tpu.core_type<tc>, window_params = [{transform_indices = @transform_0, window_bounds = array<i64: 1, 8, 16, 8>}, {transform_indices = @transform_1, window_bounds = array<i64: 1, 8, 16, 8>}, {transform_indices = @transform_2, window_bounds = array<i64: 1, 8, 16, 8>}, {transform_indices = @transform_3, window_bounds = array<i64: 1, 8, 16, 8>}]} {
    %c0_i32 = arith.constant 0 : i32
    %0 = arith.cmpi eq, %arg2, %c0_i32 : i32
    %1 = arith.extui %0 : i1 to i32
    %c0_i32_0 = arith.constant 0 : i32
    %2 = arith.cmpi ne, %1, %c0_i32_0 : i32
    scf.if %2 {
      %cst_36 = arith.constant 0xFF800000 : f32
      %37 = vector.broadcast %cst_36 : f32 to vector<8x16x1xf32>
      %c0_37 = arith.constant 0 : index
      %c0_38 = arith.constant 0 : index
      %c0_39 = arith.constant 0 : index
      %38 = vector.load %arg7[%c0_37, %c0_38, %c0_39] : memref<8x16x1xf32, #tpu.memory_space<vmem>>, vector<8x16x1xf32>
      tpu.vector_store %arg7[%c0_37, %c0_38, %c0_39], %37 {strides = array<i32>} : memref<8x16x1xf32, #tpu.memory_space<vmem>>, vector<8x16x1xf32>,
      %cst_40 = arith.constant 0.000000e+00 : f32
      %39 = vector.broadcast %cst_40 : f32 to vector<8x16x1xf32>
      %c0_41 = arith.constant 0 : index
      %c0_42 = arith.constant 0 : index
      %c0_43 = arith.constant 0 : index
      %40 = vector.load %arg8[%c0_41, %c0_42, %c0_43] : memref<8x16x1xf32, #tpu.memory_space<vmem>>, vector<8x16x1xf32>
      tpu.vector_store %arg8[%c0_41, %c0_42, %c0_43], %39 {strides = array<i32>} : memref<8x16x1xf32, #tpu.memory_space<vmem>>, vector<8x16x1xf32>,
      %cst_44 = arith.constant 0.000000e+00 : f32
      %41 = vector.broadcast %cst_44 : f32 to vector<8x16x8xf32>
      %c0_45 = arith.constant 0 : index
      %c0_46 = arith.constant 0 : index
      %c0_47 = arith.constant 0 : index
      %42 = vector.load %arg9[%c0_45, %c0_46, %c0_47] : memref<8x16x8xf32, #tpu.memory_space<vmem>>, vector<8x16x8xf32>
      tpu.vector_store %arg9[%c0_45, %c0_46, %c0_47], %41 {strides = array<i32>} : memref<8x16x8xf32, #tpu.memory_space<vmem>>, vector<8x16x8xf32>,
    } else {
    }
    %c0 = arith.constant 0 : index
    %c0_1 = arith.constant 0 : index
    %c0_2 = arith.constant 0 : index
    %c0_3 = arith.constant 0 : index
    %3 = vector.load %arg3[%c0, %c0_1, %c0_2, %c0_3] : memref<1x8x16x8xf32, #tpu.memory_space<vmem>>, vector<1x8x16x8xf32>
    %4 = vector.shape_cast %3 : vector<1x8x16x8xf32> to vector<8x16x8xf32>
    %cst = arith.constant 0.353553385 : f32
    %5 = vector.broadcast %cst : f32 to vector<8x16x8xf32>
    %6 = arith.mulf %4, %5 : vector<8x16x8xf32>
    %c0_4 = arith.constant 0 : index
    %c0_5 = arith.constant 0 : index
    %c0_6 = arith.constant 0 : index
    %c0_7 = arith.constant 0 : index
    %7 = vector.load %arg4[%c0_4, %c0_5, %c0_6, %c0_7] : memref<1x8x16x8xf32, #tpu.memory_space<vmem>>, vector<1x8x16x8xf32>
    %8 = vector.shape_cast %7 : vector<1x8x16x8xf32> to vector<8x16x8xf32>
    "tpu.trace_start"() <{level = 10 : i32, message = "hqd,hkd->hqk"}> : () -> ()
    %cst_8 = arith.constant dense<0.000000e+00> : vector<8x16x16xf32>
    %9 = tpu.matmul %6, %8, %cst_8 {dimension_numbers = #tpu.dot_dimension_numbers<[2], [2], [1], [1], [0, 0, 0, 1, 1, 1], [0], [0]>} : vector<8x16x8xf32>, vector<8x16x8xf32>, vector<8x16x16xf32> -> vector<8x16x16xf32>
    "tpu.trace_stop"() : () -> ()
    %c0_9 = arith.constant 0 : index
    %c0_10 = arith.constant 0 : index
    %c0_11 = arith.constant 0 : index
    %10 = vector.load %arg7[%c0_9, %c0_10, %c0_11] : memref<8x16x1xf32, #tpu.memory_space<vmem>>, vector<8x16x1xf32>
    %cst_12 = arith.constant dense<0xFF800000> : vector<8x16xf32>
    %11 = vector.multi_reduction <maximumf>, %9, %cst_12 [2] : vector<8x16x16xf32> to vector<8x16xf32>
    %12 = vector.shape_cast %11 : vector<8x16xf32> to vector<8x16x1xf32>
    %13 = arith.maximumf %10, %12 : vector<8x16x1xf32>
    %14 = arith.subf %10, %13 : vector<8x16x1xf32>
    %15 = math.exp %14 : vector<8x16x1xf32>
    %16 = vector.broadcast %13 : vector<8x16x1xf32> to vector<8x16x16xf32>
    %17 = arith.subf %9, %16 : vector<8x16x16xf32>
    %18 = math.exp %17 : vector<8x16x16xf32>
    %c0_13 = arith.constant 0 : index
    %c0_14 = arith.constant 0 : index
    %c0_15 = arith.constant 0 : index
    %19 = vector.load %arg8[%c0_13, %c0_14, %c0_15] : memref<8x16x1xf32, #tpu.memory_space<vmem>>, vector<8x16x1xf32>
    %20 = arith.mulf %15, %19 : vector<8x16x1xf32>
    %cst_16 = arith.constant dense<0.000000e+00> : vector<8x16xf32>
    %21 = vector.multi_reduction <add>, %18, %cst_16 [2] : vector<8x16x16xf32> to vector<8x16xf32>
    %22 = vector.shape_cast %21 : vector<8x16xf32> to vector<8x16x1xf32>
    %23 = arith.addf %20, %22 : vector<8x16x1xf32>
    %c0_17 = arith.constant 0 : index
    %c0_18 = arith.constant 0 : index
    %c0_19 = arith.constant 0 : index
    %24 = vector.load %arg8[%c0_17, %c0_18, %c0_19] : memref<8x16x1xf32, #tpu.memory_space<vmem>>, vector<8x16x1xf32>
    tpu.vector_store %arg8[%c0_17, %c0_18, %c0_19], %23 {strides = array<i32>} : memref<8x16x1xf32, #tpu.memory_space<vmem>>, vector<8x16x1xf32>,
    %c0_20 = arith.constant 0 : index
    %c0_21 = arith.constant 0 : index
    %c0_22 = arith.constant 0 : index
    %25 = vector.load %arg9[%c0_20, %c0_21, %c0_22] : memref<8x16x8xf32, #tpu.memory_space<vmem>>, vector<8x16x8xf32>
    %26 = vector.broadcast %15 : vector<8x16x1xf32> to vector<8x16x8xf32>
    %27 = arith.mulf %26, %25 : vector<8x16x8xf32>
    %c0_23 = arith.constant 0 : index
    %c0_24 = arith.constant 0 : index
    %c0_25 = arith.constant 0 : index
    %c0_26 = arith.constant 0 : index
    %28 = vector.load %arg5[%c0_23, %c0_24, %c0_25, %c0_26] : memref<1x8x16x8xf32, #tpu.memory_space<vmem>>, vector<1x8x16x8xf32>
    %29 = vector.shape_cast %28 : vector<1x8x16x8xf32> to vector<8x16x8xf32>
    "tpu.trace_start"() <{level = 10 : i32, message = "hqk,hkd->hqd"}> : () -> ()
    %cst_27 = arith.constant dense<0.000000e+00> : vector<8x16x8xf32>
    %30 = tpu.matmul %18, %29, %cst_27 {dimension_numbers = #tpu.dot_dimension_numbers<[2], [1], [1], [2], [0, 0, 0, 1, 1, 2], [0], [0]>} : vector<8x16x16xf32>, vector<8x16x8xf32>, vector<8x16x8xf32> -> vector<8x16x8xf32>
    "tpu.trace_stop"() : () -> ()
    %31 = arith.addf %27, %30 : vector<8x16x8xf32>
    %c0_28 = arith.constant 0 : index
    %c0_29 = arith.constant 0 : index
    %c0_30 = arith.constant 0 : index
    %32 = vector.load %arg9[%c0_28, %c0_29, %c0_30] : memref<8x16x8xf32, #tpu.memory_space<vmem>>, vector<8x16x8xf32>
    tpu.vector_store %arg9[%c0_28, %c0_29, %c0_30], %31 {strides = array<i32>} : memref<8x16x8xf32, #tpu.memory_space<vmem>>, vector<8x16x8xf32>,
    %c0_31 = arith.constant 0 : index
    %c0_32 = arith.constant 0 : index
    %c0_33 = arith.constant 0 : index
    %33 = vector.load %arg7[%c0_31, %c0_32, %c0_33] : memref<8x16x1xf32, #tpu.memory_space<vmem>>, vector<8x16x1xf32>
    tpu.vector_store %arg7[%c0_31, %c0_32, %c0_33], %13 {strides = array<i32>} : memref<8x16x1xf32, #tpu.memory_space<vmem>>, vector<8x16x1xf32>,
    %c0_i32_34 = arith.constant 0 : i32
    %34 = arith.cmpi eq, %arg2, %c0_i32_34 : i32
    %35 = arith.extui %34 : i1 to i32
    %c0_i32_35 = arith.constant 0 : i32
    %36 = arith.cmpi ne, %35, %c0_i32_35 : i32
    scf.if %36 {
      %c0_36 = arith.constant 0 : index
      %c0_37 = arith.constant 0 : index
      %c0_38 = arith.constant 0 : index
      %37 = vector.load %arg8[%c0_36, %c0_37, %c0_38] : memref<8x16x1xf32, #tpu.memory_space<vmem>>, vector<8x16x1xf32>
      %38 = tpu.reciprocal %37 {approx = true} : vector<8x16x1xf32> -> vector<8x16x1xf32>
      %c0_39 = arith.constant 0 : index
      %c0_40 = arith.constant 0 : index
      %c0_41 = arith.constant 0 : index
      %39 = vector.load %arg9[%c0_39, %c0_40, %c0_41] : memref<8x16x8xf32, #tpu.memory_space<vmem>>, vector<8x16x8xf32>
      %40 = vector.broadcast %38 : vector<8x16x1xf32> to vector<8x16x8xf32>
      %41 = arith.mulf %39, %40 : vector<8x16x8xf32>
      %c0_42 = arith.constant 0 : index
      %c0_43 = arith.constant 0 : index
      %c0_44 = arith.constant 0 : index
      %c0_45 = arith.constant 0 : index
      %42 = vector.load %arg6[%c0_42, %c0_43, %c0_44, %c0_45] : memref<1x8x16x8xf32, #tpu.memory_space<vmem>>, vector<1x8x16x8xf32>
      %43 = vector.shape_cast %42 : vector<1x8x16x8xf32> to vector<8x16x8xf32>
      %44 = vector.shape_cast %41 : vector<8x16x8xf32> to vector<1x8x16x8xf32>
      tpu.vector_store %arg6[%c0_42, %c0_43, %c0_44, %c0_45], %44 {strides = array<i32>} : memref<1x8x16x8xf32, #tpu.memory_space<vmem>>, vector<1x8x16x8xf32>,
    } else {
    }
    return
  }
  func.func @transform_0(%arg0: i32, %arg1: i32, %arg2: i32) -> (i32, i32, i32, i32) {
    %c0_i32 = arith.constant 0 : i32
    %c0_i32_0 = arith.constant 0 : i32
    %c0_i32_1 = arith.constant 0 : i32
    return %arg0, %c0_i32, %arg1, %c0_i32_0 : i32, i32, i32, i32
  }
  func.func @transform_1(%arg0: i32, %arg1: i32, %arg2: i32) -> (i32, i32, i32, i32) {
    %c0_i32 = arith.constant 0 : i32
    %c0_i32_0 = arith.constant 0 : i32
    %c0_i32_1 = arith.constant 0 : i32
    return %arg0, %c0_i32, %arg2, %c0_i32_0 : i32, i32, i32, i32
  }
  func.func @transform_2(%arg0: i32, %arg1: i32, %arg2: i32) -> (i32, i32, i32, i32) {
    %c0_i32 = arith.constant 0 : i32
    %c0_i32_0 = arith.constant 0 : i32
    %c0_i32_1 = arith.constant 0 : i32
    return %arg0, %c0_i32, %arg2, %c0_i32_0 : i32, i32, i32, i32
  }
  func.func @transform_3(%arg0: i32, %arg1: i32, %arg2: i32) -> (i32, i32, i32, i32) {
    %c0_i32 = arith.constant 0 : i32
    %c0_i32_0 = arith.constant 0 : i32
    %c0_i32_1 = arith.constant 0 : i32
    return %arg0, %c0_i32, %arg1, %c0_i32_0 : i32, i32, i32, i32
  }
}

module attributes {stable_mosaic.version = 11 : i64} {
  func.func @_linear_bias_kernel(%arg0: i32, %arg1: i32, %arg2: i32, %arg3: memref<32x64xf32, #tpu.memory_space<vmem>>, %arg4: memref<64x64xf32, #tpu.memory_space<vmem>>, %arg5: memref<1x64xf32, #tpu.memory_space<vmem>>, %arg6: memref<32x64xf32, #tpu.memory_space<vmem>>, %arg7: memref<32x64xf32, #tpu.memory_space<vmem>>) attributes {dimension_semantics = [#tpu.dimension_semantics<parallel>, #tpu.dimension_semantics<parallel>, #tpu.dimension_semantics<arbitrary>], iteration_bounds = array<i64: 1, 1, 1>, scalar_prefetch = 0 : i64, scratch_operands = 1 : i64, tpu.core_type = #tpu.core_type<tc>, window_params = [{transform_indices = @transform_0, window_bounds = array<i64: 32, 64>}, {transform_indices = @transform_1, window_bounds = array<i64: 64, 64>}, {transform_indices = @transform_2, window_bounds = array<i64: 1, 64>}, {transform_indices = @transform_3, window_bounds = array<i64: 32, 64>}]} {
    %c0_i32 = arith.constant 0 : i32
    %0 = arith.cmpi eq, %arg2, %c0_i32 : i32
    %1 = arith.extui %0 : i1 to i32
    %c0_i32_0 = arith.constant 0 : i32
    %2 = arith.cmpi ne, %1, %c0_i32_0 : i32
    scf.if %2 {
      %cst_10 = arith.constant 0.000000e+00 : f32
      %12 = vector.broadcast %cst_10 : f32 to vector<32x64xf32>
      %c0_11 = arith.constant 0 : index
      %c0_12 = arith.constant 0 : index
      %13 = vector.load %arg7[%c0_11, %c0_12] : memref<32x64xf32, #tpu.memory_space<vmem>>, vector<32x64xf32>
      tpu.vector_store %arg7[%c0_11, %c0_12], %12 {strides = array<i32>} : memref<32x64xf32, #tpu.memory_space<vmem>>, vector<32x64xf32>,
    } else {
    }
    %c0 = arith.constant 0 : index
    %c0_1 = arith.constant 0 : index
    %3 = vector.load %arg7[%c0, %c0_1] : memref<32x64xf32, #tpu.memory_space<vmem>>, vector<32x64xf32>
    %c0_2 = arith.constant 0 : index
    %c0_3 = arith.constant 0 : index
    %4 = vector.load %arg3[%c0_2, %c0_3] : memref<32x64xf32, #tpu.memory_space<vmem>>, vector<32x64xf32>
    %c0_4 = arith.constant 0 : index
    %c0_5 = arith.constant 0 : index
    %5 = vector.load %arg4[%c0_4, %c0_5] : memref<64x64xf32, #tpu.memory_space<vmem>>, vector<64x64xf32>
    %cst = arith.constant dense<0.000000e+00> : vector<32x64xf32>
    %6 = tpu.matmul %4, %5, %cst {dimension_numbers = #tpu.dot_dimension_numbers<[1], [0], [0], [1], [0, 0, 1, 1], [], []>} : vector<32x64xf32>, vector<64x64xf32>, vector<32x64xf32> -> vector<32x64xf32>
    %7 = arith.addf %3, %6 : vector<32x64xf32>
    %c0_6 = arith.constant 0 : index
    %c0_7 = arith.constant 0 : index
    %8 = vector.load %arg7[%c0_6, %c0_7] : memref<32x64xf32, #tpu.memory_space<vmem>>, vector<32x64xf32>
    tpu.vector_store %arg7[%c0_6, %c0_7], %7 {strides = array<i32>} : memref<32x64xf32, #tpu.memory_space<vmem>>, vector<32x64xf32>,
    %c0_i32_8 = arith.constant 0 : i32
    %9 = arith.cmpi eq, %arg2, %c0_i32_8 : i32
    %10 = arith.extui %9 : i1 to i32
    %c0_i32_9 = arith.constant 0 : i32
    %11 = arith.cmpi ne, %10, %c0_i32_9 : i32
    scf.if %11 {
      %c0_10 = arith.constant 0 : index
      %c0_11 = arith.constant 0 : index
      %12 = vector.load %arg7[%c0_10, %c0_11] : memref<32x64xf32, #tpu.memory_space<vmem>>, vector<32x64xf32>
      %c0_12 = arith.constant 0 : index
      %c0_13 = arith.constant 0 : index
      %13 = vector.load %arg5[%c0_12, %c0_13] : memref<1x64xf32, #tpu.memory_space<vmem>>, vector<1x64xf32>
      %14 = vector.broadcast %13 : vector<1x64xf32> to vector<32x64xf32>
      %15 = arith.addf %12, %14 : vector<32x64xf32>
      %c0_14 = arith.constant 0 : index
      %c0_15 = arith.constant 0 : index
      %16 = vector.load %arg6[%c0_14, %c0_15] : memref<32x64xf32, #tpu.memory_space<vmem>>, vector<32x64xf32>
      tpu.vector_store %arg6[%c0_14, %c0_15], %15 {strides = array<i32>} : memref<32x64xf32, #tpu.memory_space<vmem>>, vector<32x64xf32>,
    } else {
    }
    return
  }
  func.func @transform_0(%arg0: i32, %arg1: i32, %arg2: i32) -> (i32, i32) {
    %c0_i32 = arith.constant 0 : i32
    return %arg0, %arg2 : i32, i32
  }
  func.func @transform_1(%arg0: i32, %arg1: i32, %arg2: i32) -> (i32, i32) {
    %c0_i32 = arith.constant 0 : i32
    return %arg2, %arg1 : i32, i32
  }
  func.func @transform_2(%arg0: i32, %arg1: i32, %arg2: i32) -> (i32, i32) {
    %c0_i32 = arith.constant 0 : i32
    %c0_i32_0 = arith.constant 0 : i32
    return %c0_i32, %arg1 : i32, i32
  }
  func.func @transform_3(%arg0: i32, %arg1: i32, %arg2: i32) -> (i32, i32) {
    %c0_i32 = arith.constant 0 : i32
    return %arg0, %arg1 : i32, i32
  }
}

</mosaic_0001>

<llo_original>
// kernel: attention_forward.3
$region0: #{attention_forward.3}
  #allocation0 [shape = 'u32[]', space=smem, size = 0x4, offset = 0x4, fixed_abs, tag = 'smem constant byte address 0x4 - core index']
  #allocation1 [shape = 'u32[144,128]{1,0:T(1,128)}', space=vmem, size = 0x12000, scoped, tag = 'internal scratch']
  #allocation2 [shape = 'f32[32,192]{1,0:T(8,128)}', space=vmem, size = 0x8000, scoped, tag = 'scratch operand']
  %s0 = inlined_call_operand.hbm [shape: f32[32,64], index: 0, kind: input, shape index: {}]
  %s1 = inlined_call_operand.hbm [shape: f32[64,192], index: 1, kind: input, shape index: {}]
  %s2 = inlined_call_operand.vmem [shape: f32[32,192], index: 2, kind: output, shape index: {}]
  %s3 = sld [smem:[#allocation0]]
  $region34: #{attention_forward.3} parent=0
    _
  %s5 = ssub.s32 1, %s3
  %s6 = scalar_select 0, %s5, %s3
  $region1: #{attention_forward.3} parent=0
    #allocation3 [shape = 'u8[16384]{0}', space=vmem, size = 0x4000, scoped, tag = 'input window, operand 0, single buffered']
    #allocation4 [shape = 's32[1]{0}', space=sflag, size = 0x4, scoped, tag = 'scoped memory for attention_forward.3']
    #allocation5 [shape = 'u8[65536]{0}', space=vmem, size = 0x10000, scoped, tag = 'input window, operand 1, single buffered']
    #allocation6 [shape = 's32[1]{0}', space=sflag, size = 0x4, scoped, tag = 'scoped memory for attention_forward.3']
    %7 = vsyncpa [#allocation4], 0
    %8 = vsyncpa [#allocation6], 0
    // Predicated region
    $region2: #{attention_forward.3} parent=1 // pred_check
      _
    $region3: #{attention_forward.3} parent=1 // pred_check_branch
      %10 = sbr.rel (0) target = $region5
    $region4: #{attention_forward.3} parent=1 // pred_region
      %s12 = ssub.s32 512, 512
      %13 = vsyncadd [#allocation4], %s12
      %s14 = sshll.u32 [#allocation3], 4
      %s15 = int_to_ptr.vmem [resolvable:$true] %s14
      %20 = dma.hbm_to_vmem [thread:$0]  %s0, 512, %s15, [#allocation4], 128, 128, 8
    $region5: #{attention_forward.3} parent=1 // pred_fallthru
      _
    // Predicated region
    $region6: #{attention_forward.3} parent=1 // pred_check
      _
    $region7: #{attention_forward.3} parent=1 // pred_check_branch
      %22 = sbr.rel (0) target = $region9
    $region8: #{attention_forward.3} parent=1 // pred_region
      %s24 = ssub.s32 2048, 2048
      %25 = vsyncadd [#allocation6], %s24
      %s26 = sshll.u32 [#allocation5], 4
      %s27 = int_to_ptr.vmem [resolvable:$true] %s26
      %32 = dma.hbm_to_vmem [thread:$0]  %s1, 2048, %s27, [#allocation6], 256, 256, 16
    $region9: #{attention_forward.3} parent=1 // pred_fallthru
      _
    // Predicated region
    $region10: #{attention_forward.3} parent=1 // pred_check
      _
    $region11: #{attention_forward.3} parent=1 // pred_check_branch
      %34 = sbr.rel (0) target = $region13
    $region12: #{attention_forward.3} parent=1 // pred_region
      %35 = dma.done [#allocation4], 512
    $region13: #{attention_forward.3} parent=1 // pred_fallthru
      _
    // Predicated region
    $region14: #{attention_forward.3} parent=1 // pred_check
      _
    $region15: #{attention_forward.3} parent=1 // pred_check_branch
      %37 = sbr.rel (0) target = $region17
    $region16: #{attention_forward.3} parent=1 // pred_region
      %38 = dma.done [#allocation6], 2048
    $region17: #{attention_forward.3} parent=1 // pred_fallthru
      _
    %p39 = scmp.eq.s32.totalorder 0, 0
    // Predicated region
    $region18: #{attention_forward.3} parent=1 // pred_check
      %p40 = pneg %p39
    $region19: #{attention_forward.3} parent=1 // pred_check_branch
      %42 = sbr.rel (%p40) target = $region21
    $region20: #{attention_forward.3} parent=1 // pred_region
      %43 = vst [vmem:[#allocation2] sm:$0xff] 0.0
      %vm44 = vcmask 523264
      %45 = vst.msk [vmem:[#allocation2 + $0x8] sm:$0xff] %vm44, 0.0
      %46 = vst [vmem:[#allocation2 + $0x10] sm:$0xff] 0.0
      %47 = vst.msk [vmem:[#allocation2 + $0x18] sm:$0xff] %vm44, 0.0
      %48 = vst [vmem:[#allocation2 + $0x20] sm:$0xff] 0.0
      %49 = vst.msk [vmem:[#allocation2 + $0x28] sm:$0xff] %vm44, 0.0
      %50 = vst [vmem:[#allocation2 + $0x30] sm:$0xff] 0.0
      %51 = vst.msk [vmem:[#allocation2 + $0x38] sm:$0xff] %vm44, 0.0
    $region21: #{attention_forward.3} parent=1 // pred_fallthru
      _
    %v52 = vld [vmem:[#allocation2] sm:$0xff]
    %v53 = vld [vmem:[#allocation2 + $0x8] sm:$0xff]
    %v54 = vld [vmem:[#allocation2 + $0x10] sm:$0xff]
    %v55 = vld [vmem:[#allocation2 + $0x18] sm:$0xff]
    %v56 = vld [vmem:[#allocation2 + $0x20] sm:$0xff]
    %v57 = vld [vmem:[#allocation2 + $0x28] sm:$0xff]
    %v58 = vld [vmem:[#allocation2 + $0x30] sm:$0xff]
    %v59 = vld [vmem:[#allocation2 + $0x38] sm:$0xff]
    %v60 = vld [vmem:[#allocation3] sm:$0xff]
    %v61 = vld [vmem:[#allocation3 + $0x8] sm:$0xff]
    %v62 = vld [vmem:[#allocation3 + $0x10] sm:$0xff]
    %v63 = vld [vmem:[#allocation3 + $0x18] sm:$0xff]
    %v64 = vld [vmem:[#allocation5] sm:$0xff]
    %v65 = vld [vmem:[#allocation5 + $0x8] sm:$0xff]
    %v66 = vld [vmem:[#allocation5 + $0x10] sm:$0xff]
    %v67 = vld [vmem:[#allocation5 + $0x18] sm:$0xff]
    %v68 = vld [vmem:[#allocation5 + $0x20] sm:$0xff]
    %v69 = vld [vmem:[#allocation5 + $0x28] sm:$0xff]
    %v70 = vld [vmem:[#allocation5 + $0x30] sm:$0xff]
    %v71 = vld [vmem:[#allocation5 + $0x38] sm:$0xff]
    %v72 = vld [vmem:[#allocation5 + $0x40] sm:$0xff]
    %v73 = vld [vmem:[#allocation5 + $0x48] sm:$0xff]
    %v74 = vld [vmem:[#allocation5 + $0x50] sm:$0xff]
    %v75 = vld [vmem:[#allocation5 + $0x58] sm:$0xff]
    %v76 = vld [vmem:[#allocation5 + $0x60] sm:$0xff]
    %v77 = vld [vmem:[#allocation5 + $0x68] sm:$0xff]
    %v78 = vld [vmem:[#allocation5 + $0x70] sm:$0xff]
    %v79 = vld [vmem:[#allocation5 + $0x78] sm:$0xff]
    %vm80 = vcmask 523264
    %v82 = vsel %vm80, %v60, 0
    %v85 = vsel %vm80, %v61, 0
    %v88 = vsel %vm80, %v62, 0
    %v91 = vsel %vm80, %v63, 0
    %93 = vmatprep.subr.mxu0 %v65
    %94 = vmatpush1.msra.mxu0 %v64
    %95 = vmatprep.subr.mxu0 %v67
    %96 = vmatpush1.msra.mxu0 %v66
    %97 = vmatprep.subr.mxu0 %v69
    %98 = vmatpush1.msra.mxu0 %v68
    %99 = vmatprep.subr.mxu0 %v71
    %100 = vmatpush1.msra.mxu0 %v70
    %101 = vmatprep.subr.mxu0 %v73
    %102 = vmatpush1.msra.mxu0 %v72
    %103 = vmatprep.subr.mxu0 %v75
    %104 = vmatpush1.msra.mxu0 %v74
    %105 = vmatprep.subr.mxu0 %v77
    %106 = vmatpush1.msra.mxu0 %v76
    %107 = vmatprep.subr.mxu0 %v79
    %108 = vmatpush1.msra.mxu0 %v78
    %109 = vmatprep.subr.mxu0 0.0
    %110 = vmatpush1.msra.mxu0 0.0
    %111 = vmatprep.subr.mxu0 0.0
    %112 = vmatpush1.msra.mxu0 0.0
    %113 = vmatprep.subr.mxu0 0.0
    %114 = vmatpush1.msra.mxu0 0.0
    %115 = vmatprep.subr.mxu0 0.0
    %116 = vmatpush1.msra.mxu0 0.0
    %117 = vmatprep.subr.mxu0 0.0
    %118 = vmatpush1.msra.mxu0 0.0
    %119 = vmatprep.subr.mxu0 0.0
    %120 = vmatpush1.msra.mxu0 0.0
    %121 = vmatprep.subr.mxu0 0.0
    %122 = vmatpush1.msra.mxu0 0.0
    %123 = vmatprep.subr.mxu0 0.0
    %124 = vmatpush1.msra.mxu0 0.0
    %125 = vmatprep.subr.mxu0 0.0
    %126 = vmatpush1.msra.mxu0 0.0
    %127 = vmatprep.subr.mxu0 0.0
    %128 = vmatpush1.msra.mxu0 0.0
    %129 = vmatprep.subr.mxu0 0.0
    %130 = vmatpush1.msra.mxu0 0.0
    %131 = vmatprep.subr.mxu0 0.0
    %132 = vmatpush1.msra.mxu0 0.0
    %133 = vmatprep.subr.mxu0 0.0
    %134 = vmatpush1.msra.mxu0 0.0
    %135 = vmatprep.subr.mxu0 0.0
    %136 = vmatpush1.msra.mxu0 0.0
    %137 = vmatprep.subr.mxu0 0.0
    %138 = vmatpush1.msra.mxu0 0.0
    %139 = vmatprep.subr.mxu0 0.0
    %140 = vmatpush1.msra.mxu0 0.0
    %141 = vmatprep.subr.mxu0 0.0
    %142 = vmatpush1.msra.mxu0 0.0
    %143 = vmatprep.subr.mxu0 0.0
    %144 = vmatpush1.msra.mxu0 0.0
    %145 = vmatprep.subr.mxu0 0.0
    %146 = vmatpush1.msra.mxu0 0.0
    %147 = vmatprep.subr.mxu0 0.0
    %148 = vmatpush1.msra.mxu0 0.0
    %149 = vmatprep.subr.mxu0 0.0
    %150 = vmatpush1.msra.mxu0 0.0
    %151 = vmatprep.subr.mxu0 0.0
    %152 = vmatpush1.msra.mxu0 0.0
    %153 = vmatprep.subr.mxu0 0.0
    %154 = vmatpush1.msra.mxu0 0.0
    %155 = vmatprep.subr.mxu0 0.0
    %156 = vmatpush1.msra.mxu0 0.0
    %157 = vmatprep.mubr.f32.mxu0 0.0
    %158 = vmatmul.mubr.f32.gmra.mrb[0].mxu0 %v82
    %v159 = vpop.f32.mrb[0].mxu0
    %v160 = vadd.f32 0.0, %v159
    %v161 = vpop.f32.mrb[0].mxu0
    %v162 = vadd.f32 0.0, %v161
    %163 = vmatprep.mubr.f32.mxu0 0.0
    %164 = vmatmul.mubr.f32.gmra.mrb[0].mxu0 %v85
    %v165 = vpop.f32.mrb[0].mxu0
    %v166 = vadd.f32 0.0, %v165
    %v167 = vpop.f32.mrb[0].mxu0
    %v168 = vadd.f32 0.0, %v167
    %169 = vmatprep.mubr.f32.mxu0 0.0
    %170 = vmatmul.mubr.f32.gmra.mrb[0].mxu0 %v88
    %v171 = vpop.f32.mrb[0].mxu0
    %v172 = vadd.f32 0.0, %v171
    %v173 = vpop.f32.mrb[0].mxu0
    %v174 = vadd.f32 0.0, %v173
    %175 = vmatprep.mubr.f32.mxu0 0.0
    %176 = vmatmul.mubr.f32.gmra.mrb[0].mxu0 %v91
    %v177 = vpop.f32.mrb[0].mxu0
    %v178 = vadd.f32 0.0, %v177
    %v179 = vpop.f32.mrb[0].mxu0
    %v180 = vadd.f32 0.0, %v179
    %181 = vdwg.mxu0
    %v182 = vadd.f32 %v52, %v160
    %v183 = vadd.f32 %v53, %v162
    %v184 = vadd.f32 %v54, %v166
    %v185 = vadd.f32 %v55, %v168
    %v186 = vadd.f32 %v56, %v172
    %v187 = vadd.f32 %v57, %v174
    %v188 = vadd.f32 %v58, %v178
    %v189 = vadd.f32 %v59, %v180
    %190 = vst [vmem:[#allocation2] sm:$0xff] %v182
    %191 = vst.msk [vmem:[#allocation2 + $0x8] sm:$0xff] %vm80, %v183
    %192 = vst [vmem:[#allocation2 + $0x10] sm:$0xff] %v184
    %193 = vst.msk [vmem:[#allocation2 + $0x18] sm:$0xff] %vm80, %v185
    %194 = vst [vmem:[#allocation2 + $0x20] sm:$0xff] %v186
    %195 = vst.msk [vmem:[#allocation2 + $0x28] sm:$0xff] %vm80, %v187
    %196 = vst [vmem:[#allocation2 + $0x30] sm:$0xff] %v188
    %197 = vst.msk [vmem:[#allocation2 + $0x38] sm:$0xff] %vm80, %v189
    // Predicated region
    $region22: #{attention_forward.3} parent=1 // pred_check
      %p198 = pneg %p39
    $region23: #{attention_forward.3} parent=1 // pred_check_branch
      %200 = sbr.rel (%p198) target = $region25
    $region24: #{attention_forward.3} parent=1 // pred_region
      %v201 = vld [vmem:[#allocation2] sm:$0xff]
      %v202 = vld [vmem:[#allocation2 + $0x8] sm:$0xff]
      %v203 = vld [vmem:[#allocation2 + $0x10] sm:$0xff]
      %v204 = vld [vmem:[#allocation2 + $0x18] sm:$0xff]
      %v205 = vld [vmem:[#allocation2 + $0x20] sm:$0xff]
      %v206 = vld [vmem:[#allocation2 + $0x28] sm:$0xff]
      %v207 = vld [vmem:[#allocation2 + $0x30] sm:$0xff]
      %v208 = vld [vmem:[#allocation2 + $0x38] sm:$0xff]
      %209 = vst [vmem:[%s2] sm:$0xff] %v201
      %210 = vst.msk [vmem:[%s2 + $0x8] sm:$0xff] %vm80, %v202
      %211 = vst [vmem:[%s2 + $0x10] sm:$0xff] %v203
      %212 = vst.msk [vmem:[%s2 + $0x18] sm:$0xff] %vm80, %v204
      %213 = vst [vmem:[%s2 + $0x20] sm:$0xff] %v205
      %214 = vst.msk [vmem:[%s2 + $0x28] sm:$0xff] %vm80, %v206
      %215 = vst [vmem:[%s2 + $0x30] sm:$0xff] %v207
      %216 = vst.msk [vmem:[%s2 + $0x38] sm:$0xff] %vm80, %v208
    $region25: #{attention_forward.3} parent=1 // pred_fallthru
      _
    // Predicated region
    $region26: #{attention_forward.3} parent=1 // pred_check
      _
    $region27: #{attention_forward.3} parent=1 // pred_check_branch
      %218 = sbr.rel (0) target = $region29
    $region28: #{attention_forward.3} parent=1 // pred_region
      _
    $region29: #{attention_forward.3} parent=1 // pred_fallthru
      _
    // Predicated region
    $region30: #{attention_forward.3} parent=1 // pred_check
      _
    $region31: #{attention_forward.3} parent=1 // pred_check_branch
      %220 = sbr.rel (0) target = $region33
    $region32: #{attention_forward.3} parent=1 // pred_region
      _
    $region33: #{attention_forward.3} parent=1 // pred_fallthru
      _
    %221 = vsyncpa [#allocation4], 1
    %222 = vsyncpa [#allocation6], 1

// kernel: attention_forward.5
$region0: #{attention_forward.5}
  #allocation0 [shape = 'u32[]', space=smem, size = 0x4, offset = 0x4, fixed_abs, tag = 'smem constant byte address 0x4 - core index']
  #allocation1 [shape = 'u32[144,128]{1,0:T(1,128)}', space=vmem, size = 0x12000, scoped, tag = 'internal scratch']
  #allocation2 [shape = 'f32[32,64]{1,0:T(8,128)}', space=vmem, size = 0x4000, scoped, tag = 'scratch operand']
  %s0 = inlined_call_operand.vmem [shape: f32[32,64], index: 0, kind: input, shape index: {}]
  %s1 = inlined_call_operand.vmem [shape: f32[64,64], index: 1, kind: input, shape index: {}]
  %s2 = inlined_call_operand.vmem [shape: f32[1,64], index: 2, kind: input, shape index: {}]
  %s3 = inlined_call_operand.hbm [shape: f32[32,64], index: 3, kind: output, shape index: {}]
  %s4 = sld [smem:[#allocation0]]
  $region30: #{attention_forward.5} parent=0
    _
  %s6 = ssub.s32 1, %s4
  %s7 = scalar_select 0, %s6, %s4
  $region1: #{attention_forward.5} parent=0
    #allocation3 [shape = 'u8[16384]{0}', space=vmem, size = 0x4000, scoped, tag = 'output window, operand 0, single buffered']
    #allocation4 [shape = 's32[1]{0}', space=sflag, size = 0x4, scoped, tag = 'scoped memory for attention_forward.5']
    %8 = vsyncpa [#allocation4], 0
    // Predicated region
    $region2: #{attention_forward.5} parent=1 // pred_check
      _
    $region3: #{attention_forward.5} parent=1 // pred_check_branch
      %10 = sbr.rel (0) target = $region5
    $region4: #{attention_forward.5} parent=1 // pred_region
      _
    $region5: #{attention_forward.5} parent=1 // pred_fallthru
      _
    // Predicated region
    $region6: #{attention_forward.5} parent=1 // pred_check
      _
    $region7: #{attention_forward.5} parent=1 // pred_check_branch
      %12 = sbr.rel (0) target = $region9
    $region8: #{attention_forward.5} parent=1 // pred_region
      _
    $region9: #{attention_forward.5} parent=1 // pred_fallthru
      _
    // Predicated region
    $region10: #{attention_forward.5} parent=1 // pred_check
      _
    $region11: #{attention_forward.5} parent=1 // pred_check_branch
      %14 = sbr.rel (0) target = $region13
    $region12: #{attention_forward.5} parent=1 // pred_region
      _
    $region13: #{attention_forward.5} parent=1 // pred_fallthru
      _
    %p15 = scmp.eq.s32.totalorder 0, 0
    // Predicated region
    $region14: #{attention_forward.5} parent=1 // pred_check
      %p16 = pneg %p15
    $region15: #{attention_forward.5} parent=1 // pred_check_branch
      %18 = sbr.rel (%p16) target = $region17
    $region16: #{attention_forward.5} parent=1 // pred_region
      %vm19 = vcmask 523264
      %20 = vst.msk [vmem:[#allocation2] sm:$0xff] %vm19, 0.0
      %21 = vst.msk [vmem:[#allocation2 + $0x8] sm:$0xff] %vm19, 0.0
      %22 = vst.msk [vmem:[#allocation2 + $0x10] sm:$0xff] %vm19, 0.0
      %23 = vst.msk [vmem:[#allocation2 + $0x18] sm:$0xff] %vm19, 0.0
    $region17: #{attention_forward.5} parent=1 // pred_fallthru
      _
    %v24 = vld [vmem:[#allocation2] sm:$0xff]
    %v25 = vld [vmem:[#allocation2 + $0x8] sm:$0xff]
    %v26 = vld [vmem:[#allocation2 + $0x10] sm:$0xff]
    %v27 = vld [vmem:[#allocation2 + $0x18] sm:$0xff]
    %v28 = vld [vmem:[%s0] sm:$0xff]
    %v29 = vld [vmem:[%s0 + $0x8] sm:$0xff]
    %v30 = vld [vmem:[%s0 + $0x10] sm:$0xff]
    %v31 = vld [vmem:[%s0 + $0x18] sm:$0xff]
    %v32 = vld [vmem:[%s1] sm:$0xff]
    %v33 = vld [vmem:[%s1 + $0x8] sm:$0xff]
    %v34 = vld [vmem:[%s1 + $0x10] sm:$0xff]
    %v35 = vld [vmem:[%s1 + $0x18] sm:$0xff]
    %v36 = vld [vmem:[%s1 + $0x20] sm:$0xff]
    %v37 = vld [vmem:[%s1 + $0x28] sm:$0xff]
    %v38 = vld [vmem:[%s1 + $0x30] sm:$0xff]
    %v39 = vld [vmem:[%s1 + $0x38] sm:$0xff]
    %vm40 = vcmask 523264
    %v42 = vsel %vm40, %v28, 0
    %v45 = vsel %vm40, %v29, 0
    %v48 = vsel %vm40, %v30, 0
    %v51 = vsel %vm40, %v31, 0
    %53 = vmatprep.subr.mxu0 0.0
    %54 = vmatpush1.msra.mxu0 %v32
    %55 = vmatprep.subr.mxu0 0.0
    %56 = vmatpush1.msra.mxu0 %v33
    %57 = vmatprep.subr.mxu0 0.0
    %58 = vmatpush1.msra.mxu0 %v34
    %59 = vmatprep.subr.mxu0 0.0
    %60 = vmatpush1.msra.mxu0 %v35
    %61 = vmatprep.subr.mxu0 0.0
    %62 = vmatpush1.msra.mxu0 %v36
    %63 = vmatprep.subr.mxu0 0.0
    %64 = vmatpush1.msra.mxu0 %v37
    %65 = vmatprep.subr.mxu0 0.0
    %66 = vmatpush1.msra.mxu0 %v38
    %67 = vmatprep.subr.mxu0 0.0
    %68 = vmatpush1.msra.mxu0 %v39
    %69 = vmatprep.subr.mxu0 0.0
    %70 = vmatpush1.msra.mxu0 0.0
    %71 = vmatprep.subr.mxu0 0.0
    %72 = vmatpush1.msra.mxu0 0.0
    %73 = vmatprep.subr.mxu0 0.0
    %74 = vmatpush1.msra.mxu0 0.0
    %75 = vmatprep.subr.mxu0 0.0
    %76 = vmatpush1.msra.mxu0 0.0
    %77 = vmatprep.subr.mxu0 0.0
    %78 = vmatpush1.msra.mxu0 0.0
    %79 = vmatprep.subr.mxu0 0.0
    %80 = vmatpush1.msra.mxu0 0.0
    %81 = vmatprep.subr.mxu0 0.0
    %82 = vmatpush1.msra.mxu0 0.0
    %83 = vmatprep.subr.mxu0 0.0
    %84 = vmatpush1.msra.mxu0 0.0
    %85 = vmatprep.subr.mxu0 0.0
    %86 = vmatpush1.msra.mxu0 0.0
    %87 = vmatprep.subr.mxu0 0.0
    %88 = vmatpush1.msra.mxu0 0.0
    %89 = vmatprep.subr.mxu0 0.0
    %90 = vmatpush1.msra.mxu0 0.0
    %91 = vmatprep.subr.mxu0 0.0
    %92 = vmatpush1.msra.mxu0 0.0
    %93 = vmatprep.subr.mxu0 0.0
    %94 = vmatpush1.msra.mxu0 0.0
    %95 = vmatprep.subr.mxu0 0.0
    %96 = vmatpush1.msra.mxu0 0.0
    %97 = vmatprep.subr.mxu0 0.0
    %98 = vmatpush1.msra.mxu0 0.0
    %99 = vmatprep.subr.mxu0 0.0
    %100 = vmatpush1.msra.mxu0 0.0
    %101 = vmatprep.subr.mxu0 0.0
    %102 = vmatpush1.msra.mxu0 0.0
    %103 = vmatprep.subr.mxu0 0.0
    %104 = vmatpush1.msra.mxu0 0.0
    %105 = vmatprep.subr.mxu0 0.0
    %106 = vmatpush1.msra.mxu0 0.0
    %107 = vmatprep.subr.mxu0 0.0
    %108 = vmatpush1.msra.mxu0 0.0
    %109 = vmatprep.subr.mxu0 0.0
    %110 = vmatpush1.msra.mxu0 0.0
    %111 = vmatprep.subr.mxu0 0.0
    %112 = vmatpush1.msra.mxu0 0.0
    %113 = vmatprep.subr.mxu0 0.0
    %114 = vmatpush1.msra.mxu0 0.0
    %115 = vmatprep.subr.mxu0 0.0
    %116 = vmatpush1.msra.mxu0 0.0
    %117 = vmatprep.mubr.f32.mxu0 0.0
    %118 = vmatmul.mubr.f32.gmra.mrb[0].mxu0 %v42
    %v119 = vpop.f32.mrb[0].mxu0
    %v120 = vadd.f32 0.0, %v119
    %v121 = vpop.f32.mrb[0].mxu0
    %122 = vmatprep.mubr.f32.mxu0 0.0
    %123 = vmatmul.mubr.f32.gmra.mrb[0].mxu0 %v45
    %v124 = vpop.f32.mrb[0].mxu0
    %v125 = vadd.f32 0.0, %v124
    %v126 = vpop.f32.mrb[0].mxu0
    %127 = vmatprep.mubr.f32.mxu0 0.0
    %128 = vmatmul.mubr.f32.gmra.mrb[0].mxu0 %v48
    %v129 = vpop.f32.mrb[0].mxu0
    %v130 = vadd.f32 0.0, %v129
    %v131 = vpop.f32.mrb[0].mxu0
    %132 = vmatprep.mubr.f32.mxu0 0.0
    %133 = vmatmul.mubr.f32.gmra.mrb[0].mxu0 %v51
    %v134 = vpop.f32.mrb[0].mxu0
    %v135 = vadd.f32 0.0, %v134
    %v136 = vpop.f32.mrb[0].mxu0
    %137 = vdwg.mxu0
    %v138 = vadd.f32 %v24, %v120
    %v139 = vadd.f32 %v25, %v125
    %v140 = vadd.f32 %v26, %v130
    %v141 = vadd.f32 %v27, %v135
    %142 = vst.msk [vmem:[#allocation2] sm:$0xff] %vm40, %v138
    %143 = vst.msk [vmem:[#allocation2 + $0x8] sm:$0xff] %vm40, %v139
    %144 = vst.msk [vmem:[#allocation2 + $0x10] sm:$0xff] %vm40, %v140
    %145 = vst.msk [vmem:[#allocation2 + $0x18] sm:$0xff] %vm40, %v141
    // Predicated region
    $region18: #{attention_forward.5} parent=1 // pred_check
      %p146 = pneg %p15
    $region19: #{attention_forward.5} parent=1 // pred_check_branch
      %148 = sbr.rel (%p146) target = $region21
    $region20: #{attention_forward.5} parent=1 // pred_region
      %v149 = vld [vmem:[#allocation2] sm:$0xff]
      %v150 = vld [vmem:[#allocation2 + $0x8] sm:$0xff]
      %v151 = vld [vmem:[#allocation2 + $0x10] sm:$0xff]
      %v152 = vld [vmem:[#allocation2 + $0x18] sm:$0xff]
      %v153 = vld [vmem:[%s2] sm:$0x1]
      %v155 = vlaneseq
      %v156 = vshrl.u32 %v155, 7
      %v157 = vsub.s32 0, %v156
      %v158 = vrot.slane %v153, %v157
      %v160 = vadd.f32 %v149, %v158
      %v161 = vadd.f32 %v150, %v158
      %v162 = vadd.f32 %v151, %v158
      %v163 = vadd.f32 %v152, %v158
      %164 = vst.msk [vmem:[#allocation3] sm:$0xff] %vm40, %v160
      %165 = vst.msk [vmem:[#allocation3 + $0x8] sm:$0xff] %vm40, %v161
      %166 = vst.msk [vmem:[#allocation3 + $0x10] sm:$0xff] %vm40, %v162
      %167 = vst.msk [vmem:[#allocation3 + $0x18] sm:$0xff] %vm40, %v163
    $region21: #{attention_forward.5} parent=1 // pred_fallthru
      _
    // Predicated region
    $region22: #{attention_forward.5} parent=1 // pred_check
      _
    $region23: #{attention_forward.5} parent=1 // pred_check_branch
      %169 = sbr.rel (0) target = $region25
    $region24: #{attention_forward.5} parent=1 // pred_region
      %s171 = ssub.s32 512, 512
      %172 = vsyncadd [#allocation4], %s171
      %s173 = sshll.u32 [#allocation3], 4
      %s174 = int_to_ptr.vmem [resolvable:$true] %s173
      %179 = dma.vmem_to_hbm [thread:$0]  %s174, 512, %s3, [#allocation4], 128, 128, 8
    $region25: #{attention_forward.5} parent=1 // pred_fallthru
      _
    // Predicated region
    $region26: #{attention_forward.5} parent=1 // pred_check
      _
    $region27: #{attention_forward.5} parent=1 // pred_check_branch
      %181 = sbr.rel (0) target = $region29
    $region28: #{attention_forward.5} parent=1 // pred_region
      %182 = dma.done [#allocation4], 512
    $region29: #{attention_forward.5} parent=1 // pred_fallthru
      _
    %183 = vsyncpa [#allocation4], 1

// kernel: attention_forward.4
$region0: #{attention_forward.4}
  #allocation0 [shape = 'u32[]', space=smem, size = 0x4, offset = 0x4, fixed_abs, tag = 'smem constant byte address 0x4 - core index']
  #allocation1 [shape = 'u32[144,128]{1,0:T(1,128)}', space=vmem, size = 0x12000, scoped, tag = 'internal scratch']
  #allocation2 [shape = 'f32[8,16,1]{2,1,0:T(8,128)}', space=vmem, size = 0x10000, scoped, tag = 'scratch operand']
  #allocation3 [shape = 'f32[8,16,1]{2,1,0:T(8,128)}', space=vmem, size = 0x10000, scoped, tag = 'scratch operand']
  #allocation4 [shape = 'f32[8,16,8]{2,1,0:T(8,128)}', space=vmem, size = 0x10000, scoped, tag = 'scratch operand']
  %s0 = inlined_call_operand.vmem [shape: f32[2,8,16,8], index: 0, kind: input, shape index: {}]
  %s1 = inlined_call_operand.vmem [shape: f32[2,8,16,8], index: 1, kind: input, shape index: {}]
  %s2 = inlined_call_operand.vmem [shape: f32[2,8,16,8], index: 2, kind: input, shape index: {}]
  %s3 = inlined_call_operand.vmem [shape: f32[2,8,16,8], index: 3, kind: output, shape index: {}]
  %s4 = sld [smem:[#allocation0]]
  $region53: #{attention_forward.4} parent=0
    _
  %s6 = ssub.s32 1, %s4
  %s7 = scalar_select 0, %s6, %s4
  loop: start=0, step=1, limit=4
  $region2: #{attention_forward.4} parent=0 // loop_pre_header
    _
  $region3: #{attention_forward.4} parent=0 // loop_header
    %s9 = sphi 0, %s13
    %p10 = scmp.ge.s32.totalorder %s9, 4
    %s16 = sphi 0, %s35
    %s17 = sphi 0, %s31
    %s18 = sphi 0, %s27
    %s19 = sphi 0, %s16
    %s20 = sphi 0, %s17
    %s21 = sphi 0, %s18
    %s22 = sphi 0, %s19
    %s23 = sphi 0, %s20
    %s24 = sphi 0, %s21
    %s40 = sphi 0, %s42
    %s43 = sphi 0, %s40
    %s44 = sphi 0, %s43
    %s60 = sphi 0, %s44
    %s68 = sphi 0, %s70
    %s71 = sphi 0, %s68
    %s72 = sphi 0, %s71
    %s88 = sphi 0, %s72
    %s96 = sphi 0, %s98
    %s99 = sphi 0, %s96
    %s100 = sphi 0, %s99
    %s116 = sphi 0, %s100
    %s124 = sphi 0, %s126
    %s127 = sphi 0, %s124
    %s128 = sphi 0, %s127
    %s144 = sphi 0, %s128
  $region4: #{attention_forward.4} parent=0 // loop_header_branch
    %12 = sbr.rel (%p10) target = $region8
  $region5: #{attention_forward.4} parent=0 // loop_body
    %s14 = ssub.s32 %s9, 1
    %s15 = ssub.s32 %s9, 2
    %s25 = sadd.s32 1, %s18
    %p26 = scmp.ge.s32.totalorder %s25, 1
    %s27 = scalar_select %p26, 0, %s25
    %s28 = sadd.s32 1, %s17
    %s29 = scalar_select %p26, %s28, %s17
    %p30 = scmp.ge.s32.totalorder %s29, 1
    %s31 = scalar_select %p30, 0, %s29
    %s32 = sadd.s32 1, %s16
    %s33 = scalar_select %p30, %s32, %s16
    %p34 = scmp.ge.s32.totalorder %s33, 2
    %s35 = scalar_select %p34, 0, %s33
    %s36 = ssub.s32 %s16, %s35
    %s37 = ssub.s32 %s17, %s31
    %s38 = sor.u32 %s36, %s37
    %p39 = scmp.eq.s32.totalorder %s38, 0
    %s41 = sadd.s32 %s40, 1
    %s42 = scalar_select %p39, %s40, %s41
    %p45 = pneg %p39
    %p46 = scmp.eq.s32.totalorder %s9, 1
    %p47 = por %p45, %p46
    %p48 = scmp.ne.s32.totalorder %s40, %s43
    %p49 = scmp.eq.s32.totalorder %s9, 0
    %p50 = por %p48, %p49
    %p51 = scmp.ne.s32.totalorder %s40, %s43
    %p52 = scmp.eq.s32.totalorder %s14, 1
    %p53 = por %p51, %p52
    %p54 = scmp.ne.s32.totalorder %s43, %s44
    %p55 = scmp.eq.s32.totalorder %s14, 0
    %p56 = por %p54, %p55
    %p57 = scmp.ne.s32.totalorder %s43, %s44
    %p58 = scmp.eq.s32.totalorder %s15, 1
    %p59 = por %p57, %p58
    %p61 = scmp.ne.s32.totalorder %s44, %s60
    %p62 = scmp.eq.s32.totalorder %s15, 0
    %p63 = por %p61, %p62
    %s64 = ssub.s32 %s16, %s35
    %s65 = ssub.s32 %s18, %s27
    %s66 = sor.u32 %s64, %s65
    %p67 = scmp.eq.s32.totalorder %s66, 0
    %s69 = sadd.s32 %s68, 1
    %s70 = scalar_select %p67, %s68, %s69
    %p73 = pneg %p67
    %p74 = scmp.eq.s32.totalorder %s9, 1
    %p75 = por %p73, %p74
    %p76 = scmp.ne.s32.totalorder %s68, %s71
    %p77 = scmp.eq.s32.totalorder %s9, 0
    %p78 = por %p76, %p77
    %p79 = scmp.ne.s32.totalorder %s68, %s71
    %p80 = scmp.eq.s32.totalorder %s14, 1
    %p81 = por %p79, %p80
    %p82 = scmp.ne.s32.totalorder %s71, %s72
    %p83 = scmp.eq.s32.totalorder %s14, 0
    %p84 = por %p82, %p83
    %p85 = scmp.ne.s32.totalorder %s71, %s72
    %p86 = scmp.eq.s32.totalorder %s15, 1
    %p87 = por %p85, %p86
    %p89 = scmp.ne.s32.totalorder %s72, %s88
    %p90 = scmp.eq.s32.totalorder %s15, 0
    %p91 = por %p89, %p90
    %s92 = ssub.s32 %s16, %s35
    %s93 = ssub.s32 %s18, %s27
    %s94 = sor.u32 %s92, %s93
    %p95 = scmp.eq.s32.totalorder %s94, 0
    %s97 = sadd.s32 %s96, 1
    %s98 = scalar_select %p95, %s96, %s97
    %p101 = pneg %p95
    %p102 = scmp.eq.s32.totalorder %s9, 1
    %p103 = por %p101, %p102
    %p104 = scmp.ne.s32.totalorder %s96, %s99
    %p105 = scmp.eq.s32.totalorder %s9, 0
    %p106 = por %p104, %p105
    %p107 = scmp.ne.s32.totalorder %s96, %s99
    %p108 = scmp.eq.s32.totalorder %s14, 1
    %p109 = por %p107, %p108
    %p110 = scmp.ne.s32.totalorder %s99, %s100
    %p111 = scmp.eq.s32.totalorder %s14, 0
    %p112 = por %p110, %p111
    %p113 = scmp.ne.s32.totalorder %s99, %s100
    %p114 = scmp.eq.s32.totalorder %s15, 1
    %p115 = por %p113, %p114
    %p117 = scmp.ne.s32.totalorder %s100, %s116
    %p118 = scmp.eq.s32.totalorder %s15, 0
    %p119 = por %p117, %p118
    %s120 = ssub.s32 %s16, %s35
    %s121 = ssub.s32 %s17, %s31
    %s122 = sor.u32 %s120, %s121
    %p123 = scmp.eq.s32.totalorder %s122, 0
    %s125 = sadd.s32 %s124, 1
    %s126 = scalar_select %p123, %s124, %s125
    %p129 = pneg %p123
    %p130 = scmp.eq.s32.totalorder %s9, 1
    %p131 = por %p129, %p130
    %p132 = scmp.ne.s32.totalorder %s124, %s127
    %p133 = scmp.eq.s32.totalorder %s9, 0
    %p134 = por %p132, %p133
    %p135 = scmp.ne.s32.totalorder %s124, %s127
    %p136 = scmp.eq.s32.totalorder %s14, 1
    %p137 = por %p135, %p136
    %p138 = scmp.ne.s32.totalorder %s127, %s128
    %p139 = scmp.eq.s32.totalorder %s14, 0
    %p140 = por %p138, %p139
    %p141 = scmp.ne.s32.totalorder %s127, %s128
    %p142 = scmp.eq.s32.totalorder %s15, 1
    %p143 = por %p141, %p142
    %p145 = scmp.ne.s32.totalorder %s128, %s144
    %p146 = scmp.eq.s32.totalorder %s15, 0
    %p147 = por %p145, %p146
    %p148 = scmp.le.s32.totalorder 1, %s9
    %p149 = scmp.lt.s32.totalorder %s9, 3
    %p150 = pnand %p148, %p149
    %p151 = pneg %p150
    // Predicated region
    $region9: #{attention_forward.4} parent=5 // pred_check
      _
    $region10: #{attention_forward.4} parent=5 // pred_check_branch
      %153 = sbr.rel (%p150) target = $region12
    $region11: #{attention_forward.4} parent=5 // pred_region
      %s154 = ssub.s32 %s9, 1
    $region12: #{attention_forward.4} parent=5 // pred_fallthru
      _
    %p155 = scmp.lt.s32.totalorder %s9, 2
    // Predicated region
    $region13: #{attention_forward.4} parent=5 // pred_check
      %p156 = pneg %p155
    $region14: #{attention_forward.4} parent=5 // pred_check_branch
      %158 = sbr.rel (%p156) target = $region16
    $region15: #{attention_forward.4} parent=5 // pred_region
      // Predicated region
      $region17: #{attention_forward.4} parent=15 // pred_check
        %p159 = pneg %p50
      $region18: #{attention_forward.4} parent=15 // pred_check_branch
        %161 = sbr.rel (%p159) target = $region20
      $region19: #{attention_forward.4} parent=15 // pred_region
        %s162 = smul.u32 2, %s17
        %p163 = scmp.lt.s32.totalorder %s16, 1
        %s164 = scalar_select %p163, %s16, 1
        %p165 = scmp.lt.s32.totalorder %s162, 1
        %s166 = scalar_select %p165, %s162, 1
        %s167 = smul.addr %s164, 16
        %s168 = sadd.s32 %s166, %s167
        %s169 = smul.addr %s168, 8
        %s170 = scalar_lea.vmem %s0, %s169
        %s171 = smul.u32 2, %s17
      $region20: #{attention_forward.4} parent=15 // pred_fallthru
        _
      // Predicated region
      $region21: #{attention_forward.4} parent=15 // pred_check
        %p172 = pneg %p78
      $region22: #{attention_forward.4} parent=15 // pred_check_branch
        %174 = sbr.rel (%p172) target = $region24
      $region23: #{attention_forward.4} parent=15 // pred_region
        %s175 = smul.u32 2, %s18
        %p176 = scmp.lt.s32.totalorder %s16, 1
        %s177 = scalar_select %p176, %s16, 1
        %p178 = scmp.lt.s32.totalorder %s175, 1
        %s179 = scalar_select %p178, %s175, 1
        %s180 = smul.addr %s177, 16
        %s181 = sadd.s32 %s179, %s180
        %s182 = smul.addr %s181, 8
        %s183 = scalar_lea.vmem %s1, %s182
        %s184 = smul.u32 2, %s18
      $region24: #{attention_forward.4} parent=15 // pred_fallthru
        _
      // Predicated region
      $region25: #{attention_forward.4} parent=15 // pred_check
        %p185 = pneg %p106
      $region26: #{attention_forward.4} parent=15 // pred_check_branch
        %187 = sbr.rel (%p185) target = $region28
      $region27: #{attention_forward.4} parent=15 // pred_region
        %s188 = smul.u32 2, %s18
        %p189 = scmp.lt.s32.totalorder %s16, 1
        %s190 = scalar_select %p189, %s16, 1
        %p191 = scmp.lt.s32.totalorder %s188, 1
        %s192 = scalar_select %p191, %s188, 1
        %s193 = smul.addr %s190, 16
        %s194 = sadd.s32 %s192, %s193
        %s195 = smul.addr %s194, 8
        %s196 = scalar_lea.vmem %s2, %s195
        %s197 = smul.u32 2, %s18
      $region28: #{attention_forward.4} parent=15 // pred_fallthru
        _
    $region16: #{attention_forward.4} parent=5 // pred_fallthru
      _
    %p198 = scmp.le.s32.totalorder 1, %s9
    %p199 = scmp.lt.s32.totalorder %s9, 3
    %p200 = pnand %p198, %p199
    %p201 = pneg %p200
    // Predicated region
    $region29: #{attention_forward.4} parent=5 // pred_check
      _
    $region30: #{attention_forward.4} parent=5 // pred_check_branch
      %203 = sbr.rel (%p200) target = $region32
    $region31: #{attention_forward.4} parent=5 // pred_region
      %s204 = ssub.s32 %s9, 1
      %s205 = smul.u32 2, %s20
      %p206 = scmp.lt.s32.totalorder %s19, 1
      %s207 = scalar_select %p206, %s19, 1
      %p208 = scmp.lt.s32.totalorder %s205, 1
      %s209 = scalar_select %p208, %s205, 1
      %s210 = smul.addr %s207, 16
      %s211 = sadd.s32 %s209, %s210
      %s212 = smul.addr %s211, 8
      %s213 = scalar_lea.vmem %s0, %s212
      %p214 = pneg %p56
      %p215 = pneg %p53
      %s216 = smul.u32 2, %s21
      %p217 = scmp.lt.s32.totalorder %s19, 1
      %s218 = scalar_select %p217, %s19, 1
      %p219 = scmp.lt.s32.totalorder %s216, 1
      %s220 = scalar_select %p219, %s216, 1
      %s221 = smul.addr %s218, 16
      %s222 = sadd.s32 %s220, %s221
      %s223 = smul.addr %s222, 8
      %s224 = scalar_lea.vmem %s1, %s223
      %p225 = pneg %p84
      %p226 = pneg %p81
      %s227 = smul.u32 2, %s21
      %p228 = scmp.lt.s32.totalorder %s19, 1
      %s229 = scalar_select %p228, %s19, 1
      %p230 = scmp.lt.s32.totalorder %s227, 1
      %s231 = scalar_select %p230, %s227, 1
      %s232 = smul.addr %s229, 16
      %s233 = sadd.s32 %s231, %s232
      %s234 = smul.addr %s233, 8
      %s235 = scalar_lea.vmem %s2, %s234
      %p236 = pneg %p112
      %p237 = pneg %p109
      %p238 = pneg %p140
      %p239 = pneg %p137
      %s240 = smul.u32 2, %s20
      %p241 = scmp.lt.s32.totalorder %s19, 1
      %s242 = scalar_select %p241, %s19, 1
      %p243 = scmp.lt.s32.totalorder %s240, 1
      %s244 = scalar_select %p243, %s240, 1
      %s245 = smul.addr %s242, 16
      %s246 = sadd.s32 %s244, %s245
      %s247 = smul.addr %s246, 8
      %s248 = scalar_lea.vmem %s3, %s247
      %s249 = smul.u32 2, %s20
      %p250 = scmp.lt.s32.totalorder %s19, 1
      %s251 = scalar_select %p250, %s19, 1
      %p252 = scmp.lt.s32.totalorder %s249, 1
      %s253 = scalar_select %p252, %s249, 1
      %s254 = smul.addr %s251, 16
      %s255 = sadd.s32 %s253, %s254
      %s256 = smul.addr %s255, 8
      %s257 = scalar_lea.vmem %s0, %s256
      %s258 = smul.u32 2, %s20
      %s259 = smul.u32 2, %s21
      %p260 = scmp.lt.s32.totalorder %s19, 1
      %s261 = scalar_select %p260, %s19, 1
      %p262 = scmp.lt.s32.totalorder %s259, 1
      %s263 = scalar_select %p262, %s259, 1
      %s264 = smul.addr %s261, 16
      %s265 = sadd.s32 %s263, %s264
      %s266 = smul.addr %s265, 8
      %s267 = scalar_lea.vmem %s1, %s266
      %s268 = smul.u32 2, %s21
      %s269 = smul.u32 2, %s21
      %p270 = scmp.lt.s32.totalorder %s19, 1
      %s271 = scalar_select %p270, %s19, 1
      %p272 = scmp.lt.s32.totalorder %s269, 1
      %s273 = scalar_select %p272, %s269, 1
      %s274 = smul.addr %s271, 16
      %s275 = sadd.s32 %s273, %s274
      %s276 = smul.addr %s275, 8
      %s277 = scalar_lea.vmem %s2, %s276
      %s278 = smul.u32 2, %s21
      %s279 = smul.u32 2, %s20
      %p280 = scmp.lt.s32.totalorder %s19, 1
      %s281 = scalar_select %p280, %s19, 1
      %p282 = scmp.lt.s32.totalorder %s279, 1
      %s283 = scalar_select %p282, %s279, 1
      %s284 = smul.addr %s281, 16
      %s285 = sadd.s32 %s283, %s284
      %s286 = smul.addr %s285, 8
      %s287 = scalar_lea.vmem %s3, %s286
      %s288 = smul.u32 2, %s20
      %p289 = scmp.eq.s32.totalorder %s21, 0
      // Predicated region
      $region33: #{attention_forward.4} parent=31 // pred_check
        %p290 = pneg %p289
      $region34: #{attention_forward.4} parent=31 // pred_check_branch
        %292 = sbr.rel (%p290) target = $region36
      $region35: #{attention_forward.4} parent=31 // pred_region
        %vm293 = vcmask 7168
        %294 = vst.msk [vmem:[#allocation2] sm:$0xff] %vm293, -inf
        %295 = vst.msk [vmem:[#allocation2 + $0x8] sm:$0xff] %vm293, -inf
        %296 = vst.msk [vmem:[#allocation2 + $0x10] sm:$0xff] %vm293, -inf
        %297 = vst.msk [vmem:[#allocation2 + $0x18] sm:$0xff] %vm293, -inf
        %298 = vst.msk [vmem:[#allocation2 + $0x20] sm:$0xff] %vm293, -inf
        %299 = vst.msk [vmem:[#allocation2 + $0x28] sm:$0xff] %vm293, -inf
        %300 = vst.msk [vmem:[#allocation2 + $0x30] sm:$0xff] %vm293, -inf
        %301 = vst.msk [vmem:[#allocation2 + $0x38] sm:$0xff] %vm293, -inf
        %302 = vst.msk [vmem:[#allocation2 + $0x40] sm:$0xff] %vm293, -inf
        %303 = vst.msk [vmem:[#allocation2 + $0x48] sm:$0xff] %vm293, -inf
        %304 = vst.msk [vmem:[#allocation2 + $0x50] sm:$0xff] %vm293, -inf
        %305 = vst.msk [vmem:[#allocation2 + $0x58] sm:$0xff] %vm293, -inf
        %306 = vst.msk [vmem:[#allocation2 + $0x60] sm:$0xff] %vm293, -inf
        %307 = vst.msk [vmem:[#allocation2 + $0x68] sm:$0xff] %vm293, -inf
        %308 = vst.msk [vmem:[#allocation2 + $0x70] sm:$0xff] %vm293, -inf
        %309 = vst.msk [vmem:[#allocation2 + $0x78] sm:$0xff] %vm293, -inf
        %310 = vst.msk [vmem:[#allocation3] sm:$0xff] %vm293, 0.0
        %311 = vst.msk [vmem:[#allocation3 + $0x8] sm:$0xff] %vm293, 0.0
        %312 = vst.msk [vmem:[#allocation3 + $0x10] sm:$0xff] %vm293, 0.0
        %313 = vst.msk [vmem:[#allocation3 + $0x18] sm:$0xff] %vm293, 0.0
        %314 = vst.msk [vmem:[#allocation3 + $0x20] sm:$0xff] %vm293, 0.0
        %315 = vst.msk [vmem:[#allocation3 + $0x28] sm:$0xff] %vm293, 0.0
        %316 = vst.msk [vmem:[#allocation3 + $0x30] sm:$0xff] %vm293, 0.0
        %317 = vst.msk [vmem:[#allocation3 + $0x38] sm:$0xff] %vm293, 0.0
        %318 = vst.msk [vmem:[#allocation3 + $0x40] sm:$0xff] %vm293, 0.0
        %319 = vst.msk [vmem:[#allocation3 + $0x48] sm:$0xff] %vm293, 0.0
        %320 = vst.msk [vmem:[#allocation3 + $0x50] sm:$0xff] %vm293, 0.0
        %321 = vst.msk [vmem:[#allocation3 + $0x58] sm:$0xff] %vm293, 0.0
        %322 = vst.msk [vmem:[#allocation3 + $0x60] sm:$0xff] %vm293, 0.0
        %323 = vst.msk [vmem:[#allocation3 + $0x68] sm:$0xff] %vm293, 0.0
        %324 = vst.msk [vmem:[#allocation3 + $0x70] sm:$0xff] %vm293, 0.0
        %325 = vst.msk [vmem:[#allocation3 + $0x78] sm:$0xff] %vm293, 0.0
        %vm326 = vcmask 64512
        %327 = vst.msk [vmem:[#allocation4] sm:$0xff] %vm326, 0.0
        %328 = vst.msk [vmem:[#allocation4 + $0x8] sm:$0xff] %vm326, 0.0
        %329 = vst.msk [vmem:[#allocation4 + $0x10] sm:$0xff] %vm326, 0.0
        %330 = vst.msk [vmem:[#allocation4 + $0x18] sm:$0xff] %vm326, 0.0
        %331 = vst.msk [vmem:[#allocation4 + $0x20] sm:$0xff] %vm326, 0.0
        %332 = vst.msk [vmem:[#allocation4 + $0x28] sm:$0xff] %vm326, 0.0
        %333 = vst.msk [vmem:[#allocation4 + $0x30] sm:$0xff] %vm326, 0.0
        %334 = vst.msk [vmem:[#allocation4 + $0x38] sm:$0xff] %vm326, 0.0
        %335 = vst.msk [vmem:[#allocation4 + $0x40] sm:$0xff] %vm326, 0.0
        %336 = vst.msk [vmem:[#allocation4 + $0x48] sm:$0xff] %vm326, 0.0
        %337 = vst.msk [vmem:[#allocation4 + $0x50] sm:$0xff] %vm326, 0.0
        %338 = vst.msk [vmem:[#allocation4 + $0x58] sm:$0xff] %vm326, 0.0
        %339 = vst.msk [vmem:[#allocation4 + $0x60] sm:$0xff] %vm326, 0.0
        %340 = vst.msk [vmem:[#allocation4 + $0x68] sm:$0xff] %vm326, 0.0
        %341 = vst.msk [vmem:[#allocation4 + $0x70] sm:$0xff] %vm326, 0.0
        %342 = vst.msk [vmem:[#allocation4 + $0x78] sm:$0xff] %vm326, 0.0
      $region36: #{attention_forward.4} parent=31 // pred_fallthru
        _
      %v343 = vld [vmem:[%s257] sm:$0xff]
      %v344 = vld [vmem:[%s257 + $0x8] sm:$0xff]
      %v345 = vld [vmem:[%s257 + $0x10] sm:$0xff]
      %v346 = vld [vmem:[%s257 + $0x18] sm:$0xff]
      %v347 = vld [vmem:[%s257 + $0x20] sm:$0xff]
      %v348 = vld [vmem:[%s257 + $0x28] sm:$0xff]
      %v349 = vld [vmem:[%s257 + $0x30] sm:$0xff]
      %v350 = vld [vmem:[%s257 + $0x38] sm:$0xff]
      %v351 = vld [vmem:[%s257 + $0x40] sm:$0xff]
      %v352 = vld [vmem:[%s257 + $0x48] sm:$0xff]
      %v353 = vld [vmem:[%s257 + $0x50] sm:$0xff]
      %v354 = vld [vmem:[%s257 + $0x58] sm:$0xff]
      %v355 = vld [vmem:[%s257 + $0x60] sm:$0xff]
      %v356 = vld [vmem:[%s257 + $0x68] sm:$0xff]
      %v357 = vld [vmem:[%s257 + $0x70] sm:$0xff]
      %v358 = vld [vmem:[%s257 + $0x78] sm:$0xff]
      %v359 = vmul.f32 %v343, 0.35355338
      %v360 = vmul.f32 %v344, 0.35355338
      %v361 = vmul.f32 %v345, 0.35355338
      %v362 = vmul.f32 %v346, 0.35355338
      %v363 = vmul.f32 %v347, 0.35355338
      %v364 = vmul.f32 %v348, 0.35355338
      %v365 = vmul.f32 %v349, 0.35355338
      %v366 = vmul.f32 %v350, 0.35355338
      %v367 = vmul.f32 %v351, 0.35355338
      %v368 = vmul.f32 %v352, 0.35355338
      %v369 = vmul.f32 %v353, 0.35355338
      %v370 = vmul.f32 %v354, 0.35355338
      %v371 = vmul.f32 %v355, 0.35355338
      %v372 = vmul.f32 %v356, 0.35355338
      %v373 = vmul.f32 %v357, 0.35355338
      %v374 = vmul.f32 %v358, 0.35355338
      %v375 = vld [vmem:[%s267] sm:$0xff]
      %v376 = vld [vmem:[%s267 + $0x8] sm:$0xff]
      %v377 = vld [vmem:[%s267 + $0x10] sm:$0xff]
      %v378 = vld [vmem:[%s267 + $0x18] sm:$0xff]
      %v379 = vld [vmem:[%s267 + $0x20] sm:$0xff]
      %v380 = vld [vmem:[%s267 + $0x28] sm:$0xff]
      %v381 = vld [vmem:[%s267 + $0x30] sm:$0xff]
      %v382 = vld [vmem:[%s267 + $0x38] sm:$0xff]
      %v383 = vld [vmem:[%s267 + $0x40] sm:$0xff]
      %v384 = vld [vmem:[%s267 + $0x48] sm:$0xff]
      %v385 = vld [vmem:[%s267 + $0x50] sm:$0xff]
      %v386 = vld [vmem:[%s267 + $0x58] sm:$0xff]
      %v387 = vld [vmem:[%s267 + $0x60] sm:$0xff]
      %v388 = vld [vmem:[%s267 + $0x68] sm:$0xff]
      %v389 = vld [vmem:[%s267 + $0x70] sm:$0xff]
      %v390 = vld [vmem:[%s267 + $0x78] sm:$0xff]
      %vm391 = vcmask 64512
      %v393 = vsel %vm391, %v359, 0
      %v396 = vsel %vm391, %v360, 0
      %v399 = vsel %vm391, %v375, 0
      %v402 = vsel %vm391, %v376, 0
      %404 = vmatprep.subr.mxu0 0.0
      %405 = vmatpush1.xpose.msra.mxu0 %v399
      %406 = vmatprep.subr.mxu0 0.0
      %407 = vmatpush1.xpose.msra.mxu0 %v402
      %408 = vmatprep.subr.mxu0 0.0
      %409 = vmatpush1.xpose.msra.mxu0 0.0
      %410 = vmatprep.subr.mxu0 0.0
      %411 = vmatpush1.xpose.msra.mxu0 0.0
      %412 = vmatprep.subr.mxu0 0.0
      %413 = vmatpush1.xpose.msra.mxu0 0.0
      %414 = vmatprep.subr.mxu0 0.0
      %415 = vmatpush1.xpose.msra.mxu0 0.0
      %416 = vmatprep.subr.mxu0 0.0
      %417 = vmatpush1.xpose.msra.mxu0 0.0
      %418 = vmatprep.subr.mxu0 0.0
      %419 = vmatpush1.xpose.msra.mxu0 0.0
      %420 = vmatprep.subr.mxu0 0.0
      %421 = vmatpush1.xpose.msra.mxu0 0.0
      %422 = vmatprep.subr.mxu0 0.0
      %423 = vmatpush1.xpose.msra.mxu0 0.0
      %424 = vmatprep.subr.mxu0 0.0
      %425 = vmatpush1.xpose.msra.mxu0 0.0
      %426 = vmatprep.subr.mxu0 0.0
      %427 = vmatpush1.xpose.msra.mxu0 0.0
      %428 = vmatprep.subr.mxu0 0.0
      %429 = vmatpush1.xpose.msra.mxu0 0.0
      %430 = vmatprep.subr.mxu0 0.0
      %431 = vmatpush1.xpose.msra.mxu0 0.0
      %432 = vmatprep.subr.mxu0 0.0
      %433 = vmatpush1.xpose.msra.mxu0 0.0
      %434 = vmatprep.subr.mxu0 0.0
      %435 = vmatpush1.xpose.msra.mxu0 0.0
      %436 = vmatprep.subr.mxu0 0.0
      %437 = vmatpush1.xpose.msra.mxu0 0.0
      %438 = vmatprep.subr.mxu0 0.0
      %439 = vmatpush1.xpose.msra.mxu0 0.0
      %440 = vmatprep.subr.mxu0 0.0
      %441 = vmatpush1.xpose.msra.mxu0 0.0
      %442 = vmatprep.subr.mxu0 0.0
      %443 = vmatpush1.xpose.msra.mxu0 0.0
      %444 = vmatprep.subr.mxu0 0.0
      %445 = vmatpush1.xpose.msra.mxu0 0.0
      %446 = vmatprep.subr.mxu0 0.0
      %447 = vmatpush1.xpose.msra.mxu0 0.0
      %448 = vmatprep.subr.mxu0 0.0
      %449 = vmatpush1.xpose.msra.mxu0 0.0
      %450 = vmatprep.subr.mxu0 0.0
      %451 = vmatpush1.xpose.msra.mxu0 0.0
      %452 = vmatprep.subr.mxu0 0.0
      %453 = vmatpush1.xpose.msra.mxu0 0.0
      %454 = vmatprep.subr.mxu0 0.0
      %455 = vmatpush1.xpose.msra.mxu0 0.0
      %456 = vmatprep.subr.mxu0 0.0
      %457 = vmatpush1.xpose.msra.mxu0 0.0
      %458 = vmatprep.subr.mxu0 0.0
      %459 = vmatpush1.xpose.msra.mxu0 0.0
      %460 = vmatprep.subr.mxu0 0.0
      %461 = vmatpush1.xpose.msra.mxu0 0.0
      %462 = vmatprep.subr.mxu0 0.0
      %463 = vmatpush1.xpose.msra.mxu0 0.0
      %464 = vmatprep.subr.mxu0 0.0
      %465 = vmatpush1.xpose.msra.mxu0 0.0
      %466 = vmatprep.subr.mxu0 0.0
      %467 = vmatpush1.xpose.msra.mxu0 0.0
      %468 = vmatprep.mubr.f32.mxu0 0.0
      %469 = vmatmul.mubr.f32.gmra.mrb[0].mxu0 %v393
      %v470 = vpop.f32.mrb[0].mxu0
      %v471 = vadd.f32 0.0, %v470
      %v472 = vpop.f32.mrb[0].mxu0
      %473 = vmatprep.mubr.f32.mxu0 0.0
      %474 = vmatmul.mubr.f32.gmra.mrb[0].mxu0 %v396
      %v475 = vpop.f32.mrb[0].mxu0
      %v476 = vadd.f32 0.0, %v475
      %v477 = vpop.f32.mrb[0].mxu0
      %478 = vdwg.mxu0
      %v480 = vsel %vm391, %v361, 0
      %v483 = vsel %vm391, %v362, 0
      %v486 = vsel %vm391, %v377, 0
      %v489 = vsel %vm391, %v378, 0
      %491 = vmatprep.subr.mxu0 0.0
      %492 = vmatpush1.xpose.msra.mxu0 %v486
      %493 = vmatprep.subr.mxu0 0.0
      %494 = vmatpush1.xpose.msra.mxu0 %v489
      %495 = vmatprep.subr.mxu0 0.0
      %496 = vmatpush1.xpose.msra.mxu0 0.0
      %497 = vmatprep.subr.mxu0 0.0
      %498 = vmatpush1.xpose.msra.mxu0 0.0
      %499 = vmatprep.subr.mxu0 0.0
      %500 = vmatpush1.xpose.msra.mxu0 0.0
      %501 = vmatprep.subr.mxu0 0.0
      %502 = vmatpush1.xpose.msra.mxu0 0.0
      %503 = vmatprep.subr.mxu0 0.0
      %504 = vmatpush1.xpose.msra.mxu0 0.0
      %505 = vmatprep.subr.mxu0 0.0
      %506 = vmatpush1.xpose.msra.mxu0 0.0
      %507 = vmatprep.subr.mxu0 0.0
      %508 = vmatpush1.xpose.msra.mxu0 0.0
      %509 = vmatprep.subr.mxu0 0.0
      %510 = vmatpush1.xpose.msra.mxu0 0.0
      %511 = vmatprep.subr.mxu0 0.0
      %512 = vmatpush1.xpose.msra.mxu0 0.0
      %513 = vmatprep.subr.mxu0 0.0
      %514 = vmatpush1.xpose.msra.mxu0 0.0
      %515 = vmatprep.subr.mxu0 0.0
      %516 = vmatpush1.xpose.msra.mxu0 0.0
      %517 = vmatprep.subr.mxu0 0.0
      %518 = vmatpush1.xpose.msra.mxu0 0.0
      %519 = vmatprep.subr.mxu0 0.0
      %520 = vmatpush1.xpose.msra.mxu0 0.0
      %521 = vmatprep.subr.mxu0 0.0
      %522 = vmatpush1.xpose.msra.mxu0 0.0
      %523 = vmatprep.subr.mxu0 0.0
      %524 = vmatpush1.xpose.msra.mxu0 0.0
      %525 = vmatprep.subr.mxu0 0.0
      %526 = vmatpush1.xpose.msra.mxu0 0.0
      %527 = vmatprep.subr.mxu0 0.0
      %528 = vmatpush1.xpose.msra.mxu0 0.0
      %529 = vmatprep.subr.mxu0 0.0
      %530 = vmatpush1.xpose.msra.mxu0 0.0
      %531 = vmatprep.subr.mxu0 0.0
      %532 = vmatpush1.xpose.msra.mxu0 0.0
      %533 = vmatprep.subr.mxu0 0.0
      %534 = vmatpush1.xpose.msra.mxu0 0.0
      %535 = vmatprep.subr.mxu0 0.0
      %536 = vmatpush1.xpose.msra.mxu0 0.0
      %537 = vmatprep.subr.mxu0 0.0
      %538 = vmatpush1.xpose.msra.mxu0 0.0
      %539 = vmatprep.subr.mxu0 0.0
      %540 = vmatpush1.xpose.msra.mxu0 0.0
      %541 = vmatprep.subr.mxu0 0.0
      %542 = vmatpush1.xpose.msra.mxu0 0.0
      %543 = vmatprep.subr.mxu0 0.0
      %544 = vmatpush1.xpose.msra.mxu0 0.0
      %545 = vmatprep.subr.mxu0 0.0
      %546 = vmatpush1.xpose.msra.mxu0 0.0
      %547 = vmatprep.subr.mxu0 0.0
      %548 = vmatpush1.xpose.msra.mxu0 0.0
      %549 = vmatprep.subr.mxu0 0.0
      %550 = vmatpush1.xpose.msra.mxu0 0.0
      %551 = vmatprep.subr.mxu0 0.0
      %552 = vmatpush1.xpose.msra.mxu0 0.0
      %553 = vmatprep.subr.mxu0 0.0
      %554 = vmatpush1.xpose.msra.mxu0 0.0
      %555 = vmatprep.mubr.f32.mxu0 0.0
      %556 = vmatmul.mubr.f32.gmra.mrb[0].mxu0 %v480
      %v557 = vpop.f32.mrb[0].mxu0
      %v558 = vadd.f32 0.0, %v557
      %v559 = vpop.f32.mrb[0].mxu0
      %560 = vmatprep.mubr.f32.mxu0 0.0
      %561 = vmatmul.mubr.f32.gmra.mrb[0].mxu0 %v483
      %v562 = vpop.f32.mrb[0].mxu0
      %v563 = vadd.f32 0.0, %v562
      %v564 = vpop.f32.mrb[0].mxu0
      %565 = vdwg.mxu0
      %v567 = vsel %vm391, %v363, 0
      %v570 = vsel %vm391, %v364, 0
      %v573 = vsel %vm391, %v379, 0
      %v576 = vsel %vm391, %v380, 0
      %578 = vmatprep.subr.mxu0 0.0
      %579 = vmatpush1.xpose.msra.mxu0 %v573
      %580 = vmatprep.subr.mxu0 0.0
      %581 = vmatpush1.xpose.msra.mxu0 %v576
      %582 = vmatprep.subr.mxu0 0.0
      %583 = vmatpush1.xpose.msra.mxu0 0.0
      %584 = vmatprep.subr.mxu0 0.0
      %585 = vmatpush1.xpose.msra.mxu0 0.0
      %586 = vmatprep.subr.mxu0 0.0
      %587 = vmatpush1.xpose.msra.mxu0 0.0
      %588 = vmatprep.subr.mxu0 0.0
      %589 = vmatpush1.xpose.msra.mxu0 0.0
      %590 = vmatprep.subr.mxu0 0.0
      %591 = vmatpush1.xpose.msra.mxu0 0.0
      %592 = vmatprep.subr.mxu0 0.0
      %593 = vmatpush1.xpose.msra.mxu0 0.0
      %594 = vmatprep.subr.mxu0 0.0
      %595 = vmatpush1.xpose.msra.mxu0 0.0
      %596 = vmatprep.subr.mxu0 0.0
      %597 = vmatpush1.xpose.msra.mxu0 0.0
      %598 = vmatprep.subr.mxu0 0.0
      %599 = vmatpush1.xpose.msra.mxu0 0.0
      %600 = vmatprep.subr.mxu0 0.0
      %601 = vmatpush1.xpose.msra.mxu0 0.0
      %602 = vmatprep.subr.mxu0 0.0
      %603 = vmatpush1.xpose.msra.mxu0 0.0
      %604 = vmatprep.subr.mxu0 0.0
      %605 = vmatpush1.xpose.msra.mxu0 0.0
      %606 = vmatprep.subr.mxu0 0.0
      %607 = vmatpush1.xpose.msra.mxu0 0.0
      %608 = vmatprep.subr.mxu0 0.0
      %609 = vmatpush1.xpose.msra.mxu0 0.0
      %610 = vmatprep.subr.mxu0 0.0
      %611 = vmatpush1.xpose.msra.mxu0 0.0
      %612 = vmatprep.subr.mxu0 0.0
      %613 = vmatpush1.xpose.msra.mxu0 0.0
      %614 = vmatprep.subr.mxu0 0.0
      %615 = vmatpush1.xpose.msra.mxu0 0.0
      %616 = vmatprep.subr.mxu0 0.0
      %617 = vmatpush1.xpose.msra.mxu0 0.0
      %618 = vmatprep.subr.mxu0 0.0
      %619 = vmatpush1.xpose.msra.mxu0 0.0
      %620 = vmatprep.subr.mxu0 0.0
      %621 = vmatpush1.xpose.msra.mxu0 0.0
      %622 = vmatprep.subr.mxu0 0.0
      %623 = vmatpush1.xpose.msra.mxu0 0.0
      %624 = vmatprep.subr.mxu0 0.0
      %625 = vmatpush1.xpose.msra.mxu0 0.0
      %626 = vmatprep.subr.mxu0 0.0
      %627 = vmatpush1.xpose.msra.mxu0 0.0
      %628 = vmatprep.subr.mxu0 0.0
      %629 = vmatpush1.xpose.msra.mxu0 0.0
      %630 = vmatprep.subr.mxu0 0.0
      %631 = vmatpush1.xpose.msra.mxu0 0.0
      %632 = vmatprep.subr.mxu0 0.0
      %633 = vmatpush1.xpose.msra.mxu0 0.0
      %634 = vmatprep.subr.mxu0 0.0
      %635 = vmatpush1.xpose.msra.mxu0 0.0
      %636 = vmatprep.subr.mxu0 0.0
      %637 = vmatpush1.xpose.msra.mxu0 0.0
      %638 = vmatprep.subr.mxu0 0.0
      %639 = vmatpush1.xpose.msra.mxu0 0.0
      %640 = vmatprep.subr.mxu0 0.0
      %641 = vmatpush1.xpose.msra.mxu0 0.0
      %642 = vmatprep.mubr.f32.mxu0 0.0
      %643 = vmatmul.mubr.f32.gmra.mrb[0].mxu0 %v567
      %v644 = vpop.f32.mrb[0].mxu0
      %v645 = vadd.f32 0.0, %v644
      %v646 = vpop.f32.mrb[0].mxu0
      %647 = vmatprep.mubr.f32.mxu0 0.0
      %648 = vmatmul.mubr.f32.gmra.mrb[0].mxu0 %v570
      %v649 = vpop.f32.mrb[0].mxu0
      %v650 = vadd.f32 0.0, %v649
      %v651 = vpop.f32.mrb[0].mxu0
      %652 = vdwg.mxu0
      %v654 = vsel %vm391, %v365, 0
      %v657 = vsel %vm391, %v366, 0
      %v660 = vsel %vm391, %v381, 0
      %v663 = vsel %vm391, %v382, 0
      %665 = vmatprep.subr.mxu0 0.0
      %666 = vmatpush1.xpose.msra.mxu0 %v660
      %667 = vmatprep.subr.mxu0 0.0
      %668 = vmatpush1.xpose.msra.mxu0 %v663
      %669 = vmatprep.subr.mxu0 0.0
      %670 = vmatpush1.xpose.msra.mxu0 0.0
      %671 = vmatprep.subr.mxu0 0.0
      %672 = vmatpush1.xpose.msra.mxu0 0.0
      %673 = vmatprep.subr.mxu0 0.0
      %674 = vmatpush1.xpose.msra.mxu0 0.0
      %675 = vmatprep.subr.mxu0 0.0
      %676 = vmatpush1.xpose.msra.mxu0 0.0
      %677 = vmatprep.subr.mxu0 0.0
      %678 = vmatpush1.xpose.msra.mxu0 0.0
      %679 = vmatprep.subr.mxu0 0.0
      %680 = vmatpush1.xpose.msra.mxu0 0.0
      %681 = vmatprep.subr.mxu0 0.0
      %682 = vmatpush1.xpose.msra.mxu0 0.0
      %683 = vmatprep.subr.mxu0 0.0
      %684 = vmatpush1.xpose.msra.mxu0 0.0
      %685 = vmatprep.subr.mxu0 0.0
      %686 = vmatpush1.xpose.msra.mxu0 0.0
      %687 = vmatprep.subr.mxu0 0.0
      %688 = vmatpush1.xpose.msra.mxu0 0.0
      %689 = vmatprep.subr.mxu0 0.0
      %690 = vmatpush1.xpose.msra.mxu0 0.0
      %691 = vmatprep.subr.mxu0 0.0
      %692 = vmatpush1.xpose.msra.mxu0 0.0
      %693 = vmatprep.subr.mxu0 0.0
      %694 = vmatpush1.xpose.msra.mxu0 0.0
      %695 = vmatprep.subr.mxu0 0.0
      %696 = vmatpush1.xpose.msra.mxu0 0.0
      %697 = vmatprep.subr.mxu0 0.0
      %698 = vmatpush1.xpose.msra.mxu0 0.0
      %699 = vmatprep.subr.mxu0 0.0
      %700 = vmatpush1.xpose.msra.mxu0 0.0
      %701 = vmatprep.subr.mxu0 0.0
      %702 = vmatpush1.xpose.msra.mxu0 0.0
      %703 = vmatprep.subr.mxu0 0.0
      %704 = vmatpush1.xpose.msra.mxu0 0.0
      %705 = vmatprep.subr.mxu0 0.0
      %706 = vmatpush1.xpose.msra.mxu0 0.0
      %707 = vmatprep.subr.mxu0 0.0
      %708 = vmatpush1.xpose.msra.mxu0 0.0
      %709 = vmatprep.subr.mxu0 0.0
      %710 = vmatpush1.xpose.msra.mxu0 0.0
      %711 = vmatprep.subr.mxu0 0.0
      %712 = vmatpush1.xpose.msra.mxu0 0.0
      %713 = vmatprep.subr.mxu0 0.0
      %714 = vmatpush1.xpose.msra.mxu0 0.0
      %715 = vmatprep.subr.mxu0 0.0
      %716 = vmatpush1.xpose.msra.mxu0 0.0
      %717 = vmatprep.subr.mxu0 0.0
      %718 = vmatpush1.xpose.msra.mxu0 0.0
      %719 = vmatprep.subr.mxu0 0.0
      %720 = vmatpush1.xpose.msra.mxu0 0.0
      %721 = vmatprep.subr.mxu0 0.0
      %722 = vmatpush1.xpose.msra.mxu0 0.0
      %723 = vmatprep.subr.mxu0 0.0
      %724 = vmatpush1.xpose.msra.mxu0 0.0
      %725 = vmatprep.subr.mxu0 0.0
      %726 = vmatpush1.xpose.msra.mxu0 0.0
      %727 = vmatprep.subr.mxu0 0.0
      %728 = vmatpush1.xpose.msra.mxu0 0.0
      %729 = vmatprep.mubr.f32.mxu0 0.0
      %730 = vmatmul.mubr.f32.gmra.mrb[0].mxu0 %v654
      %v731 = vpop.f32.mrb[0].mxu0
      %v732 = vadd.f32 0.0, %v731
      %v733 = vpop.f32.mrb[0].mxu0
      %734 = vmatprep.mubr.f32.mxu0 0.0
      %735 = vmatmul.mubr.f32.gmra.mrb[0].mxu0 %v657
      %v736 = vpop.f32.mrb[0].mxu0
      %v737 = vadd.f32 0.0, %v736
      %v738 = vpop.f32.mrb[0].mxu0
      %739 = vdwg.mxu0
      %v741 = vsel %vm391, %v367, 0
      %v744 = vsel %vm391, %v368, 0
      %v747 = vsel %vm391, %v383, 0
      %v750 = vsel %vm391, %v384, 0
      %752 = vmatprep.subr.mxu0 0.0
      %753 = vmatpush1.xpose.msra.mxu0 %v747
      %754 = vmatprep.subr.mxu0 0.0
      %755 = vmatpush1.xpose.msra.mxu0 %v750
      %756 = vmatprep.subr.mxu0 0.0
      %757 = vmatpush1.xpose.msra.mxu0 0.0
      %758 = vmatprep.subr.mxu0 0.0
      %759 = vmatpush1.xpose.msra.mxu0 0.0
      %760 = vmatprep.subr.mxu0 0.0
      %761 = vmatpush1.xpose.msra.mxu0 0.0
      %762 = vmatprep.subr.mxu0 0.0
      %763 = vmatpush1.xpose.msra.mxu0 0.0
      %764 = vmatprep.subr.mxu0 0.0
      %765 = vmatpush1.xpose.msra.mxu0 0.0
      %766 = vmatprep.subr.mxu0 0.0
      %767 = vmatpush1.xpose.msra.mxu0 0.0
      %768 = vmatprep.subr.mxu0 0.0
      %769 = vmatpush1.xpose.msra.mxu0 0.0
      %770 = vmatprep.subr.mxu0 0.0
      %771 = vmatpush1.xpose.msra.mxu0 0.0
      %772 = vmatprep.subr.mxu0 0.0
      %773 = vmatpush1.xpose.msra.mxu0 0.0
      %774 = vmatprep.subr.mxu0 0.0
      %775 = vmatpush1.xpose.msra.mxu0 0.0
      %776 = vmatprep.subr.mxu0 0.0
      %777 = vmatpush1.xpose.msra.mxu0 0.0
      %778 = vmatprep.subr.mxu0 0.0
      %779 = vmatpush1.xpose.msra.mxu0 0.0
      %780 = vmatprep.subr.mxu0 0.0
      %781 = vmatpush1.xpose.msra.mxu0 0.0
      %782 = vmatprep.subr.mxu0 0.0
      %783 = vmatpush1.xpose.msra.mxu0 0.0
      %784 = vmatprep.subr.mxu0 0.0
      %785 = vmatpush1.xpose.msra.mxu0 0.0
      %786 = vmatprep.subr.mxu0 0.0
      %787 = vmatpush1.xpose.msra.mxu0 0.0
      %788 = vmatprep.subr.mxu0 0.0
      %789 = vmatpush1.xpose.msra.mxu0 0.0
      %790 = vmatprep.subr.mxu0 0.0
      %791 = vmatpush1.xpose.msra.mxu0 0.0
      %792 = vmatprep.subr.mxu0 0.0
      %793 = vmatpush1.xpose.msra.mxu0 0.0
      %794 = vmatprep.subr.mxu0 0.0
      %795 = vmatpush1.xpose.msra.mxu0 0.0
      %796 = vmatprep.subr.mxu0 0.0
      %797 = vmatpush1.xpose.msra.mxu0 0.0
      %798 = vmatprep.subr.mxu0 0.0
      %799 = vmatpush1.xpose.msra.mxu0 0.0
      %800 = vmatprep.subr.mxu0 0.0
      %801 = vmatpush1.xpose.msra.mxu0 0.0
      %802 = vmatprep.subr.mxu0 0.0
      %803 = vmatpush1.xpose.msra.mxu0 0.0
      %804 = vmatprep.subr.mxu0 0.0
      %805 = vmatpush1.xpose.msra.mxu0 0.0
      %806 = vmatprep.subr.mxu0 0.0
      %807 = vmatpush1.xpose.msra.mxu0 0.0
      %808 = vmatprep.subr.mxu0 0.0
      %809 = vmatpush1.xpose.msra.mxu0 0.0
      %810 = vmatprep.subr.mxu0 0.0
      %811 = vmatpush1.xpose.msra.mxu0 0.0
      %812 = vmatprep.subr.mxu0 0.0
      %813 = vmatpush1.xpose.msra.mxu0 0.0
      %814 = vmatprep.subr.mxu0 0.0
      %815 = vmatpush1.xpose.msra.mxu0 0.0
      %816 = vmatprep.mubr.f32.mxu0 0.0
      %817 = vmatmul.mubr.f32.gmra.mrb[0].mxu0 %v741
      %v818 = vpop.f32.mrb[0].mxu0
      %v819 = vadd.f32 0.0, %v818
      %v820 = vpop.f32.mrb[0].mxu0
      %821 = vmatprep.mubr.f32.mxu0 0.0
      %822 = vmatmul.mubr.f32.gmra.mrb[0].mxu0 %v744
      %v823 = vpop.f32.mrb[0].mxu0
      %v824 = vadd.f32 0.0, %v823
      %v825 = vpop.f32.mrb[0].mxu0
      %826 = vdwg.mxu0
      %v828 = vsel %vm391, %v369, 0
      %v831 = vsel %vm391, %v370, 0
      %v834 = vsel %vm391, %v385, 0
      %v837 = vsel %vm391, %v386, 0
      %839 = vmatprep.subr.mxu0 0.0
      %840 = vmatpush1.xpose.msra.mxu0 %v834
      %841 = vmatprep.subr.mxu0 0.0
      %842 = vmatpush1.xpose.msra.mxu0 %v837
      %843 = vmatprep.subr.mxu0 0.0
      %844 = vmatpush1.xpose.msra.mxu0 0.0
      %845 = vmatprep.subr.mxu0 0.0
      %846 = vmatpush1.xpose.msra.mxu0 0.0
      %847 = vmatprep.subr.mxu0 0.0
      %848 = vmatpush1.xpose.msra.mxu0 0.0
      %849 = vmatprep.subr.mxu0 0.0
      %850 = vmatpush1.xpose.msra.mxu0 0.0
      %851 = vmatprep.subr.mxu0 0.0
      %852 = vmatpush1.xpose.msra.mxu0 0.0
      %853 = vmatprep.subr.mxu0 0.0
      %854 = vmatpush1.xpose.msra.mxu0 0.0
      %855 = vmatprep.subr.mxu0 0.0
      %856 = vmatpush1.xpose.msra.mxu0 0.0
      %857 = vmatprep.subr.mxu0 0.0
      %858 = vmatpush1.xpose.msra.mxu0 0.0
      %859 = vmatprep.subr.mxu0 0.0
      %860 = vmatpush1.xpose.msra.mxu0 0.0
      %861 = vmatprep.subr.mxu0 0.0
      %862 = vmatpush1.xpose.msra.mxu0 0.0
      %863 = vmatprep.subr.mxu0 0.0
      %864 = vmatpush1.xpose.msra.mxu0 0.0
      %865 = vmatprep.subr.mxu0 0.0
      %866 = vmatpush1.xpose.msra.mxu0 0.0
      %867 = vmatprep.subr.mxu0 0.0
      %868 = vmatpush1.xpose.msra.mxu0 0.0
      %869 = vmatprep.subr.mxu0 0.0
      %870 = vmatpush1.xpose.msra.mxu0 0.0
      %871 = vmatprep.subr.mxu0 0.0
      %872 = vmatpush1.xpose.msra.mxu0 0.0
      %873 = vmatprep.subr.mxu0 0.0
      %874 = vmatpush1.xpose.msra.mxu0 0.0
      %875 = vmatprep.subr.mxu0 0.0
      %876 = vmatpush1.xpose.msra.mxu0 0.0
      %877 = vmatprep.subr.mxu0 0.0
      %878 = vmatpush1.xpose.msra.mxu0 0.0
      %879 = vmatprep.subr.mxu0 0.0
      %880 = vmatpush1.xpose.msra.mxu0 0.0
      %881 = vmatprep.subr.mxu0 0.0
      %882 = vmatpush1.xpose.msra.mxu0 0.0
      %883 = vmatprep.subr.mxu0 0.0
      %884 = vmatpush1.xpose.msra.mxu0 0.0
      %885 = vmatprep.subr.mxu0 0.0
      %886 = vmatpush1.xpose.msra.mxu0 0.0
      %887 = vmatprep.subr.mxu0 0.0
      %888 = vmatpush1.xpose.msra.mxu0 0.0
      %889 = vmatprep.subr.mxu0 0.0
      %890 = vmatpush1.xpose.msra.mxu0 0.0
      %891 = vmatprep.subr.mxu0 0.0
      %892 = vmatpush1.xpose.msra.mxu0 0.0
      %893 = vmatprep.subr.mxu0 0.0
      %894 = vmatpush1.xpose.msra.mxu0 0.0
      %895 = vmatprep.subr.mxu0 0.0
      %896 = vmatpush1.xpose.msra.mxu0 0.0
      %897 = vmatprep.subr.mxu0 0.0
      %898 = vmatpush1.xpose.msra.mxu0 0.0
      %899 = vmatprep.subr.mxu0 0.0
      %900 = vmatpush1.xpose.msra.mxu0 0.0
      %901 = vmatprep.subr.mxu0 0.0
      %902 = vmatpush1.xpose.msra.mxu0 0.0
      %903 = vmatprep.mubr.f32.mxu0 0.0
      %904 = vmatmul.mubr.f32.gmra.mrb[0].mxu0 %v828
      %v905 = vpop.f32.mrb[0].mxu0
      %v906 = vadd.f32 0.0, %v905
      %v907 = vpop.f32.mrb[0].mxu0
      %908 = vmatprep.mubr.f32.mxu0 0.0
      %909 = vmatmul.mubr.f32.gmra.mrb[0].mxu0 %v831
      %v910 = vpop.f32.mrb[0].mxu0
      %v911 = vadd.f32 0.0, %v910
      %v912 = vpop.f32.mrb[0].mxu0
      %913 = vdwg.mxu0
      %v915 = vsel %vm391, %v371, 0
      %v918 = vsel %vm391, %v372, 0
      %v921 = vsel %vm391, %v387, 0
      %v924 = vsel %vm391, %v388, 0
      %926 = vmatprep.subr.mxu0 0.0
      %927 = vmatpush1.xpose.msra.mxu0 %v921
      %928 = vmatprep.subr.mxu0 0.0
      %929 = vmatpush1.xpose.msra.mxu0 %v924
      %930 = vmatprep.subr.mxu0 0.0
      %931 = vmatpush1.xpose.msra.mxu0 0.0
      %932 = vmatprep.subr.mxu0 0.0
      %933 = vmatpush1.xpose.msra.mxu0 0.0
      %934 = vmatprep.subr.mxu0 0.0
      %935 = vmatpush1.xpose.msra.mxu0 0.0
      %936 = vmatprep.subr.mxu0 0.0
      %937 = vmatpush1.xpose.msra.mxu0 0.0
      %938 = vmatprep.subr.mxu0 0.0
      %939 = vmatpush1.xpose.msra.mxu0 0.0
      %940 = vmatprep.subr.mxu0 0.0
      %941 = vmatpush1.xpose.msra.mxu0 0.0
      %942 = vmatprep.subr.mxu0 0.0
      %943 = vmatpush1.xpose.msra.mxu0 0.0
      %944 = vmatprep.subr.mxu0 0.0
      %945 = vmatpush1.xpose.msra.mxu0 0.0
      %946 = vmatprep.subr.mxu0 0.0
      %947 = vmatpush1.xpose.msra.mxu0 0.0
      %948 = vmatprep.subr.mxu0 0.0
      %949 = vmatpush1.xpose.msra.mxu0 0.0
      %950 = vmatprep.subr.mxu0 0.0
      %951 = vmatpush1.xpose.msra.mxu0 0.0
      %952 = vmatprep.subr.mxu0 0.0
      %953 = vmatpush1.xpose.msra.mxu0 0.0
      %954 = vmatprep.subr.mxu0 0.0
      %955 = vmatpush1.xpose.msra.mxu0 0.0
      %956 = vmatprep.subr.mxu0 0.0
      %957 = vmatpush1.xpose.msra.mxu0 0.0
      %958 = vmatprep.subr.mxu0 0.0
      %959 = vmatpush1.xpose.msra.mxu0 0.0
      %960 = vmatprep.subr.mxu0 0.0
      %961 = vmatpush1.xpose.msra.mxu0 0.0
      %962 = vmatprep.subr.mxu0 0.0
      %963 = vmatpush1.xpose.msra.mxu0 0.0
      %964 = vmatprep.subr.mxu0 0.0
      %965 = vmatpush1.xpose.msra.mxu0 0.0
      %966 = vmatprep.subr.mxu0 0.0
      %967 = vmatpush1.xpose.msra.mxu0 0.0
      %968 = vmatprep.subr.mxu0 0.0
      %969 = vmatpush1.xpose.msra.mxu0 0.0
      %970 = vmatprep.subr.mxu0 0.0
      %971 = vmatpush1.xpose.msra.mxu0 0.0
      %972 = vmatprep.subr.mxu0 0.0
      %973 = vmatpush1.xpose.msra.mxu0 0.0
      %974 = vmatprep.subr.mxu0 0.0
      %975 = vmatpush1.xpose.msra.mxu0 0.0
      %976 = vmatprep.subr.mxu0 0.0
      %977 = vmatpush1.xpose.msra.mxu0 0.0
      %978 = vmatprep.subr.mxu0 0.0
      %979 = vmatpush1.xpose.msra.mxu0 0.0
      %980 = vmatprep.subr.mxu0 0.0
      %981 = vmatpush1.xpose.msra.mxu0 0.0
      %982 = vmatprep.subr.mxu0 0.0
      %983 = vmatpush1.xpose.msra.mxu0 0.0
      %984 = vmatprep.subr.mxu0 0.0
      %985 = vmatpush1.xpose.msra.mxu0 0.0
      %986 = vmatprep.subr.mxu0 0.0
      %987 = vmatpush1.xpose.msra.mxu0 0.0
      %988 = vmatprep.subr.mxu0 0.0
      %989 = vmatpush1.xpose.msra.mxu0 0.0
      %990 = vmatprep.mubr.f32.mxu0 0.0
      %991 = vmatmul.mubr.f32.gmra.mrb[0].mxu0 %v915
      %v992 = vpop.f32.mrb[0].mxu0
      %v993 = vadd.f32 0.0, %v992
      %v994 = vpop.f32.mrb[0].mxu0
      %995 = vmatprep.mubr.f32.mxu0 0.0
      %996 = vmatmul.mubr.f32.gmra.mrb[0].mxu0 %v918
      %v997 = vpop.f32.mrb[0].mxu0
      %v998 = vadd.f32 0.0, %v997
      %v999 = vpop.f32.mrb[0].mxu0
      %1000 = vdwg.mxu0
      %v1002 = vsel %vm391, %v373, 0
      %v1005 = vsel %vm391, %v374, 0
      %v1008 = vsel %vm391, %v389, 0
      %v1011 = vsel %vm391, %v390, 0
      %1013 = vmatprep.subr.mxu0 0.0
      %1014 = vmatpush1.xpose.msra.mxu0 %v1008
      %1015 = vmatprep.subr.mxu0 0.0
      %1016 = vmatpush1.xpose.msra.mxu0 %v1011
      %1017 = vmatprep.subr.mxu0 0.0
      %1018 = vmatpush1.xpose.msra.mxu0 0.0
      %1019 = vmatprep.subr.mxu0 0.0
      %1020 = vmatpush1.xpose.msra.mxu0 0.0
      %1021 = vmatprep.subr.mxu0 0.0
      %1022 = vmatpush1.xpose.msra.mxu0 0.0
      %1023 = vmatprep.subr.mxu0 0.0
      %1024 = vmatpush1.xpose.msra.mxu0 0.0
      %1025 = vmatprep.subr.mxu0 0.0
      %1026 = vmatpush1.xpose.msra.mxu0 0.0
      %1027 = vmatprep.subr.mxu0 0.0
      %1028 = vmatpush1.xpose.msra.mxu0 0.0
      %1029 = vmatprep.subr.mxu0 0.0
      %1030 = vmatpush1.xpose.msra.mxu0 0.0
      %1031 = vmatprep.subr.mxu0 0.0
      %1032 = vmatpush1.xpose.msra.mxu0 0.0
      %1033 = vmatprep.subr.mxu0 0.0
      %1034 = vmatpush1.xpose.msra.mxu0 0.0
      %1035 = vmatprep.subr.mxu0 0.0
      %1036 = vmatpush1.xpose.msra.mxu0 0.0
      %1037 = vmatprep.subr.mxu0 0.0
      %1038 = vmatpush1.xpose.msra.mxu0 0.0
      %1039 = vmatprep.subr.mxu0 0.0
      %1040 = vmatpush1.xpose.msra.mxu0 0.0
      %1041 = vmatprep.subr.mxu0 0.0
      %1042 = vmatpush1.xpose.msra.mxu0 0.0
      %1043 = vmatprep.subr.mxu0 0.0
      %1044 = vmatpush1.xpose.msra.mxu0 0.0
      %1045 = vmatprep.subr.mxu0 0.0
      %1046 = vmatpush1.xpose.msra.mxu0 0.0
      %1047 = vmatprep.subr.mxu0 0.0
      %1048 = vmatpush1.xpose.msra.mxu0 0.0
      %1049 = vmatprep.subr.mxu0 0.0
      %1050 = vmatpush1.xpose.msra.mxu0 0.0
      %1051 = vmatprep.subr.mxu0 0.0
      %1052 = vmatpush1.xpose.msra.mxu0 0.0
      %1053 = vmatprep.subr.mxu0 0.0
      %1054 = vmatpush1.xpose.msra.mxu0 0.0
      %1055 = vmatprep.subr.mxu0 0.0
      %1056 = vmatpush1.xpose.msra.mxu0 0.0
      %1057 = vmatprep.subr.mxu0 0.0
      %1058 = vmatpush1.xpose.msra.mxu0 0.0
      %1059 = vmatprep.subr.mxu0 0.0
      %1060 = vmatpush1.xpose.msra.mxu0 0.0
      %1061 = vmatprep.subr.mxu0 0.0
      %1062 = vmatpush1.xpose.msra.mxu0 0.0
      %1063 = vmatprep.subr.mxu0 0.0
      %1064 = vmatpush1.xpose.msra.mxu0 0.0
      %1065 = vmatprep.subr.mxu0 0.0
      %1066 = vmatpush1.xpose.msra.mxu0 0.0
      %1067 = vmatprep.subr.mxu0 0.0
      %1068 = vmatpush1.xpose.msra.mxu0 0.0
      %1069 = vmatprep.subr.mxu0 0.0
      %1070 = vmatpush1.xpose.msra.mxu0 0.0
      %1071 = vmatprep.subr.mxu0 0.0
      %1072 = vmatpush1.xpose.msra.mxu0 0.0
      %1073 = vmatprep.subr.mxu0 0.0
      %1074 = vmatpush1.xpose.msra.mxu0 0.0
      %1075 = vmatprep.subr.mxu0 0.0
      %1076 = vmatpush1.xpose.msra.mxu0 0.0
      %1077 = vmatprep.mubr.f32.mxu0 0.0
      %1078 = vmatmul.mubr.f32.gmra.mrb[0].mxu0 %v1002
      %v1079 = vpop.f32.mrb[0].mxu0
      %v1080 = vadd.f32 0.0, %v1079
      %v1081 = vpop.f32.mrb[0].mxu0
      %1082 = vmatprep.mubr.f32.mxu0 0.0
      %1083 = vmatmul.mubr.f32.gmra.mrb[0].mxu0 %v1005
      %v1084 = vpop.f32.mrb[0].mxu0
      %v1085 = vadd.f32 0.0, %v1084
      %v1086 = vpop.f32.mrb[0].mxu0
      %1087 = vdwg.mxu0
      %v1088 = vld [vmem:[#allocation2] sm:$0xff]
      %v1089 = vld [vmem:[#allocation2 + $0x8] sm:$0xff]
      %v1090 = vld [vmem:[#allocation2 + $0x10] sm:$0xff]
      %v1091 = vld [vmem:[#allocation2 + $0x18] sm:$0xff]
      %v1092 = vld [vmem:[#allocation2 + $0x20] sm:$0xff]
      %v1093 = vld [vmem:[#allocation2 + $0x28] sm:$0xff]
      %v1094 = vld [vmem:[#allocation2 + $0x30] sm:$0xff]
      %v1095 = vld [vmem:[#allocation2 + $0x38] sm:$0xff]
      %v1096 = vld [vmem:[#allocation2 + $0x40] sm:$0xff]
      %v1097 = vld [vmem:[#allocation2 + $0x48] sm:$0xff]
      %v1098 = vld [vmem:[#allocation2 + $0x50] sm:$0xff]
      %v1099 = vld [vmem:[#allocation2 + $0x58] sm:$0xff]
      %v1100 = vld [vmem:[#allocation2 + $0x60] sm:$0xff]
      %v1101 = vld [vmem:[#allocation2 + $0x68] sm:$0xff]
      %v1102 = vld [vmem:[#allocation2 + $0x70] sm:$0xff]
      %v1103 = vld [vmem:[#allocation2 + $0x78] sm:$0xff]
      %vm1104 = vcmask 130048
      %v1105 = vsel %vm1104, %v471, -inf
      %1106 = vmax.xlane.f32.xlu0 %v1105
      %v1107 = vpop.xlane.xlu0 %1106
      %v1108 = vsel %vm1104, %v476, -inf
      %1109 = vmax.xlane.f32.xlu0 %v1108
      %v1110 = vpop.xlane.xlu0 %1109
      %v1111 = vsel %vm1104, %v558, -inf
      %1112 = vmax.xlane.f32.xlu0 %v1111
      %v1113 = vpop.xlane.xlu0 %1112
      %v1114 = vsel %vm1104, %v563, -inf
      %1115 = vmax.xlane.f32.xlu0 %v1114
      %v1116 = vpop.xlane.xlu0 %1115
      %v1117 = vsel %vm1104, %v645, -inf
      %1118 = vmax.xlane.f32.xlu0 %v1117
      %v1119 = vpop.xlane.xlu0 %1118
      %v1120 = vsel %vm1104, %v650, -inf
      %1121 = vmax.xlane.f32.xlu0 %v1120
      %v1122 = vpop.xlane.xlu0 %1121
      %v1123 = vsel %vm1104, %v732, -inf
      %1124 = vmax.xlane.f32.xlu0 %v1123
      %v1125 = vpop.xlane.xlu0 %1124
      %v1126 = vsel %vm1104, %v737, -inf
      %1127 = vmax.xlane.f32.xlu0 %v1126
      %v1128 = vpop.xlane.xlu0 %1127
      %v1129 = vsel %vm1104, %v819, -inf
      %1130 = vmax.xlane.f32.xlu0 %v1129
      %v1131 = vpop.xlane.xlu0 %1130
      %v1132 = vsel %vm1104, %v824, -inf
      %1133 = vmax.xlane.f32.xlu0 %v1132
      %v1134 = vpop.xlane.xlu0 %1133
      %v1135 = vsel %vm1104, %v906, -inf
      %1136 = vmax.xlane.f32.xlu0 %v1135
      %v1137 = vpop.xlane.xlu0 %1136
      %v1138 = vsel %vm1104, %v911, -inf
      %1139 = vmax.xlane.f32.xlu0 %v1138
      %v1140 = vpop.xlane.xlu0 %1139
      %v1141 = vsel %vm1104, %v993, -inf
      %1142 = vmax.xlane.f32.xlu0 %v1141
      %v1143 = vpop.xlane.xlu0 %1142
      %v1144 = vsel %vm1104, %v998, -inf
      %1145 = vmax.xlane.f32.xlu0 %v1144
      %v1146 = vpop.xlane.xlu0 %1145
      %v1147 = vsel %vm1104, %v1080, -inf
      %1148 = vmax.xlane.f32.xlu0 %v1147
      %v1149 = vpop.xlane.xlu0 %1148
      %v1150 = vsel %vm1104, %v1085, -inf
      %1151 = vmax.xlane.f32.xlu0 %v1150
      %v1152 = vpop.xlane.xlu0 %1151
      %v1153 = vmax.f32 %v1088, %v1107
      %v1154 = vmax.f32 %v1089, %v1110
      %v1155 = vmax.f32 %v1090, %v1113
      %v1156 = vmax.f32 %v1091, %v1116
      %v1157 = vmax.f32 %v1092, %v1119
      %v1158 = vmax.f32 %v1093, %v1122
      %v1159 = vmax.f32 %v1094, %v1125
      %v1160 = vmax.f32 %v1095, %v1128
      %v1161 = vmax.f32 %v1096, %v1131
      %v1162 = vmax.f32 %v1097, %v1134
      %v1163 = vmax.f32 %v1098, %v1137
      %v1164 = vmax.f32 %v1099, %v1140
      %v1165 = vmax.f32 %v1100, %v1143
      %v1166 = vmax.f32 %v1101, %v1146
      %v1167 = vmax.f32 %v1102, %v1149
      %v1168 = vmax.f32 %v1103, %v1152
      %v1169 = vsub.f32 %v1088, %v1153
      %v1170 = vsub.f32 %v1089, %v1154
      %v1171 = vsub.f32 %v1090, %v1155
      %v1172 = vsub.f32 %v1091, %v1156
      %v1173 = vsub.f32 %v1092, %v1157
      %v1174 = vsub.f32 %v1093, %v1158
      %v1175 = vsub.f32 %v1094, %v1159
      %v1176 = vsub.f32 %v1095, %v1160
      %v1177 = vsub.f32 %v1096, %v1161
      %v1178 = vsub.f32 %v1097, %v1162
      %v1179 = vsub.f32 %v1098, %v1163
      %v1180 = vsub.f32 %v1099, %v1164
      %v1181 = vsub.f32 %v1100, %v1165
      %v1182 = vsub.f32 %v1101, %v1166
      %v1183 = vsub.f32 %v1102, %v1167
      %v1184 = vsub.f32 %v1103, %v1168
      %v1185 = vmul.f32 %v1169, 1.442695
      %v1186 = vpow.pop %v1185
      %v1187 = vmul.f32 %v1170, 1.442695
      %v1188 = vpow.pop %v1187
      %v1189 = vmul.f32 %v1171, 1.442695
      %v1190 = vpow.pop %v1189
      %v1191 = vmul.f32 %v1172, 1.442695
      %v1192 = vpow.pop %v1191
      %v1193 = vmul.f32 %v1173, 1.442695
      %v1194 = vpow.pop %v1193
      %v1195 = vmul.f32 %v1174, 1.442695
      %v1196 = vpow.pop %v1195
      %v1197 = vmul.f32 %v1175, 1.442695
      %v1198 = vpow.pop %v1197
      %v1199 = vmul.f32 %v1176, 1.442695
      %v1200 = vpow.pop %v1199
      %v1201 = vmul.f32 %v1177, 1.442695
      %v1202 = vpow.pop %v1201
      %v1203 = vmul.f32 %v1178, 1.442695
      %v1204 = vpow.pop %v1203
      %v1205 = vmul.f32 %v1179, 1.442695
      %v1206 = vpow.pop %v1205
      %v1207 = vmul.f32 %v1180, 1.442695
      %v1208 = vpow.pop %v1207
      %v1209 = vmul.f32 %v1181, 1.442695
      %v1210 = vpow.pop %v1209
      %v1211 = vmul.f32 %v1182, 1.442695
      %v1212 = vpow.pop %v1211
      %v1213 = vmul.f32 %v1183, 1.442695
      %v1214 = vpow.pop %v1213
      %v1215 = vmul.f32 %v1184, 1.442695
      %v1216 = vpow.pop %v1215
      %1218 = vset.pattern.permute.xlu0 0
      %1219 = vperm.xlu0 %1218, %v1153
      %v1220 = vpop.permute.xlu0 %1219
      %1223 = vset.pattern.permute.xlu0 0
      %1224 = vperm.xlu0 %1223, %v1154
      %v1225 = vpop.permute.xlu0 %1224
      %1228 = vset.pattern.permute.xlu0 0
      %1229 = vperm.xlu0 %1228, %v1155
      %v1230 = vpop.permute.xlu0 %1229
      %1233 = vset.pattern.permute.xlu0 0
      %1234 = vperm.xlu0 %1233, %v1156
      %v1235 = vpop.permute.xlu0 %1234
      %1238 = vset.pattern.permute.xlu0 0
      %1239 = vperm.xlu0 %1238, %v1157
      %v1240 = vpop.permute.xlu0 %1239
      %1243 = vset.pattern.permute.xlu0 0
      %1244 = vperm.xlu0 %1243, %v1158
      %v1245 = vpop.permute.xlu0 %1244
      %1248 = vset.pattern.permute.xlu0 0
      %1249 = vperm.xlu0 %1248, %v1159
      %v1250 = vpop.permute.xlu0 %1249
      %1253 = vset.pattern.permute.xlu0 0
      %1254 = vperm.xlu0 %1253, %v1160
      %v1255 = vpop.permute.xlu0 %1254
      %1258 = vset.pattern.permute.xlu0 0
      %1259 = vperm.xlu0 %1258, %v1161
      %v1260 = vpop.permute.xlu0 %1259
      %1263 = vset.pattern.permute.xlu0 0
      %1264 = vperm.xlu0 %1263, %v1162
      %v1265 = vpop.permute.xlu0 %1264
      %1268 = vset.pattern.permute.xlu0 0
      %1269 = vperm.xlu0 %1268, %v1163
      %v1270 = vpop.permute.xlu0 %1269
      %1273 = vset.pattern.permute.xlu0 0
      %1274 = vperm.xlu0 %1273, %v1164
      %v1275 = vpop.permute.xlu0 %1274
      %1278 = vset.pattern.permute.xlu0 0
      %1279 = vperm.xlu0 %1278, %v1165
      %v1280 = vpop.permute.xlu0 %1279
      %1283 = vset.pattern.permute.xlu0 0
      %1284 = vperm.xlu0 %1283, %v1166
      %v1285 = vpop.permute.xlu0 %1284
      %1288 = vset.pattern.permute.xlu0 0
      %1289 = vperm.xlu0 %1288, %v1167
      %v1290 = vpop.permute.xlu0 %1289
      %1293 = vset.pattern.permute.xlu0 0
      %1294 = vperm.xlu0 %1293, %v1168
      %v1295 = vpop.permute.xlu0 %1294
      %v1297 = vsub.f32 %v471, %v1220
      %v1298 = vsub.f32 %v476, %v1225
      %v1299 = vsub.f32 %v558, %v1230
      %v1300 = vsub.f32 %v563, %v1235
      %v1301 = vsub.f32 %v645, %v1240
      %v1302 = vsub.f32 %v650, %v1245
      %v1303 = vsub.f32 %v732, %v1250
      %v1304 = vsub.f32 %v737, %v1255
      %v1305 = vsub.f32 %v819, %v1260
      %v1306 = vsub.f32 %v824, %v1265
      %v1307 = vsub.f32 %v906, %v1270
      %v1308 = vsub.f32 %v911, %v1275
      %v1309 = vsub.f32 %v993, %v1280
      %v1310 = vsub.f32 %v998, %v1285
      %v1311 = vsub.f32 %v1080, %v1290
      %v1312 = vsub.f32 %v1085, %v1295
      %v1313 = vmul.f32 %v1297, 1.442695
      %v1314 = vpow.pop %v1313
      %v1315 = vmul.f32 %v1298, 1.442695
      %v1316 = vpow.pop %v1315
      %v1317 = vmul.f32 %v1299, 1.442695
      %v1318 = vpow.pop %v1317
      %v1319 = vmul.f32 %v1300, 1.442695
      %v1320 = vpow.pop %v1319
      %v1321 = vmul.f32 %v1301, 1.442695
      %v1322 = vpow.pop %v1321
      %v1323 = vmul.f32 %v1302, 1.442695
      %v1324 = vpow.pop %v1323
      %v1325 = vmul.f32 %v1303, 1.442695
      %v1326 = vpow.pop %v1325
      %v1327 = vmul.f32 %v1304, 1.442695
      %v1328 = vpow.pop %v1327
      %v1329 = vmul.f32 %v1305, 1.442695
      %v1330 = vpow.pop %v1329
      %v1331 = vmul.f32 %v1306, 1.442695
      %v1332 = vpow.pop %v1331
      %v1333 = vmul.f32 %v1307, 1.442695
      %v1334 = vpow.pop %v1333
      %v1335 = vmul.f32 %v1308, 1.442695
      %v1336 = vpow.pop %v1335
      %v1337 = vmul.f32 %v1309, 1.442695
      %v1338 = vpow.pop %v1337
      %v1339 = vmul.f32 %v1310, 1.442695
      %v1340 = vpow.pop %v1339
      %v1341 = vmul.f32 %v1311, 1.442695
      %v1342 = vpow.pop %v1341
      %v1343 = vmul.f32 %v1312, 1.442695
      %v1344 = vpow.pop %v1343
      %v1345 = vld [vmem:[#allocation3] sm:$0xff]
      %v1346 = vld [vmem:[#allocation3 + $0x8] sm:$0xff]
      %v1347 = vld [vmem:[#allocation3 + $0x10] sm:$0xff]
      %v1348 = vld [vmem:[#allocation3 + $0x18] sm:$0xff]
      %v1349 = vld [vmem:[#allocation3 + $0x20] sm:$0xff]
      %v1350 = vld [vmem:[#allocation3 + $0x28] sm:$0xff]
      %v1351 = vld [vmem:[#allocation3 + $0x30] sm:$0xff]
      %v1352 = vld [vmem:[#allocation3 + $0x38] sm:$0xff]
      %v1353 = vld [vmem:[#allocation3 + $0x40] sm:$0xff]
      %v1354 = vld [vmem:[#allocation3 + $0x48] sm:$0xff]
      %v1355 = vld [vmem:[#allocation3 + $0x50] sm:$0xff]
      %v1356 = vld [vmem:[#allocation3 + $0x58] sm:$0xff]
      %v1357 = vld [vmem:[#allocation3 + $0x60] sm:$0xff]
      %v1358 = vld [vmem:[#allocation3 + $0x68] sm:$0xff]
      %v1359 = vld [vmem:[#allocation3 + $0x70] sm:$0xff]
      %v1360 = vld [vmem:[#allocation3 + $0x78] sm:$0xff]
      %v1361 = vmul.f32 %v1186, %v1345
      %v1362 = vmul.f32 %v1188, %v1346
      %v1363 = vmul.f32 %v1190, %v1347
      %v1364 = vmul.f32 %v1192, %v1348
      %v1365 = vmul.f32 %v1194, %v1349
      %v1366 = vmul.f32 %v1196, %v1350
      %v1367 = vmul.f32 %v1198, %v1351
      %v1368 = vmul.f32 %v1200, %v1352
      %v1369 = vmul.f32 %v1202, %v1353
      %v1370 = vmul.f32 %v1204, %v1354
      %v1371 = vmul.f32 %v1206, %v1355
      %v1372 = vmul.f32 %v1208, %v1356
      %v1373 = vmul.f32 %v1210, %v1357
      %v1374 = vmul.f32 %v1212, %v1358
      %v1375 = vmul.f32 %v1214, %v1359
      %v1376 = vmul.f32 %v1216, %v1360
      %v1377 = vsel %vm1104, %v1314, 0.0
      %1378 = vadd.xlane.f32.xlu0 %v1377
      %v1379 = vpop.xlane.xlu0 %1378
      %v1380 = vsel %vm1104, %v1316, 0.0
      %1381 = vadd.xlane.f32.xlu0 %v1380
      %v1382 = vpop.xlane.xlu0 %1381
      %v1383 = vsel %vm1104, %v1318, 0.0
      %1384 = vadd.xlane.f32.xlu0 %v1383
      %v1385 = vpop.xlane.xlu0 %1384
      %v1386 = vsel %vm1104, %v1320, 0.0
      %1387 = vadd.xlane.f32.xlu0 %v1386
      %v1388 = vpop.xlane.xlu0 %1387
      %v1389 = vsel %vm1104, %v1322, 0.0
      %1390 = vadd.xlane.f32.xlu0 %v1389
      %v1391 = vpop.xlane.xlu0 %1390
      %v1392 = vsel %vm1104, %v1324, 0.0
      %1393 = vadd.xlane.f32.xlu0 %v1392
      %v1394 = vpop.xlane.xlu0 %1393
      %v1395 = vsel %vm1104, %v1326, 0.0
      %1396 = vadd.xlane.f32.xlu0 %v1395
      %v1397 = vpop.xlane.xlu0 %1396
      %v1398 = vsel %vm1104, %v1328, 0.0
      %1399 = vadd.xlane.f32.xlu0 %v1398
      %v1400 = vpop.xlane.xlu0 %1399
      %v1401 = vsel %vm1104, %v1330, 0.0
      %1402 = vadd.xlane.f32.xlu0 %v1401
      %v1403 = vpop.xlane.xlu0 %1402
      %v1404 = vsel %vm1104, %v1332, 0.0
      %1405 = vadd.xlane.f32.xlu0 %v1404
      %v1406 = vpop.xlane.xlu0 %1405
      %v1407 = vsel %vm1104, %v1334, 0.0
      %1408 = vadd.xlane.f32.xlu0 %v1407
      %v1409 = vpop.xlane.xlu0 %1408
      %v1410 = vsel %vm1104, %v1336, 0.0
      %1411 = vadd.xlane.f32.xlu0 %v1410
      %v1412 = vpop.xlane.xlu0 %1411
      %v1413 = vsel %vm1104, %v1338, 0.0
      %1414 = vadd.xlane.f32.xlu0 %v1413
      %v1415 = vpop.xlane.xlu0 %1414
      %v1416 = vsel %vm1104, %v1340, 0.0
      %1417 = vadd.xlane.f32.xlu0 %v1416
      %v1418 = vpop.xlane.xlu0 %1417
      %v1419 = vsel %vm1104, %v1342, 0.0
      %1420 = vadd.xlane.f32.xlu0 %v1419
      %v1421 = vpop.xlane.xlu0 %1420
      %v1422 = vsel %vm1104, %v1344, 0.0
      %1423 = vadd.xlane.f32.xlu0 %v1422
      %v1424 = vpop.xlane.xlu0 %1423
      %v1425 = vadd.f32 %v1361, %v1379
      %v1426 = vadd.f32 %v1362, %v1382
      %v1427 = vadd.f32 %v1363, %v1385
      %v1428 = vadd.f32 %v1364, %v1388
      %v1429 = vadd.f32 %v1365, %v1391
      %v1430 = vadd.f32 %v1366, %v1394
      %v1431 = vadd.f32 %v1367, %v1397
      %v1432 = vadd.f32 %v1368, %v1400
      %v1433 = vadd.f32 %v1369, %v1403
      %v1434 = vadd.f32 %v1370, %v1406
      %v1435 = vadd.f32 %v1371, %v1409
      %v1436 = vadd.f32 %v1372, %v1412
      %v1437 = vadd.f32 %v1373, %v1415
      %v1438 = vadd.f32 %v1374, %v1418
      %v1439 = vadd.f32 %v1375, %v1421
      %v1440 = vadd.f32 %v1376, %v1424
      %vm1441 = vcmask 7168
      %1442 = vst.msk [vmem:[#allocation3] sm:$0xff] %vm1441, %v1425
      %1443 = vst.msk [vmem:[#allocation3 + $0x8] sm:$0xff] %vm1441, %v1426
      %1444 = vst.msk [vmem:[#allocation3 + $0x10] sm:$0xff] %vm1441, %v1427
      %1445 = vst.msk [vmem:[#allocation3 + $0x18] sm:$0xff] %vm1441, %v1428
      %1446 = vst.msk [vmem:[#allocation3 + $0x20] sm:$0xff] %vm1441, %v1429
      %1447 = vst.msk [vmem:[#allocation3 + $0x28] sm:$0xff] %vm1441, %v1430
      %1448 = vst.msk [vmem:[#allocation3 + $0x30] sm:$0xff] %vm1441, %v1431
      %1449 = vst.msk [vmem:[#allocation3 + $0x38] sm:$0xff] %vm1441, %v1432
      %1450 = vst.msk [vmem:[#allocation3 + $0x40] sm:$0xff] %vm1441, %v1433
      %1451 = vst.msk [vmem:[#allocation3 + $0x48] sm:$0xff] %vm1441, %v1434
      %1452 = vst.msk [vmem:[#allocation3 + $0x50] sm:$0xff] %vm1441, %v1435
      %1453 = vst.msk [vmem:[#allocation3 + $0x58] sm:$0xff] %vm1441, %v1436
      %1454 = vst.msk [vmem:[#allocation3 + $0x60] sm:$0xff] %vm1441, %v1437
      %1455 = vst.msk [vmem:[#allocation3 + $0x68] sm:$0xff] %vm1441, %v1438
      %1456 = vst.msk [vmem:[#allocation3 + $0x70] sm:$0xff] %vm1441, %v1439
      %1457 = vst.msk [vmem:[#allocation3 + $0x78] sm:$0xff] %vm1441, %v1440
      %v1458 = vld [vmem:[#allocation4] sm:$0xff]
      %v1459 = vld [vmem:[#allocation4 + $0x8] sm:$0xff]
      %v1460 = vld [vmem:[#allocation4 + $0x10] sm:$0xff]
      %v1461 = vld [vmem:[#allocation4 + $0x18] sm:$0xff]
      %v1462 = vld [vmem:[#allocation4 + $0x20] sm:$0xff]
      %v1463 = vld [vmem:[#allocation4 + $0x28] sm:$0xff]
      %v1464 = vld [vmem:[#allocation4 + $0x30] sm:$0xff]
      %v1465 = vld [vmem:[#allocation4 + $0x38] sm:$0xff]
      %v1466 = vld [vmem:[#allocation4 + $0x40] sm:$0xff]
      %v1467 = vld [vmem:[#allocation4 + $0x48] sm:$0xff]
      %v1468 = vld [vmem:[#allocation4 + $0x50] sm:$0xff]
      %v1469 = vld [vmem:[#allocation4 + $0x58] sm:$0xff]
      %v1470 = vld [vmem:[#allocation4 + $0x60] sm:$0xff]
      %v1471 = vld [vmem:[#allocation4 + $0x68] sm:$0xff]
      %v1472 = vld [vmem:[#allocation4 + $0x70] sm:$0xff]
      %v1473 = vld [vmem:[#allocation4 + $0x78] sm:$0xff]
      %1475 = vset.pattern.permute.xlu0 0
      %1476 = vperm.xlu0 %1475, %v1186
      %v1477 = vpop.permute.xlu0 %1476
      %1480 = vset.pattern.permute.xlu0 0
      %1481 = vperm.xlu0 %1480, %v1188
      %v1482 = vpop.permute.xlu0 %1481
      %1485 = vset.pattern.permute.xlu0 0
      %1486 = vperm.xlu0 %1485, %v1190
      %v1487 = vpop.permute.xlu0 %1486
      %1490 = vset.pattern.permute.xlu0 0
      %1491 = vperm.xlu0 %1490, %v1192
      %v1492 = vpop.permute.xlu0 %1491
      %1495 = vset.pattern.permute.xlu0 0
      %1496 = vperm.xlu0 %1495, %v1194
      %v1497 = vpop.permute.xlu0 %1496
      %1500 = vset.pattern.permute.xlu0 0
      %1501 = vperm.xlu0 %1500, %v1196
      %v1502 = vpop.permute.xlu0 %1501
      %1505 = vset.pattern.permute.xlu0 0
      %1506 = vperm.xlu0 %1505, %v1198
      %v1507 = vpop.permute.xlu0 %1506
      %1510 = vset.pattern.permute.xlu0 0
      %1511 = vperm.xlu0 %1510, %v1200
      %v1512 = vpop.permute.xlu0 %1511
      %1515 = vset.pattern.permute.xlu0 0
      %1516 = vperm.xlu0 %1515, %v1202
      %v1517 = vpop.permute.xlu0 %1516
      %1520 = vset.pattern.permute.xlu0 0
      %1521 = vperm.xlu0 %1520, %v1204
      %v1522 = vpop.permute.xlu0 %1521
      %1525 = vset.pattern.permute.xlu0 0
      %1526 = vperm.xlu0 %1525, %v1206
      %v1527 = vpop.permute.xlu0 %1526
      %1530 = vset.pattern.permute.xlu0 0
      %1531 = vperm.xlu0 %1530, %v1208
      %v1532 = vpop.permute.xlu0 %1531
      %1535 = vset.pattern.permute.xlu0 0
      %1536 = vperm.xlu0 %1535, %v1210
      %v1537 = vpop.permute.xlu0 %1536
      %1540 = vset.pattern.permute.xlu0 0
      %1541 = vperm.xlu0 %1540, %v1212
      %v1542 = vpop.permute.xlu0 %1541
      %1545 = vset.pattern.permute.xlu0 0
      %1546 = vperm.xlu0 %1545, %v1214
      %v1547 = vpop.permute.xlu0 %1546
      %1550 = vset.pattern.permute.xlu0 0
      %1551 = vperm.xlu0 %1550, %v1216
      %v1552 = vpop.permute.xlu0 %1551
      %v1554 = vmul.f32 %v1477, %v1458
      %v1555 = vmul.f32 %v1482, %v1459
      %v1556 = vmul.f32 %v1487, %v1460
      %v1557 = vmul.f32 %v1492, %v1461
      %v1558 = vmul.f32 %v1497, %v1462
      %v1559 = vmul.f32 %v1502, %v1463
      %v1560 = vmul.f32 %v1507, %v1464
      %v1561 = vmul.f32 %v1512, %v1465
      %v1562 = vmul.f32 %v1517, %v1466
      %v1563 = vmul.f32 %v1522, %v1467
      %v1564 = vmul.f32 %v1527, %v1468
      %v1565 = vmul.f32 %v1532, %v1469
      %v1566 = vmul.f32 %v1537, %v1470
      %v1567 = vmul.f32 %v1542, %v1471
      %v1568 = vmul.f32 %v1547, %v1472
      %v1569 = vmul.f32 %v1552, %v1473
      %v1570 = vld [vmem:[%s277] sm:$0xff]
      %v1571 = vld [vmem:[%s277 + $0x8] sm:$0xff]
      %v1572 = vld [vmem:[%s277 + $0x10] sm:$0xff]
      %v1573 = vld [vmem:[%s277 + $0x18] sm:$0xff]
      %v1574 = vld [vmem:[%s277 + $0x20] sm:$0xff]
      %v1575 = vld [vmem:[%s277 + $0x28] sm:$0xff]
      %v1576 = vld [vmem:[%s277 + $0x30] sm:$0xff]
      %v1577 = vld [vmem:[%s277 + $0x38] sm:$0xff]
      %v1578 = vld [vmem:[%s277 + $0x40] sm:$0xff]
      %v1579 = vld [vmem:[%s277 + $0x48] sm:$0xff]
      %v1580 = vld [vmem:[%s277 + $0x50] sm:$0xff]
      %v1581 = vld [vmem:[%s277 + $0x58] sm:$0xff]
      %v1582 = vld [vmem:[%s277 + $0x60] sm:$0xff]
      %v1583 = vld [vmem:[%s277 + $0x68] sm:$0xff]
      %v1584 = vld [vmem:[%s277 + $0x70] sm:$0xff]
      %v1585 = vld [vmem:[%s277 + $0x78] sm:$0xff]
      %v1587 = vsel %vm1104, %v1314, 0
      %v1590 = vsel %vm1104, %v1316, 0
      %1592 = vmatprep.subr.mxu0 0.0
      %1593 = vmatpush1.msra.mxu0 %v1570
      %1594 = vmatprep.subr.mxu0 0.0
      %1595 = vmatpush1.msra.mxu0 %v1571
      %1596 = vmatprep.subr.mxu0 0.0
      %1597 = vmatpush1.msra.mxu0 0.0
      %1598 = vmatprep.subr.mxu0 0.0
      %1599 = vmatpush1.msra.mxu0 0.0
      %1600 = vmatprep.subr.mxu0 0.0
      %1601 = vmatpush1.msra.mxu0 0.0
      %1602 = vmatprep.subr.mxu0 0.0
      %1603 = vmatpush1.msra.mxu0 0.0
      %1604 = vmatprep.subr.mxu0 0.0
      %1605 = vmatpush1.msra.mxu0 0.0
      %1606 = vmatprep.subr.mxu0 0.0
      %1607 = vmatpush1.msra.mxu0 0.0
      %1608 = vmatprep.subr.mxu0 0.0
      %1609 = vmatpush1.msra.mxu0 0.0
      %1610 = vmatprep.subr.mxu0 0.0
      %1611 = vmatpush1.msra.mxu0 0.0
      %1612 = vmatprep.subr.mxu0 0.0
      %1613 = vmatpush1.msra.mxu0 0.0
      %1614 = vmatprep.subr.mxu0 0.0
      %1615 = vmatpush1.msra.mxu0 0.0
      %1616 = vmatprep.subr.mxu0 0.0
      %1617 = vmatpush1.msra.mxu0 0.0
      %1618 = vmatprep.subr.mxu0 0.0
      %1619 = vmatpush1.msra.mxu0 0.0
      %1620 = vmatprep.subr.mxu0 0.0
      %1621 = vmatpush1.msra.mxu0 0.0
      %1622 = vmatprep.subr.mxu0 0.0
      %1623 = vmatpush1.msra.mxu0 0.0
      %1624 = vmatprep.subr.mxu0 0.0
      %1625 = vmatpush1.msra.mxu0 0.0
      %1626 = vmatprep.subr.mxu0 0.0
      %1627 = vmatpush1.msra.mxu0 0.0
      %1628 = vmatprep.subr.mxu0 0.0
      %1629 = vmatpush1.msra.mxu0 0.0
      %1630 = vmatprep.subr.mxu0 0.0
      %1631 = vmatpush1.msra.mxu0 0.0
      %1632 = vmatprep.subr.mxu0 0.0
      %1633 = vmatpush1.msra.mxu0 0.0
      %1634 = vmatprep.subr.mxu0 0.0
      %1635 = vmatpush1.msra.mxu0 0.0
      %1636 = vmatprep.subr.mxu0 0.0
      %1637 = vmatpush1.msra.mxu0 0.0
      %1638 = vmatprep.subr.mxu0 0.0
      %1639 = vmatpush1.msra.mxu0 0.0
      %1640 = vmatprep.subr.mxu0 0.0
      %1641 = vmatpush1.msra.mxu0 0.0
      %1642 = vmatprep.subr.mxu0 0.0
      %1643 = vmatpush1.msra.mxu0 0.0
      %1644 = vmatprep.subr.mxu0 0.0
      %1645 = vmatpush1.msra.mxu0 0.0
      %1646 = vmatprep.subr.mxu0 0.0
      %1647 = vmatpush1.msra.mxu0 0.0
      %1648 = vmatprep.subr.mxu0 0.0
      %1649 = vmatpush1.msra.mxu0 0.0
      %1650 = vmatprep.subr.mxu0 0.0
      %1651 = vmatpush1.msra.mxu0 0.0
      %1652 = vmatprep.subr.mxu0 0.0
      %1653 = vmatpush1.msra.mxu0 0.0
      %1654 = vmatprep.subr.mxu0 0.0
      %1655 = vmatpush1.msra.mxu0 0.0
      %1656 = vmatprep.mubr.f32.mxu0 0.0
      %1657 = vmatmul.mubr.f32.gmra.mrb[0].mxu0 %v1587
      %v1658 = vpop.f32.mrb[0].mxu0
      %v1659 = vadd.f32 0.0, %v1658
      %v1660 = vpop.f32.mrb[0].mxu0
      %1661 = vmatprep.mubr.f32.mxu0 0.0
      %1662 = vmatmul.mubr.f32.gmra.mrb[0].mxu0 %v1590
      %v1663 = vpop.f32.mrb[0].mxu0
      %v1664 = vadd.f32 0.0, %v1663
      %v1665 = vpop.f32.mrb[0].mxu0
      %1666 = vdwg.mxu0
      %v1668 = vsel %vm1104, %v1318, 0
      %v1671 = vsel %vm1104, %v1320, 0
      %1673 = vmatprep.subr.mxu0 0.0
      %1674 = vmatpush1.msra.mxu0 %v1572
      %1675 = vmatprep.subr.mxu0 0.0
      %1676 = vmatpush1.msra.mxu0 %v1573
      %1677 = vmatprep.subr.mxu0 0.0
      %1678 = vmatpush1.msra.mxu0 0.0
      %1679 = vmatprep.subr.mxu0 0.0
      %1680 = vmatpush1.msra.mxu0 0.0
      %1681 = vmatprep.subr.mxu0 0.0
      %1682 = vmatpush1.msra.mxu0 0.0
      %1683 = vmatprep.subr.mxu0 0.0
      %1684 = vmatpush1.msra.mxu0 0.0
      %1685 = vmatprep.subr.mxu0 0.0
      %1686 = vmatpush1.msra.mxu0 0.0
      %1687 = vmatprep.subr.mxu0 0.0
      %1688 = vmatpush1.msra.mxu0 0.0
      %1689 = vmatprep.subr.mxu0 0.0
      %1690 = vmatpush1.msra.mxu0 0.0
      %1691 = vmatprep.subr.mxu0 0.0
      %1692 = vmatpush1.msra.mxu0 0.0
      %1693 = vmatprep.subr.mxu0 0.0
      %1694 = vmatpush1.msra.mxu0 0.0
      %1695 = vmatprep.subr.mxu0 0.0
      %1696 = vmatpush1.msra.mxu0 0.0
      %1697 = vmatprep.subr.mxu0 0.0
      %1698 = vmatpush1.msra.mxu0 0.0
      %1699 = vmatprep.subr.mxu0 0.0
      %1700 = vmatpush1.msra.mxu0 0.0
      %1701 = vmatprep.subr.mxu0 0.0
      %1702 = vmatpush1.msra.mxu0 0.0
      %1703 = vmatprep.subr.mxu0 0.0
      %1704 = vmatpush1.msra.mxu0 0.0
      %1705 = vmatprep.subr.mxu0 0.0
      %1706 = vmatpush1.msra.mxu0 0.0
      %1707 = vmatprep.subr.mxu0 0.0
      %1708 = vmatpush1.msra.mxu0 0.0
      %1709 = vmatprep.subr.mxu0 0.0
      %1710 = vmatpush1.msra.mxu0 0.0
      %1711 = vmatprep.subr.mxu0 0.0
      %1712 = vmatpush1.msra.mxu0 0.0
      %1713 = vmatprep.subr.mxu0 0.0
      %1714 = vmatpush1.msra.mxu0 0.0
      %1715 = vmatprep.subr.mxu0 0.0
      %1716 = vmatpush1.msra.mxu0 0.0
      %1717 = vmatprep.subr.mxu0 0.0
      %1718 = vmatpush1.msra.mxu0 0.0
      %1719 = vmatprep.subr.mxu0 0.0
      %1720 = vmatpush1.msra.mxu0 0.0
      %1721 = vmatprep.subr.mxu0 0.0
      %1722 = vmatpush1.msra.mxu0 0.0
      %1723 = vmatprep.subr.mxu0 0.0
      %1724 = vmatpush1.msra.mxu0 0.0
      %1725 = vmatprep.subr.mxu0 0.0
      %1726 = vmatpush1.msra.mxu0 0.0
      %1727 = vmatprep.subr.mxu0 0.0
      %1728 = vmatpush1.msra.mxu0 0.0
      %1729 = vmatprep.subr.mxu0 0.0
      %1730 = vmatpush1.msra.mxu0 0.0
      %1731 = vmatprep.subr.mxu0 0.0
      %1732 = vmatpush1.msra.mxu0 0.0
      %1733 = vmatprep.subr.mxu0 0.0
      %1734 = vmatpush1.msra.mxu0 0.0
      %1735 = vmatprep.subr.mxu0 0.0
      %1736 = vmatpush1.msra.mxu0 0.0
      %1737 = vmatprep.mubr.f32.mxu0 0.0
      %1738 = vmatmul.mubr.f32.gmra.mrb[0].mxu0 %v1668
      %v1739 = vpop.f32.mrb[0].mxu0
      %v1740 = vadd.f32 0.0, %v1739
      %v1741 = vpop.f32.mrb[0].mxu0
      %1742 = vmatprep.mubr.f32.mxu0 0.0
      %1743 = vmatmul.mubr.f32.gmra.mrb[0].mxu0 %v1671
      %v1744 = vpop.f32.mrb[0].mxu0
      %v1745 = vadd.f32 0.0, %v1744
      %v1746 = vpop.f32.mrb[0].mxu0
      %1747 = vdwg.mxu0
      %v1749 = vsel %vm1104, %v1322, 0
      %v1752 = vsel %vm1104, %v1324, 0
      %1754 = vmatprep.subr.mxu0 0.0
      %1755 = vmatpush1.msra.mxu0 %v1574
      %1756 = vmatprep.subr.mxu0 0.0
      %1757 = vmatpush1.msra.mxu0 %v1575
      %1758 = vmatprep.subr.mxu0 0.0
      %1759 = vmatpush1.msra.mxu0 0.0
      %1760 = vmatprep.subr.mxu0 0.0
      %1761 = vmatpush1.msra.mxu0 0.0
      %1762 = vmatprep.subr.mxu0 0.0
      %1763 = vmatpush1.msra.mxu0 0.0
      %1764 = vmatprep.subr.mxu0 0.0
      %1765 = vmatpush1.msra.mxu0 0.0
      %1766 = vmatprep.subr.mxu0 0.0
      %1767 = vmatpush1.msra.mxu0 0.0
      %1768 = vmatprep.subr.mxu0 0.0
      %1769 = vmatpush1.msra.mxu0 0.0
      %1770 = vmatprep.subr.mxu0 0.0
      %1771 = vmatpush1.msra.mxu0 0.0
      %1772 = vmatprep.subr.mxu0 0.0
      %1773 = vmatpush1.msra.mxu0 0.0
      %1774 = vmatprep.subr.mxu0 0.0
      %1775 = vmatpush1.msra.mxu0 0.0
      %1776 = vmatprep.subr.mxu0 0.0
      %1777 = vmatpush1.msra.mxu0 0.0
      %1778 = vmatprep.subr.mxu0 0.0
      %1779 = vmatpush1.msra.mxu0 0.0
      %1780 = vmatprep.subr.mxu0 0.0
      %1781 = vmatpush1.msra.mxu0 0.0
      %1782 = vmatprep.subr.mxu0 0.0
      %1783 = vmatpush1.msra.mxu0 0.0
      %1784 = vmatprep.subr.mxu0 0.0
      %1785 = vmatpush1.msra.mxu0 0.0
      %1786 = vmatprep.subr.mxu0 0.0
      %1787 = vmatpush1.msra.mxu0 0.0
      %1788 = vmatprep.subr.mxu0 0.0
      %1789 = vmatpush1.msra.mxu0 0.0
      %1790 = vmatprep.subr.mxu0 0.0
      %1791 = vmatpush1.msra.mxu0 0.0
      %1792 = vmatprep.subr.mxu0 0.0
      %1793 = vmatpush1.msra.mxu0 0.0
      %1794 = vmatprep.subr.mxu0 0.0
      %1795 = vmatpush1.msra.mxu0 0.0
      %1796 = vmatprep.subr.mxu0 0.0
      %1797 = vmatpush1.msra.mxu0 0.0
      %1798 = vmatprep.subr.mxu0 0.0
      %1799 = vmatpush1.msra.mxu0 0.0
      %1800 = vmatprep.subr.mxu0 0.0
      %1801 = vmatpush1.msra.mxu0 0.0
      %1802 = vmatprep.subr.mxu0 0.0
      %1803 = vmatpush1.msra.mxu0 0.0
      %1804 = vmatprep.subr.mxu0 0.0
      %1805 = vmatpush1.msra.mxu0 0.0
      %1806 = vmatprep.subr.mxu0 0.0
      %1807 = vmatpush1.msra.mxu0 0.0
      %1808 = vmatprep.subr.mxu0 0.0
      %1809 = vmatpush1.msra.mxu0 0.0
      %1810 = vmatprep.subr.mxu0 0.0
      %1811 = vmatpush1.msra.mxu0 0.0
      %1812 = vmatprep.subr.mxu0 0.0
      %1813 = vmatpush1.msra.mxu0 0.0
      %1814 = vmatprep.subr.mxu0 0.0
      %1815 = vmatpush1.msra.mxu0 0.0
      %1816 = vmatprep.subr.mxu0 0.0
      %1817 = vmatpush1.msra.mxu0 0.0
      %1818 = vmatprep.mubr.f32.mxu0 0.0
      %1819 = vmatmul.mubr.f32.gmra.mrb[0].mxu0 %v1749
      %v1820 = vpop.f32.mrb[0].mxu0
      %v1821 = vadd.f32 0.0, %v1820
      %v1822 = vpop.f32.mrb[0].mxu0
      %1823 = vmatprep.mubr.f32.mxu0 0.0
      %1824 = vmatmul.mubr.f32.gmra.mrb[0].mxu0 %v1752
      %v1825 = vpop.f32.mrb[0].mxu0
      %v1826 = vadd.f32 0.0, %v1825
      %v1827 = vpop.f32.mrb[0].mxu0
      %1828 = vdwg.mxu0
      %v1830 = vsel %vm1104, %v1326, 0
      %v1833 = vsel %vm1104, %v1328, 0
      %1835 = vmatprep.subr.mxu0 0.0
      %1836 = vmatpush1.msra.mxu0 %v1576
      %1837 = vmatprep.subr.mxu0 0.0
      %1838 = vmatpush1.msra.mxu0 %v1577
      %1839 = vmatprep.subr.mxu0 0.0
      %1840 = vmatpush1.msra.mxu0 0.0
      %1841 = vmatprep.subr.mxu0 0.0
      %1842 = vmatpush1.msra.mxu0 0.0
      %1843 = vmatprep.subr.mxu0 0.0
      %1844 = vmatpush1.msra.mxu0 0.0
      %1845 = vmatprep.subr.mxu0 0.0
      %1846 = vmatpush1.msra.mxu0 0.0
      %1847 = vmatprep.subr.mxu0 0.0
      %1848 = vmatpush1.msra.mxu0 0.0
      %1849 = vmatprep.subr.mxu0 0.0
      %1850 = vmatpush1.msra.mxu0 0.0
      %1851 = vmatprep.subr.mxu0 0.0
      %1852 = vmatpush1.msra.mxu0 0.0
      %1853 = vmatprep.subr.mxu0 0.0
      %1854 = vmatpush1.msra.mxu0 0.0
      %1855 = vmatprep.subr.mxu0 0.0
      %1856 = vmatpush1.msra.mxu0 0.0
      %1857 = vmatprep.subr.mxu0 0.0
      %1858 = vmatpush1.msra.mxu0 0.0
      %1859 = vmatprep.subr.mxu0 0.0
      %1860 = vmatpush1.msra.mxu0 0.0
      %1861 = vmatprep.subr.mxu0 0.0
      %1862 = vmatpush1.msra.mxu0 0.0
      %1863 = vmatprep.subr.mxu0 0.0
      %1864 = vmatpush1.msra.mxu0 0.0
      %1865 = vmatprep.subr.mxu0 0.0
      %1866 = vmatpush1.msra.mxu0 0.0
      %1867 = vmatprep.subr.mxu0 0.0
      %1868 = vmatpush1.msra.mxu0 0.0
      %1869 = vmatprep.subr.mxu0 0.0
      %1870 = vmatpush1.msra.mxu0 0.0
      %1871 = vmatprep.subr.mxu0 0.0
      %1872 = vmatpush1.msra.mxu0 0.0
      %1873 = vmatprep.subr.mxu0 0.0
      %1874 = vmatpush1.msra.mxu0 0.0
      %1875 = vmatprep.subr.mxu0 0.0
      %1876 = vmatpush1.msra.mxu0 0.0
      %1877 = vmatprep.subr.mxu0 0.0
      %1878 = vmatpush1.msra.mxu0 0.0
      %1879 = vmatprep.subr.mxu0 0.0
      %1880 = vmatpush1.msra.mxu0 0.0
      %1881 = vmatprep.subr.mxu0 0.0
      %1882 = vmatpush1.msra.mxu0 0.0
      %1883 = vmatprep.subr.mxu0 0.0
      %1884 = vmatpush1.msra.mxu0 0.0
      %1885 = vmatprep.subr.mxu0 0.0
      %1886 = vmatpush1.msra.mxu0 0.0
      %1887 = vmatprep.subr.mxu0 0.0
      %1888 = vmatpush1.msra.mxu0 0.0
      %1889 = vmatprep.subr.mxu0 0.0
      %1890 = vmatpush1.msra.mxu0 0.0
      %1891 = vmatprep.subr.mxu0 0.0
      %1892 = vmatpush1.msra.mxu0 0.0
      %1893 = vmatprep.subr.mxu0 0.0
      %1894 = vmatpush1.msra.mxu0 0.0
      %1895 = vmatprep.subr.mxu0 0.0
      %1896 = vmatpush1.msra.mxu0 0.0
      %1897 = vmatprep.subr.mxu0 0.0
      %1898 = vmatpush1.msra.mxu0 0.0
      %1899 = vmatprep.mubr.f32.mxu0 0.0
      %1900 = vmatmul.mubr.f32.gmra.mrb[0].mxu0 %v1830
      %v1901 = vpop.f32.mrb[0].mxu0
      %v1902 = vadd.f32 0.0, %v1901
      %v1903 = vpop.f32.mrb[0].mxu0
      %1904 = vmatprep.mubr.f32.mxu0 0.0
      %1905 = vmatmul.mubr.f32.gmra.mrb[0].mxu0 %v1833
      %v1906 = vpop.f32.mrb[0].mxu0
      %v1907 = vadd.f32 0.0, %v1906
      %v1908 = vpop.f32.mrb[0].mxu0
      %1909 = vdwg.mxu0
      %v1911 = vsel %vm1104, %v1330, 0
      %v1914 = vsel %vm1104, %v1332, 0
      %1916 = vmatprep.subr.mxu0 0.0
      %1917 = vmatpush1.msra.mxu0 %v1578
      %1918 = vmatprep.subr.mxu0 0.0
      %1919 = vmatpush1.msra.mxu0 %v1579
      %1920 = vmatprep.subr.mxu0 0.0
      %1921 = vmatpush1.msra.mxu0 0.0
      %1922 = vmatprep.subr.mxu0 0.0
      %1923 = vmatpush1.msra.mxu0 0.0
      %1924 = vmatprep.subr.mxu0 0.0
      %1925 = vmatpush1.msra.mxu0 0.0
      %1926 = vmatprep.subr.mxu0 0.0
      %1927 = vmatpush1.msra.mxu0 0.0
      %1928 = vmatprep.subr.mxu0 0.0
      %1929 = vmatpush1.msra.mxu0 0.0
      %1930 = vmatprep.subr.mxu0 0.0
      %1931 = vmatpush1.msra.mxu0 0.0
      %1932 = vmatprep.subr.mxu0 0.0
      %1933 = vmatpush1.msra.mxu0 0.0
      %1934 = vmatprep.subr.mxu0 0.0
      %1935 = vmatpush1.msra.mxu0 0.0
      %1936 = vmatprep.subr.mxu0 0.0
      %1937 = vmatpush1.msra.mxu0 0.0
      %1938 = vmatprep.subr.mxu0 0.0
      %1939 = vmatpush1.msra.mxu0 0.0
      %1940 = vmatprep.subr.mxu0 0.0
      %1941 = vmatpush1.msra.mxu0 0.0
      %1942 = vmatprep.subr.mxu0 0.0
      %1943 = vmatpush1.msra.mxu0 0.0
      %1944 = vmatprep.subr.mxu0 0.0
      %1945 = vmatpush1.msra.mxu0 0.0
      %1946 = vmatprep.subr.mxu0 0.0
      %1947 = vmatpush1.msra.mxu0 0.0
      %1948 = vmatprep.subr.mxu0 0.0
      %1949 = vmatpush1.msra.mxu0 0.0
      %1950 = vmatprep.subr.mxu0 0.0
      %1951 = vmatpush1.msra.mxu0 0.0
      %1952 = vmatprep.subr.mxu0 0.0
      %1953 = vmatpush1.msra.mxu0 0.0
      %1954 = vmatprep.subr.mxu0 0.0
      %1955 = vmatpush1.msra.mxu0 0.0
      %1956 = vmatprep.subr.mxu0 0.0
      %1957 = vmatpush1.msra.mxu0 0.0
      %1958 = vmatprep.subr.mxu0 0.0
      %1959 = vmatpush1.msra.mxu0 0.0
      %1960 = vmatprep.subr.mxu0 0.0
      %1961 = vmatpush1.msra.mxu0 0.0
      %1962 = vmatprep.subr.mxu0 0.0
      %1963 = vmatpush1.msra.mxu0 0.0
      %1964 = vmatprep.subr.mxu0 0.0
      %1965 = vmatpush1.msra.mxu0 0.0
      %1966 = vmatprep.subr.mxu0 0.0
      %1967 = vmatpush1.msra.mxu0 0.0
      %1968 = vmatprep.subr.mxu0 0.0
      %1969 = vmatpush1.msra.mxu0 0.0
      %1970 = vmatprep.subr.mxu0 0.0
      %1971 = vmatpush1.msra.mxu0 0.0
      %1972 = vmatprep.subr.mxu0 0.0
      %1973 = vmatpush1.msra.mxu0 0.0
      %1974 = vmatprep.subr.mxu0 0.0
      %1975 = vmatpush1.msra.mxu0 0.0
      %1976 = vmatprep.subr.mxu0 0.0
      %1977 = vmatpush1.msra.mxu0 0.0
      %1978 = vmatprep.subr.mxu0 0.0
      %1979 = vmatpush1.msra.mxu0 0.0
      %1980 = vmatprep.mubr.f32.mxu0 0.0
      %1981 = vmatmul.mubr.f32.gmra.mrb[0].mxu0 %v1911
      %v1982 = vpop.f32.mrb[0].mxu0
      %v1983 = vadd.f32 0.0, %v1982
      %v1984 = vpop.f32.mrb[0].mxu0
      %1985 = vmatprep.mubr.f32.mxu0 0.0
      %1986 = vmatmul.mubr.f32.gmra.mrb[0].mxu0 %v1914
      %v1987 = vpop.f32.mrb[0].mxu0
      %v1988 = vadd.f32 0.0, %v1987
      %v1989 = vpop.f32.mrb[0].mxu0
      %1990 = vdwg.mxu0
      %v1992 = vsel %vm1104, %v1334, 0
      %v1995 = vsel %vm1104, %v1336, 0
      %1997 = vmatprep.subr.mxu0 0.0
      %1998 = vmatpush1.msra.mxu0 %v1580
      %1999 = vmatprep.subr.mxu0 0.0
      %2000 = vmatpush1.msra.mxu0 %v1581
      %2001 = vmatprep.subr.mxu0 0.0
      %2002 = vmatpush1.msra.mxu0 0.0
      %2003 = vmatprep.subr.mxu0 0.0
      %2004 = vmatpush1.msra.mxu0 0.0
      %2005 = vmatprep.subr.mxu0 0.0
      %2006 = vmatpush1.msra.mxu0 0.0
      %2007 = vmatprep.subr.mxu0 0.0
      %2008 = vmatpush1.msra.mxu0 0.0
      %2009 = vmatprep.subr.mxu0 0.0
      %2010 = vmatpush1.msra.mxu0 0.0
      %2011 = vmatprep.subr.mxu0 0.0
      %2012 = vmatpush1.msra.mxu0 0.0
      %2013 = vmatprep.subr.mxu0 0.0
      %2014 = vmatpush1.msra.mxu0 0.0
      %2015 = vmatprep.subr.mxu0 0.0
      %2016 = vmatpush1.msra.mxu0 0.0
      %2017 = vmatprep.subr.mxu0 0.0
      %2018 = vmatpush1.msra.mxu0 0.0
      %2019 = vmatprep.subr.mxu0 0.0
      %2020 = vmatpush1.msra.mxu0 0.0
      %2021 = vmatprep.subr.mxu0 0.0
      %2022 = vmatpush1.msra.mxu0 0.0
      %2023 = vmatprep.subr.mxu0 0.0
      %2024 = vmatpush1.msra.mxu0 0.0
      %2025 = vmatprep.subr.mxu0 0.0
      %2026 = vmatpush1.msra.mxu0 0.0
      %2027 = vmatprep.subr.mxu0 0.0
      %2028 = vmatpush1.msra.mxu0 0.0
      %2029 = vmatprep.subr.mxu0 0.0
      %2030 = vmatpush1.msra.mxu0 0.0
      %2031 = vmatprep.subr.mxu0 0.0
      %2032 = vmatpush1.msra.mxu0 0.0
      %2033 = vmatprep.subr.mxu0 0.0
      %2034 = vmatpush1.msra.mxu0 0.0
      %2035 = vmatprep.subr.mxu0 0.0
      %2036 = vmatpush1.msra.mxu0 0.0
      %2037 = vmatprep.subr.mxu0 0.0
      %2038 = vmatpush1.msra.mxu0 0.0
      %2039 = vmatprep.subr.mxu0 0.0
      %2040 = vmatpush1.msra.mxu0 0.0
      %2041 = vmatprep.subr.mxu0 0.0
      %2042 = vmatpush1.msra.mxu0 0.0
      %2043 = vmatprep.subr.mxu0 0.0
      %2044 = vmatpush1.msra.mxu0 0.0
      %2045 = vmatprep.subr.mxu0 0.0
      %2046 = vmatpush1.msra.mxu0 0.0
      %2047 = vmatprep.subr.mxu0 0.0
      %2048 = vmatpush1.msra.mxu0 0.0
      %2049 = vmatprep.subr.mxu0 0.0
      %2050 = vmatpush1.msra.mxu0 0.0
      %2051 = vmatprep.subr.mxu0 0.0
      %2052 = vmatpush1.msra.mxu0 0.0
      %2053 = vmatprep.subr.mxu0 0.0
      %2054 = vmatpush1.msra.mxu0 0.0
      %2055 = vmatprep.subr.mxu0 0.0
      %2056 = vmatpush1.msra.mxu0 0.0
      %2057 = vmatprep.subr.mxu0 0.0
      %2058 = vmatpush1.msra.mxu0 0.0
      %2059 = vmatprep.subr.mxu0 0.0
      %2060 = vmatpush1.msra.mxu0 0.0
      %2061 = vmatprep.mubr.f32.mxu0 0.0
      %2062 = vmatmul.mubr.f32.gmra.mrb[0].mxu0 %v1992
      %v2063 = vpop.f32.mrb[0].mxu0
      %v2064 = vadd.f32 0.0, %v2063
      %v2065 = vpop.f32.mrb[0].mxu0
      %2066 = vmatprep.mubr.f32.mxu0 0.0
      %2067 = vmatmul.mubr.f32.gmra.mrb[0].mxu0 %v1995
      %v2068 = vpop.f32.mrb[0].mxu0
      %v2069 = vadd.f32 0.0, %v2068
      %v2070 = vpop.f32.mrb[0].mxu0
      %2071 = vdwg.mxu0
      %v2073 = vsel %vm1104, %v1338, 0
      %v2076 = vsel %vm1104, %v1340, 0
      %2078 = vmatprep.subr.mxu0 0.0
      %2079 = vmatpush1.msra.mxu0 %v1582
      %2080 = vmatprep.subr.mxu0 0.0
      %2081 = vmatpush1.msra.mxu0 %v1583
      %2082 = vmatprep.subr.mxu0 0.0
      %2083 = vmatpush1.msra.mxu0 0.0
      %2084 = vmatprep.subr.mxu0 0.0
      %2085 = vmatpush1.msra.mxu0 0.0
      %2086 = vmatprep.subr.mxu0 0.0
      %2087 = vmatpush1.msra.mxu0 0.0
      %2088 = vmatprep.subr.mxu0 0.0
      %2089 = vmatpush1.msra.mxu0 0.0
      %2090 = vmatprep.subr.mxu0 0.0
      %2091 = vmatpush1.msra.mxu0 0.0
      %2092 = vmatprep.subr.mxu0 0.0
      %2093 = vmatpush1.msra.mxu0 0.0
      %2094 = vmatprep.subr.mxu0 0.0
      %2095 = vmatpush1.msra.mxu0 0.0
      %2096 = vmatprep.subr.mxu0 0.0
      %2097 = vmatpush1.msra.mxu0 0.0
      %2098 = vmatprep.subr.mxu0 0.0
      %2099 = vmatpush1.msra.mxu0 0.0
      %2100 = vmatprep.subr.mxu0 0.0
      %2101 = vmatpush1.msra.mxu0 0.0
      %2102 = vmatprep.subr.mxu0 0.0
      %2103 = vmatpush1.msra.mxu0 0.0
      %2104 = vmatprep.subr.mxu0 0.0
      %2105 = vmatpush1.msra.mxu0 0.0
      %2106 = vmatprep.subr.mxu0 0.0
      %2107 = vmatpush1.msra.mxu0 0.0
      %2108 = vmatprep.subr.mxu0 0.0
      %2109 = vmatpush1.msra.mxu0 0.0
      %2110 = vmatprep.subr.mxu0 0.0
      %2111 = vmatpush1.msra.mxu0 0.0
      %2112 = vmatprep.subr.mxu0 0.0
      %2113 = vmatpush1.msra.mxu0 0.0
      %2114 = vmatprep.subr.mxu0 0.0
      %2115 = vmatpush1.msra.mxu0 0.0
      %2116 = vmatprep.subr.mxu0 0.0
      %2117 = vmatpush1.msra.mxu0 0.0
      %2118 = vmatprep.subr.mxu0 0.0
      %2119 = vmatpush1.msra.mxu0 0.0
      %2120 = vmatprep.subr.mxu0 0.0
      %2121 = vmatpush1.msra.mxu0 0.0
      %2122 = vmatprep.subr.mxu0 0.0
      %2123 = vmatpush1.msra.mxu0 0.0
      %2124 = vmatprep.subr.mxu0 0.0
      %2125 = vmatpush1.msra.mxu0 0.0
      %2126 = vmatprep.subr.mxu0 0.0
      %2127 = vmatpush1.msra.mxu0 0.0
      %2128 = vmatprep.subr.mxu0 0.0
      %2129 = vmatpush1.msra.mxu0 0.0
      %2130 = vmatprep.subr.mxu0 0.0
      %2131 = vmatpush1.msra.mxu0 0.0
      %2132 = vmatprep.subr.mxu0 0.0
      %2133 = vmatpush1.msra.mxu0 0.0
      %2134 = vmatprep.subr.mxu0 0.0
      %2135 = vmatpush1.msra.mxu0 0.0
      %2136 = vmatprep.subr.mxu0 0.0
      %2137 = vmatpush1.msra.mxu0 0.0
      %2138 = vmatprep.subr.mxu0 0.0
      %2139 = vmatpush1.msra.mxu0 0.0
      %2140 = vmatprep.subr.mxu0 0.0
      %2141 = vmatpush1.msra.mxu0 0.0
      %2142 = vmatprep.mubr.f32.mxu0 0.0
      %2143 = vmatmul.mubr.f32.gmra.mrb[0].mxu0 %v2073
      %v2144 = vpop.f32.mrb[0].mxu0
      %v2145 = vadd.f32 0.0, %v2144
      %v2146 = vpop.f32.mrb[0].mxu0
      %2147 = vmatprep.mubr.f32.mxu0 0.0
      %2148 = vmatmul.mubr.f32.gmra.mrb[0].mxu0 %v2076
      %v2149 = vpop.f32.mrb[0].mxu0
      %v2150 = vadd.f32 0.0, %v2149
      %v2151 = vpop.f32.mrb[0].mxu0
      %2152 = vdwg.mxu0
      %v2154 = vsel %vm1104, %v1342, 0
      %v2157 = vsel %vm1104, %v1344, 0
      %2159 = vmatprep.subr.mxu0 0.0
      %2160 = vmatpush1.msra.mxu0 %v1584
      %2161 = vmatprep.subr.mxu0 0.0
      %2162 = vmatpush1.msra.mxu0 %v1585
      %2163 = vmatprep.subr.mxu0 0.0
      %2164 = vmatpush1.msra.mxu0 0.0
      %2165 = vmatprep.subr.mxu0 0.0
      %2166 = vmatpush1.msra.mxu0 0.0
      %2167 = vmatprep.subr.mxu0 0.0
      %2168 = vmatpush1.msra.mxu0 0.0
      %2169 = vmatprep.subr.mxu0 0.0
      %2170 = vmatpush1.msra.mxu0 0.0
      %2171 = vmatprep.subr.mxu0 0.0
      %2172 = vmatpush1.msra.mxu0 0.0
      %2173 = vmatprep.subr.mxu0 0.0
      %2174 = vmatpush1.msra.mxu0 0.0
      %2175 = vmatprep.subr.mxu0 0.0
      %2176 = vmatpush1.msra.mxu0 0.0
      %2177 = vmatprep.subr.mxu0 0.0
      %2178 = vmatpush1.msra.mxu0 0.0
      %2179 = vmatprep.subr.mxu0 0.0
      %2180 = vmatpush1.msra.mxu0 0.0
      %2181 = vmatprep.subr.mxu0 0.0
      %2182 = vmatpush1.msra.mxu0 0.0
      %2183 = vmatprep.subr.mxu0 0.0
      %2184 = vmatpush1.msra.mxu0 0.0
      %2185 = vmatprep.subr.mxu0 0.0
      %2186 = vmatpush1.msra.mxu0 0.0
      %2187 = vmatprep.subr.mxu0 0.0
      %2188 = vmatpush1.msra.mxu0 0.0
      %2189 = vmatprep.subr.mxu0 0.0
      %2190 = vmatpush1.msra.mxu0 0.0
      %2191 = vmatprep.subr.mxu0 0.0
      %2192 = vmatpush1.msra.mxu0 0.0
      %2193 = vmatprep.subr.mxu0 0.0
      %2194 = vmatpush1.msra.mxu0 0.0
      %2195 = vmatprep.subr.mxu0 0.0
      %2196 = vmatpush1.msra.mxu0 0.0
      %2197 = vmatprep.subr.mxu0 0.0
      %2198 = vmatpush1.msra.mxu0 0.0
      %2199 = vmatprep.subr.mxu0 0.0
      %2200 = vmatpush1.msra.mxu0 0.0
      %2201 = vmatprep.subr.mxu0 0.0
      %2202 = vmatpush1.msra.mxu0 0.0
      %2203 = vmatprep.subr.mxu0 0.0
      %2204 = vmatpush1.msra.mxu0 0.0
      %2205 = vmatprep.subr.mxu0 0.0
      %2206 = vmatpush1.msra.mxu0 0.0
      %2207 = vmatprep.subr.mxu0 0.0
      %2208 = vmatpush1.msra.mxu0 0.0
      %2209 = vmatprep.subr.mxu0 0.0
      %2210 = vmatpush1.msra.mxu0 0.0
      %2211 = vmatprep.subr.mxu0 0.0
      %2212 = vmatpush1.msra.mxu0 0.0
      %2213 = vmatprep.subr.mxu0 0.0
      %2214 = vmatpush1.msra.mxu0 0.0
      %2215 = vmatprep.subr.mxu0 0.0
      %2216 = vmatpush1.msra.mxu0 0.0
      %2217 = vmatprep.subr.mxu0 0.0
      %2218 = vmatpush1.msra.mxu0 0.0
      %2219 = vmatprep.subr.mxu0 0.0
      %2220 = vmatpush1.msra.mxu0 0.0
      %2221 = vmatprep.subr.mxu0 0.0
      %2222 = vmatpush1.msra.mxu0 0.0
      %2223 = vmatprep.mubr.f32.mxu0 0.0
      %2224 = vmatmul.mubr.f32.gmra.mrb[0].mxu0 %v2154
      %v2225 = vpop.f32.mrb[0].mxu0
      %v2226 = vadd.f32 0.0, %v2225
      %v2227 = vpop.f32.mrb[0].mxu0
      %2228 = vmatprep.mubr.f32.mxu0 0.0
      %2229 = vmatmul.mubr.f32.gmra.mrb[0].mxu0 %v2157
      %v2230 = vpop.f32.mrb[0].mxu0
      %v2231 = vadd.f32 0.0, %v2230
      %v2232 = vpop.f32.mrb[0].mxu0
      %2233 = vdwg.mxu0
      %v2234 = vadd.f32 %v1554, %v1659
      %v2235 = vadd.f32 %v1555, %v1664
      %v2236 = vadd.f32 %v1556, %v1740
      %v2237 = vadd.f32 %v1557, %v1745
      %v2238 = vadd.f32 %v1558, %v1821
      %v2239 = vadd.f32 %v1559, %v1826
      %v2240 = vadd.f32 %v1560, %v1902
      %v2241 = vadd.f32 %v1561, %v1907
      %v2242 = vadd.f32 %v1562, %v1983
      %v2243 = vadd.f32 %v1563, %v1988
      %v2244 = vadd.f32 %v1564, %v2064
      %v2245 = vadd.f32 %v1565, %v2069
      %v2246 = vadd.f32 %v1566, %v2145
      %v2247 = vadd.f32 %v1567, %v2150
      %v2248 = vadd.f32 %v1568, %v2226
      %v2249 = vadd.f32 %v1569, %v2231
      %2250 = vst.msk [vmem:[#allocation4] sm:$0xff] %vm391, %v2234
      %2251 = vst.msk [vmem:[#allocation4 + $0x8] sm:$0xff] %vm391, %v2235
      %2252 = vst.msk [vmem:[#allocation4 + $0x10] sm:$0xff] %vm391, %v2236
      %2253 = vst.msk [vmem:[#allocation4 + $0x18] sm:$0xff] %vm391, %v2237
      %2254 = vst.msk [vmem:[#allocation4 + $0x20] sm:$0xff] %vm391, %v2238
      %2255 = vst.msk [vmem:[#allocation4 + $0x28] sm:$0xff] %vm391, %v2239
      %2256 = vst.msk [vmem:[#allocation4 + $0x30] sm:$0xff] %vm391, %v2240
      %2257 = vst.msk [vmem:[#allocation4 + $0x38] sm:$0xff] %vm391, %v2241
      %2258 = vst.msk [vmem:[#allocation4 + $0x40] sm:$0xff] %vm391, %v2242
      %2259 = vst.msk [vmem:[#allocation4 + $0x48] sm:$0xff] %vm391, %v2243
      %2260 = vst.msk [vmem:[#allocation4 + $0x50] sm:$0xff] %vm391, %v2244
      %2261 = vst.msk [vmem:[#allocation4 + $0x58] sm:$0xff] %vm391, %v2245
      %2262 = vst.msk [vmem:[#allocation4 + $0x60] sm:$0xff] %vm391, %v2246
      %2263 = vst.msk [vmem:[#allocation4 + $0x68] sm:$0xff] %vm391, %v2247
      %2264 = vst.msk [vmem:[#allocation4 + $0x70] sm:$0xff] %vm391, %v2248
      %2265 = vst.msk [vmem:[#allocation4 + $0x78] sm:$0xff] %vm391, %v2249
      %2266 = vst.msk [vmem:[#allocation2] sm:$0xff] %vm1441, %v1153
      %2267 = vst.msk [vmem:[#allocation2 + $0x8] sm:$0xff] %vm1441, %v1154
      %2268 = vst.msk [vmem:[#allocation2 + $0x10] sm:$0xff] %vm1441, %v1155
      %2269 = vst.msk [vmem:[#allocation2 + $0x18] sm:$0xff] %vm1441, %v1156
      %2270 = vst.msk [vmem:[#allocation2 + $0x20] sm:$0xff] %vm1441, %v1157
      %2271 = vst.msk [vmem:[#allocation2 + $0x28] sm:$0xff] %vm1441, %v1158
      %2272 = vst.msk [vmem:[#allocation2 + $0x30] sm:$0xff] %vm1441, %v1159
      %2273 = vst.msk [vmem:[#allocation2 + $0x38] sm:$0xff] %vm1441, %v1160
      %2274 = vst.msk [vmem:[#allocation2 + $0x40] sm:$0xff] %vm1441, %v1161
      %2275 = vst.msk [vmem:[#allocation2 + $0x48] sm:$0xff] %vm1441, %v1162
      %2276 = vst.msk [vmem:[#allocation2 + $0x50] sm:$0xff] %vm1441, %v1163
      %2277 = vst.msk [vmem:[#allocation2 + $0x58] sm:$0xff] %vm1441, %v1164
      %2278 = vst.msk [vmem:[#allocation2 + $0x60] sm:$0xff] %vm1441, %v1165
      %2279 = vst.msk [vmem:[#allocation2 + $0x68] sm:$0xff] %vm1441, %v1166
      %2280 = vst.msk [vmem:[#allocation2 + $0x70] sm:$0xff] %vm1441, %v1167
      %2281 = vst.msk [vmem:[#allocation2 + $0x78] sm:$0xff] %vm1441, %v1168
      // Predicated region
      $region37: #{attention_forward.4} parent=31 // pred_check
        %p2282 = pneg %p289
      $region38: #{attention_forward.4} parent=31 // pred_check_branch
        %2284 = sbr.rel (%p2282) target = $region40
      $region39: #{attention_forward.4} parent=31 // pred_region
        %v2285 = vld [vmem:[#allocation3] sm:$0xff]
        %v2286 = vld [vmem:[#allocation3 + $0x8] sm:$0xff]
        %v2287 = vld [vmem:[#allocation3 + $0x10] sm:$0xff]
        %v2288 = vld [vmem:[#allocation3 + $0x18] sm:$0xff]
        %v2289 = vld [vmem:[#allocation3 + $0x20] sm:$0xff]
        %v2290 = vld [vmem:[#allocation3 + $0x28] sm:$0xff]
        %v2291 = vld [vmem:[#allocation3 + $0x30] sm:$0xff]
        %v2292 = vld [vmem:[#allocation3 + $0x38] sm:$0xff]
        %v2293 = vld [vmem:[#allocation3 + $0x40] sm:$0xff]
        %v2294 = vld [vmem:[#allocation3 + $0x48] sm:$0xff]
        %v2295 = vld [vmem:[#allocation3 + $0x50] sm:$0xff]
        %v2296 = vld [vmem:[#allocation3 + $0x58] sm:$0xff]
        %v2297 = vld [vmem:[#allocation3 + $0x60] sm:$0xff]
        %v2298 = vld [vmem:[#allocation3 + $0x68] sm:$0xff]
        %v2299 = vld [vmem:[#allocation3 + $0x70] sm:$0xff]
        %v2300 = vld [vmem:[#allocation3 + $0x78] sm:$0xff]
        %v2301 = vrcp.pop %v2285
        %v2302 = vrcp.pop %v2286
        %v2303 = vrcp.pop %v2287
        %v2304 = vrcp.pop %v2288
        %v2305 = vrcp.pop %v2289
        %v2306 = vrcp.pop %v2290
        %v2307 = vrcp.pop %v2291
        %v2308 = vrcp.pop %v2292
        %v2309 = vrcp.pop %v2293
        %v2310 = vrcp.pop %v2294
        %v2311 = vrcp.pop %v2295
        %v2312 = vrcp.pop %v2296
        %v2313 = vrcp.pop %v2297
        %v2314 = vrcp.pop %v2298
        %v2315 = vrcp.pop %v2299
        %v2316 = vrcp.pop %v2300
        %v2317 = vld [vmem:[#allocation4] sm:$0xff]
        %v2318 = vld [vmem:[#allocation4 + $0x8] sm:$0xff]
        %v2319 = vld [vmem:[#allocation4 + $0x10] sm:$0xff]
        %v2320 = vld [vmem:[#allocation4 + $0x18] sm:$0xff]
        %v2321 = vld [vmem:[#allocation4 + $0x20] sm:$0xff]
        %v2322 = vld [vmem:[#allocation4 + $0x28] sm:$0xff]
        %v2323 = vld [vmem:[#allocation4 + $0x30] sm:$0xff]
        %v2324 = vld [vmem:[#allocation4 + $0x38] sm:$0xff]
        %v2325 = vld [vmem:[#allocation4 + $0x40] sm:$0xff]
        %v2326 = vld [vmem:[#allocation4 + $0x48] sm:$0xff]
        %v2327 = vld [vmem:[#allocation4 + $0x50] sm:$0xff]
        %v2328 = vld [vmem:[#allocation4 + $0x58] sm:$0xff]
        %v2329 = vld [vmem:[#allocation4 + $0x60] sm:$0xff]
        %v2330 = vld [vmem:[#allocation4 + $0x68] sm:$0xff]
        %v2331 = vld [vmem:[#allocation4 + $0x70] sm:$0xff]
        %v2332 = vld [vmem:[#allocation4 + $0x78] sm:$0xff]
        %2334 = vset.pattern.permute.xlu0 0
        %2335 = vperm.xlu0 %2334, %v2301
        %v2336 = vpop.permute.xlu0 %2335
        %2339 = vset.pattern.permute.xlu0 0
        %2340 = vperm.xlu0 %2339, %v2302
        %v2341 = vpop.permute.xlu0 %2340
        %2344 = vset.pattern.permute.xlu0 0
        %2345 = vperm.xlu0 %2344, %v2303
        %v2346 = vpop.permute.xlu0 %2345
        %2349 = vset.pattern.permute.xlu0 0
        %2350 = vperm.xlu0 %2349, %v2304
        %v2351 = vpop.permute.xlu0 %2350
        %2354 = vset.pattern.permute.xlu0 0
        %2355 = vperm.xlu0 %2354, %v2305
        %v2356 = vpop.permute.xlu0 %2355
        %2359 = vset.pattern.permute.xlu0 0
        %2360 = vperm.xlu0 %2359, %v2306
        %v2361 = vpop.permute.xlu0 %2360
        %2364 = vset.pattern.permute.xlu0 0
        %2365 = vperm.xlu0 %2364, %v2307
        %v2366 = vpop.permute.xlu0 %2365
        %2369 = vset.pattern.permute.xlu0 0
        %2370 = vperm.xlu0 %2369, %v2308
        %v2371 = vpop.permute.xlu0 %2370
        %2374 = vset.pattern.permute.xlu0 0
        %2375 = vperm.xlu0 %2374, %v2309
        %v2376 = vpop.permute.xlu0 %2375
        %2379 = vset.pattern.permute.xlu0 0
        %2380 = vperm.xlu0 %2379, %v2310
        %v2381 = vpop.permute.xlu0 %2380
        %2384 = vset.pattern.permute.xlu0 0
        %2385 = vperm.xlu0 %2384, %v2311
        %v2386 = vpop.permute.xlu0 %2385
        %2389 = vset.pattern.permute.xlu0 0
        %2390 = vperm.xlu0 %2389, %v2312
        %v2391 = vpop.permute.xlu0 %2390
        %2394 = vset.pattern.permute.xlu0 0
        %2395 = vperm.xlu0 %2394, %v2313
        %v2396 = vpop.permute.xlu0 %2395
        %2399 = vset.pattern.permute.xlu0 0
        %2400 = vperm.xlu0 %2399, %v2314
        %v2401 = vpop.permute.xlu0 %2400
        %2404 = vset.pattern.permute.xlu0 0
        %2405 = vperm.xlu0 %2404, %v2315
        %v2406 = vpop.permute.xlu0 %2405
        %2409 = vset.pattern.permute.xlu0 0
        %2410 = vperm.xlu0 %2409, %v2316
        %v2411 = vpop.permute.xlu0 %2410
        %v2413 = vmul.f32 %v2317, %v2336
        %v2414 = vmul.f32 %v2318, %v2341
        %v2415 = vmul.f32 %v2319, %v2346
        %v2416 = vmul.f32 %v2320, %v2351
        %v2417 = vmul.f32 %v2321, %v2356
        %v2418 = vmul.f32 %v2322, %v2361
        %v2419 = vmul.f32 %v2323, %v2366
        %v2420 = vmul.f32 %v2324, %v2371
        %v2421 = vmul.f32 %v2325, %v2376
        %v2422 = vmul.f32 %v2326, %v2381
        %v2423 = vmul.f32 %v2327, %v2386
        %v2424 = vmul.f32 %v2328, %v2391
        %v2425 = vmul.f32 %v2329, %v2396
        %v2426 = vmul.f32 %v2330, %v2401
        %v2427 = vmul.f32 %v2331, %v2406
        %v2428 = vmul.f32 %v2332, %v2411
        %2429 = vst.msk [vmem:[%s287] sm:$0xff] %vm391, %v2413
        %2430 = vst.msk [vmem:[%s287 + $0x8] sm:$0xff] %vm391, %v2414
        %2431 = vst.msk [vmem:[%s287 + $0x10] sm:$0xff] %vm391, %v2415
        %2432 = vst.msk [vmem:[%s287 + $0x18] sm:$0xff] %vm391, %v2416
        %2433 = vst.msk [vmem:[%s287 + $0x20] sm:$0xff] %vm391, %v2417
        %2434 = vst.msk [vmem:[%s287 + $0x28] sm:$0xff] %vm391, %v2418
        %2435 = vst.msk [vmem:[%s287 + $0x30] sm:$0xff] %vm391, %v2419
        %2436 = vst.msk [vmem:[%s287 + $0x38] sm:$0xff] %vm391, %v2420
        %2437 = vst.msk [vmem:[%s287 + $0x40] sm:$0xff] %vm391, %v2421
        %2438 = vst.msk [vmem:[%s287 + $0x48] sm:$0xff] %vm391, %v2422
        %2439 = vst.msk [vmem:[%s287 + $0x50] sm:$0xff] %vm391, %v2423
        %2440 = vst.msk [vmem:[%s287 + $0x58] sm:$0xff] %vm391, %v2424
        %2441 = vst.msk [vmem:[%s287 + $0x60] sm:$0xff] %vm391, %v2425
        %2442 = vst.msk [vmem:[%s287 + $0x68] sm:$0xff] %vm391, %v2426
        %2443 = vst.msk [vmem:[%s287 + $0x70] sm:$0xff] %vm391, %v2427
        %2444 = vst.msk [vmem:[%s287 + $0x78] sm:$0xff] %vm391, %v2428
      $region40: #{attention_forward.4} parent=31 // pred_fallthru
        _
      %s2445 = smul.u32 2, %s20
      %p2446 = scmp.lt.s32.totalorder %s19, 1
      %s2447 = scalar_select %p2446, %s19, 1
      %p2448 = scmp.lt.s32.totalorder %s2445, 1
      %s2449 = scalar_select %p2448, %s2445, 1
      %s2450 = smul.addr %s2447, 16
      %s2451 = sadd.s32 %s2449, %s2450
      %s2452 = smul.addr %s2451, 8
      %s2453 = scalar_lea.vmem %s3, %s2452
      // Predicated region
      $region41: #{attention_forward.4} parent=31 // pred_check
        %p2454 = pneg %p137
      $region42: #{attention_forward.4} parent=31 // pred_check_branch
        %2456 = sbr.rel (%p2454) target = $region44
      $region43: #{attention_forward.4} parent=31 // pred_region
        %s2457 = smul.u32 2, %s20
      $region44: #{attention_forward.4} parent=31 // pred_fallthru
        _
    $region32: #{attention_forward.4} parent=5 // pred_fallthru
      _
    %p2458 = scmp.le.s32.totalorder 2, %s9
    // Predicated region
    $region45: #{attention_forward.4} parent=5 // pred_check
      %p2459 = pneg %p2458
    $region46: #{attention_forward.4} parent=5 // pred_check_branch
      %2461 = sbr.rel (%p2459) target = $region48
    $region47: #{attention_forward.4} parent=5 // pred_region
      %s2462 = ssub.s32 %s9, 2
      // Predicated region
      $region49: #{attention_forward.4} parent=47 // pred_check
        %p2463 = pneg %p143
      $region50: #{attention_forward.4} parent=47 // pred_check_branch
        %2465 = sbr.rel (%p2463) target = $region52
      $region51: #{attention_forward.4} parent=47 // pred_region
        %s2466 = smul.u32 2, %s23
        %p2467 = scmp.lt.s32.totalorder %s22, 1
        %s2468 = scalar_select %p2467, %s22, 1
        %p2469 = scmp.lt.s32.totalorder %s2466, 1
        %s2470 = scalar_select %p2469, %s2466, 1
        %s2471 = smul.addr %s2468, 16
        %s2472 = sadd.s32 %s2470, %s2471
        %s2473 = smul.addr %s2472, 8
        %s2474 = scalar_lea.vmem %s3, %s2473
      $region52: #{attention_forward.4} parent=47 // pred_fallthru
        _
    $region48: #{attention_forward.4} parent=5 // pred_fallthru
      _
  $region6: #{attention_forward.4} parent=0 // loop_footer
    %s13 = sadd.s32 1, %s9
  $region7: #{attention_forward.4} parent=0 // loop_footer_branch
    %8 = sbr.rel target = $region3
  $region8: #{attention_forward.4} parent=0 // loop_exit
    _

</llo_original>
